<compile_context>
chip_gen: v7x
topology: tpu7x:2x2x1
jax: 0.10.0
libtpu: 0.0.40
codegen_flags: <defaults>
</compile_context>

<pallas_src>
import functools

import jax
import jax.numpy as jnp
from jax.experimental import pallas as pl
from jax.experimental.pallas import tpu as pltpu


def _gelu_tanh(x):
    # tanh-approximate GELU (EUP-friendly inside the kernel).
    return 0.5 * x * (1.0 + jnp.tanh(0.7978845608028654 *
                                     (x + 0.044715 * x * x * x)))


# -----------------------------------------------------------------------------
# Fused per-batch kernel: head tokens -> qkv -> MHSA -> proj -> cls fix-up
# -----------------------------------------------------------------------------
def _hi_attn_kernel(x_ref, htin_ref, wht_ref, bht_ref, lng_ref, lnb_ref,
                    pos_ref, wqkv_ref, wproj_ref, bproj_ref,
                    o_ref, xcat_ref, *, num_heads, n_tokens):
    f32 = jnp.float32
    nh = num_heads
    N = n_tokens
    xb = x_ref[0].astype(f32)                         # (N, C)
    C = xb.shape[-1]
    hd = C // nh
    S = N + nh
    scale = float(hd) ** -0.5

    # ---- head-token branch: ht_proj -> per-group LayerNorm -> GELU -> +pos ----
    ht = jnp.dot(htin_ref[0].astype(f32), wht_ref[...].astype(f32),
                 preferred_element_type=f32) + bht_ref[...]        # (nh, C)
    gamma = lng_ref[...]                               # (1, hd)
    beta = lnb_ref[...]                                # (1, hd)
    segs = []
    for g in range(nh):                                # static unroll, lane slices
        seg = ht[:, g * hd:(g + 1) * hd]               # (nh, hd)
        mu = jnp.mean(seg, axis=-1, keepdims=True)
        var = jnp.mean((seg - mu) ** 2, axis=-1, keepdims=True)
        seg = (seg - mu) * jax.lax.rsqrt(var + 1e-5)
        seg = seg * gamma + beta
        segs.append(_gelu_tanh(seg))
    x_ht = jnp.concatenate(segs, axis=-1) + pos_ref[...].astype(f32)   # (nh, C)

    # ---- assemble [head-tokens ; tokens] sequence in VMEM (aligned stores) ----
    xcat_ref[0:nh, :] = x_ht
    xcat_ref[nh:S, :] = xb

    # ---- qkv projection for the whole augmented sequence (single MXU call) ----
    qkv = jnp.dot(xcat_ref[...], wqkv_ref[...].astype(f32),
                  preferred_element_type=f32)          # (S, 3C)
    q = qkv[:, 0:C]
    k = qkv[:, C:2 * C]
    v = qkv[:, 2 * C:3 * C]

    # ---- multi-head softmax attention with fused output projection ----
    acc = jnp.zeros((S, C), dtype=f32)
    for h in range(nh):                                # static unroll over heads
        qh = q[:, h * hd:(h + 1) * hd]                 # (S, hd)
        kh = k[:, h * hd:(h + 1) * hd]
        vh = v[:, h * hd:(h + 1) * hd]
        s = jax.lax.dot_general(qh, kh, (((1,), (1,)), ((), ())),
                                preferred_element_type=f32) * scale   # (S, S)
        m = jnp.max(s, axis=-1, keepdims=True)
        e = jnp.exp(s - m)
        den = jnp.sum(e, axis=-1, keepdims=True)
        attn = e * pl.reciprocal(den, approx=True)
        oh = jnp.dot(attn, vh, preferred_element_type=f32)            # (S, hd)
        # concat-heads + proj  ==  sum_h (oh @ W_proj[h*hd:(h+1)*hd, :])
        acc = acc + jnp.dot(oh, wproj_ref[h * hd:(h + 1) * hd, :].astype(f32),
                            preferred_element_type=f32)
    y = acc + bproj_ref[...]                           # (S, C) projected output

    # ---- epilogue: cls += mean(head tokens); drop head tokens ----
    # sequence layout inside this kernel: rows [0:nh]=head tokens, nh=cls,
    # rows [nh+1:S]=patch tokens  ->  y[nh:S] is exactly [cls ; patch].
    ht_mean = jnp.mean(y[0:nh, :], axis=0, keepdims=True)             # (1, C)
    out_val = y[nh:S, :]                                              # (N, C)
    row = jax.lax.broadcasted_iota(jnp.int32, (N, C), 0)
    out_val = out_val + jnp.where(row == 0,
                                  jnp.broadcast_to(ht_mean, (N, C)),
                                  jnp.zeros((N, C), f32))
    o_ref[0] = out_val.astype(o_ref.dtype)             # single lane-dense store


# -----------------------------------------------------------------------------
# Wrapper
# -----------------------------------------------------------------------------
@functools.partial(jax.jit, static_argnums=(2,))
def hi_attention_forward(x, p, num_heads):
    """x: (B, N, C) tokens (cls + patches).  Returns (B, N, C)."""
    B, N, C = x.shape
    hd = C // num_heads
    S = N + num_heads

    # Per-head mean pooling of the input tokens (layout plumbing, tiny).
    ht_in = jnp.mean(x, axis=1).reshape(B, num_heads, hd)

    kernel = functools.partial(_hi_attn_kernel, num_heads=num_heads, n_tokens=N)
    return pl.pallas_call(
        kernel,
        out_shape=jax.ShapeDtypeStruct((B, N, C), jnp.float32),
        grid=(B,),
        in_specs=[
            pl.BlockSpec((1, N, C), lambda b: (b, 0, 0)),            # x
            pl.BlockSpec((1, num_heads, hd), lambda b: (b, 0, 0)),   # token means
            pl.BlockSpec((hd, C), lambda b: (0, 0)),                 # W_ht
            pl.BlockSpec((1, C), lambda b: (0, 0)),                  # b_ht
            pl.BlockSpec((1, hd), lambda b: (0, 0)),                 # LN gamma
            pl.BlockSpec((1, hd), lambda b: (0, 0)),                 # LN beta
            pl.BlockSpec((num_heads, C), lambda b: (0, 0)),          # pos_embed
            pl.BlockSpec((C, 3 * C), lambda b: (0, 0)),              # W_qkv
            pl.BlockSpec((C, C), lambda b: (0, 0)),                  # W_proj
            pl.BlockSpec((1, C), lambda b: (0, 0)),                  # b_proj
        ],
        out_specs=pl.BlockSpec((1, N, C), lambda b: (b, 0, 0)),
        scratch_shapes=[pltpu.VMEM((S, C), jnp.float32)],            # [ht ; x] seq
        compiler_params=pltpu.CompilerParams(
            dimension_semantics=("parallel",)),
    )(x, ht_in, p["w_ht"], p["b_ht"].reshape(1, C),
      p["ln_g"].reshape(1, hd), p["ln_b"].reshape(1, hd),
      p["pos_embed"].reshape(num_heads, C),
      p["w_qkv"], p["w_proj"], p["b_proj"].reshape(1, C))


# -----------------------------------------------------------------------------
# Parameters + pure-jnp reference (mirrors the PyTorch forward, eval mode)
# -----------------------------------------------------------------------------
def init_params(key, dim, num_heads):
    hd = dim // num_heads
    ks = jax.random.split(key, 8)
    p = {
        "w_qkv": 0.1 * jax.random.normal(ks[0], (dim, 3 * dim), jnp.float32),
        "w_proj": 0.1 * jax.random.normal(ks[1], (dim, dim), jnp.float32),
        "b_proj": 0.05 * jax.random.normal(ks[2], (dim,), jnp.float32),
        "w_ht": 0.1 * jax.random.normal(ks[3], (hd, dim), jnp.float32),
        "b_ht": 0.05 * jax.random.normal(ks[4], (dim,), jnp.float32),
        "ln_g": 1.0 + 0.1 * jax.random.normal(ks[5], (hd,), jnp.float32),
        "ln_b": 0.05 * jax.random.normal(ks[6], (hd,), jnp.float32),
        "pos_embed": 0.02 * jax.random.normal(ks[7], (1, num_heads, dim),
                                              jnp.float32),
    }
    return p


def hi_attention_reference(x, p, num_heads):
    B, N, C = x.shape
    hd = C // num_heads
    S = N + num_heads
    scale = float(hd) ** -0.5
    head_pos = jnp.broadcast_to(p["pos_embed"], (B, num_heads, C))
    x_ = x.reshape(B, N, num_heads, hd).transpose(0, 2, 1, 3).mean(axis=2)
    x_ = x_ @ p["w_ht"] + p["b_ht"]                                  # (B, nh, C)
    x_ = x_.reshape(B, num_heads, num_heads, hd)
    mu = x_.mean(axis=-1, keepdims=True)
    var = ((x_ - mu) ** 2).mean(axis=-1, keepdims=True)
    x_ = (x_ - mu) / jnp.sqrt(var + 1e-5) * p["ln_g"] + p["ln_b"]
    x_ = _gelu_tanh(x_).reshape(B, num_heads, C) + head_pos
    xc = jnp.concatenate([x, x_], axis=1)                            # (B, S, C)
    qkv = (xc @ p["w_qkv"]).reshape(B, S, 3, num_heads, hd).transpose(2, 0, 3, 1, 4)
    q, k, v = qkv[0], qkv[1], qkv[2]                                 # (B, nh, S, hd)
    attn = jax.nn.softmax(jnp.einsum("bhnd,bhmd->bhnm", q, k) * scale, axis=-1)
    y = jnp.einsum("bhnm,bhmd->bhnd", attn, v).transpose(0, 2, 1, 3).reshape(B, S, C)
    y = y @ p["w_proj"] + p["b_proj"]
    cls, patch, ht = y[:, :1], y[:, 1:N], y[:, N:]
    cls = cls + jnp.mean(ht, axis=1, keepdims=True)
    return jnp.concatenate([cls, patch], axis=1)


if __name__ == "__main__":
    key = jax.random.PRNGKey(0)
    kx, kp = jax.random.split(key)
    B, num_heads, C = 2, 8, 64
    H = W = 4
    N = H * W + 1                      # cls token + 4x4 patches = 17 tokens
    x = jax.random.normal(kx, (B, N, C), jnp.float32)
    params = init_params(kp, C, num_heads)

    y = hi_attention_forward(x, params, num_heads)
    y = jax.block_until_ready(y)
    assert y.shape == (B, N, C)

    y_ref = hi_attention_reference(x, params, num_heads)
    if not bool(jnp.allclose(y, y_ref, rtol=2e-3, atol=2e-3)):
        raise AssertionError("Pallas HI_Attention output mismatch vs jnp reference")
    print("KERNEL_OK")
</pallas_src>

<mosaic_0001>
module attributes {stable_mosaic.version = 11 : i64} {
  func.func @_hi_attn_kernel(%arg0: i32, %arg1: memref<1x17x64xf32, #tpu.memory_space<vmem>>, %arg2: memref<1x8x8xf32, #tpu.memory_space<vmem>>, %arg3: memref<8x64xf32, #tpu.memory_space<vmem>>, %arg4: memref<1x64xf32, #tpu.memory_space<vmem>>, %arg5: memref<1x8xf32, #tpu.memory_space<vmem>>, %arg6: memref<1x8xf32, #tpu.memory_space<vmem>>, %arg7: memref<8x64xf32, #tpu.memory_space<vmem>>, %arg8: memref<64x192xf32, #tpu.memory_space<vmem>>, %arg9: memref<64x64xf32, #tpu.memory_space<vmem>>, %arg10: memref<1x64xf32, #tpu.memory_space<vmem>>, %arg11: memref<1x17x64xf32, #tpu.memory_space<vmem>>, %arg12: memref<25x64xf32, #tpu.memory_space<vmem>>) attributes {dimension_semantics = [#tpu.dimension_semantics<parallel>], iteration_bounds = array<i64: 2>, scalar_prefetch = 0 : i64, scratch_operands = 1 : i64, tpu.core_type = #tpu.core_type<tc>, window_params = [{transform_indices = @transform_0, window_bounds = array<i64: 1, 17, 64>}, {transform_indices = @transform_1, window_bounds = array<i64: 1, 8, 8>}, {pipeline_mode = #tpu.pipeline_mode<synchronous>, transform_indices = @transform_2, window_bounds = array<i64: 8, 64>}, {pipeline_mode = #tpu.pipeline_mode<synchronous>, transform_indices = @transform_3, window_bounds = array<i64: 1, 64>}, {pipeline_mode = #tpu.pipeline_mode<synchronous>, transform_indices = @transform_4, window_bounds = array<i64: 1, 8>}, {pipeline_mode = #tpu.pipeline_mode<synchronous>, transform_indices = @transform_5, window_bounds = array<i64: 1, 8>}, {pipeline_mode = #tpu.pipeline_mode<synchronous>, transform_indices = @transform_6, window_bounds = array<i64: 8, 64>}, {pipeline_mode = #tpu.pipeline_mode<synchronous>, transform_indices = @transform_7, window_bounds = array<i64: 64, 192>}, {pipeline_mode = #tpu.pipeline_mode<synchronous>, transform_indices = @transform_8, window_bounds = array<i64: 64, 64>}, {pipeline_mode = #tpu.pipeline_mode<synchronous>, transform_indices = @transform_9, window_bounds = array<i64: 1, 64>}, {transform_indices = @transform_10, window_bounds = array<i64: 1, 17, 64>}]} {
    %c0 = arith.constant 0 : index
    %c0_0 = arith.constant 0 : index
    %c0_1 = arith.constant 0 : index
    %0 = vector.load %arg1[%c0, %c0_0, %c0_1] : memref<1x17x64xf32, #tpu.memory_space<vmem>>, vector<1x17x64xf32>
    %1 = vector.shape_cast %0 : vector<1x17x64xf32> to vector<17x64xf32>
    %c0_2 = arith.constant 0 : index
    %c0_3 = arith.constant 0 : index
    %c0_4 = arith.constant 0 : index
    %2 = vector.load %arg2[%c0_2, %c0_3, %c0_4] : memref<1x8x8xf32, #tpu.memory_space<vmem>>, vector<1x8x8xf32>
    %3 = vector.shape_cast %2 : vector<1x8x8xf32> to vector<8x8xf32>
    %c0_5 = arith.constant 0 : index
    %c0_6 = arith.constant 0 : index
    %4 = vector.load %arg3[%c0_5, %c0_6] : memref<8x64xf32, #tpu.memory_space<vmem>>, vector<8x64xf32>
    %cst = arith.constant dense<0.000000e+00> : vector<8x64xf32>
    %5 = tpu.matmul %3, %4, %cst {dimension_numbers = #tpu.dot_dimension_numbers<[1], [0], [0], [1], [0, 0, 1, 1], [], []>} : vector<8x8xf32>, vector<8x64xf32>, vector<8x64xf32> -> vector<8x64xf32>
    %c0_7 = arith.constant 0 : index
    %c0_8 = arith.constant 0 : index
    %6 = vector.load %arg4[%c0_7, %c0_8] : memref<1x64xf32, #tpu.memory_space<vmem>>, vector<1x64xf32>
    %7 = vector.broadcast %6 : vector<1x64xf32> to vector<8x64xf32>
    %8 = arith.addf %5, %7 : vector<8x64xf32>
    %c0_9 = arith.constant 0 : index
    %c0_10 = arith.constant 0 : index
    %9 = vector.load %arg5[%c0_9, %c0_10] : memref<1x8xf32, #tpu.memory_space<vmem>>, vector<1x8xf32>
    %c0_11 = arith.constant 0 : index
    %c0_12 = arith.constant 0 : index
    %10 = vector.load %arg6[%c0_11, %c0_12] : memref<1x8xf32, #tpu.memory_space<vmem>>, vector<1x8xf32>
    %11 = vector.extract_strided_slice %8 {offsets = [0, 0], sizes = [8, 8], strides = [1, 1]} : vector<8x64xf32> to vector<8x8xf32>
    %cst_13 = arith.constant dense<0.000000e+00> : vector<8xf32>
    %12 = vector.multi_reduction <add>, %11, %cst_13 [1] : vector<8x8xf32> to vector<8xf32>
    %13 = vector.shape_cast %12 : vector<8xf32> to vector<8x1xf32>
    %cst_14 = arith.constant 8.000000e+00 : f32
    %14 = vector.broadcast %cst_14 : f32 to vector<8x1xf32>
    %15 = arith.divf %13, %14 : vector<8x1xf32>
    %16 = vector.broadcast %15 : vector<8x1xf32> to vector<8x8xf32>
    %17 = arith.subf %11, %16 : vector<8x8xf32>
    %18 = arith.mulf %17, %17 : vector<8x8xf32>
    %cst_15 = arith.constant dense<0.000000e+00> : vector<8xf32>
    %19 = vector.multi_reduction <add>, %18, %cst_15 [1] : vector<8x8xf32> to vector<8xf32>
    %20 = vector.shape_cast %19 : vector<8xf32> to vector<8x1xf32>
    %cst_16 = arith.constant 8.000000e+00 : f32
    %21 = vector.broadcast %cst_16 : f32 to vector<8x1xf32>
    %22 = arith.divf %20, %21 : vector<8x1xf32>
    %23 = vector.broadcast %15 : vector<8x1xf32> to vector<8x8xf32>
    %24 = arith.subf %11, %23 : vector<8x8xf32>
    %cst_17 = arith.constant 9.99999974E-6 : f32
    %25 = vector.broadcast %cst_17 : f32 to vector<8x1xf32>
    %26 = arith.addf %22, %25 : vector<8x1xf32>
    %27 = math.rsqrt %26 : vector<8x1xf32>
    %28 = vector.broadcast %27 : vector<8x1xf32> to vector<8x8xf32>
    %29 = arith.mulf %24, %28 : vector<8x8xf32>
    %30 = vector.broadcast %9 : vector<1x8xf32> to vector<8x8xf32>
    %31 = arith.mulf %29, %30 : vector<8x8xf32>
    %32 = vector.broadcast %10 : vector<1x8xf32> to vector<8x8xf32>
    %33 = arith.addf %31, %32 : vector<8x8xf32>
    %cst_18 = arith.constant 5.000000e-01 : f32
    %34 = vector.broadcast %cst_18 : f32 to vector<8x8xf32>
    %35 = arith.mulf %34, %33 : vector<8x8xf32>
    %cst_19 = arith.constant 4.471500e-02 : f32
    %36 = vector.broadcast %cst_19 : f32 to vector<8x8xf32>
    %37 = arith.mulf %36, %33 : vector<8x8xf32>
    %38 = arith.mulf %37, %33 : vector<8x8xf32>
    %39 = arith.mulf %38, %33 : vector<8x8xf32>
    %40 = arith.addf %33, %39 : vector<8x8xf32>
    %cst_20 = arith.constant 0.797884583 : f32
    %41 = vector.broadcast %cst_20 : f32 to vector<8x8xf32>
    %42 = arith.mulf %41, %40 : vector<8x8xf32>
    %43 = math.tanh %42 : vector<8x8xf32>
    %cst_21 = arith.constant 1.000000e+00 : f32
    %44 = vector.broadcast %cst_21 : f32 to vector<8x8xf32>
    %45 = arith.addf %44, %43 : vector<8x8xf32>
    %46 = arith.mulf %35, %45 : vector<8x8xf32>
    %47 = vector.extract_strided_slice %8 {offsets = [0, 8], sizes = [8, 8], strides = [1, 1]} : vector<8x64xf32> to vector<8x8xf32>
    %cst_22 = arith.constant dense<0.000000e+00> : vector<8xf32>
    %48 = vector.multi_reduction <add>, %47, %cst_22 [1] : vector<8x8xf32> to vector<8xf32>
    %49 = vector.shape_cast %48 : vector<8xf32> to vector<8x1xf32>
    %cst_23 = arith.constant 8.000000e+00 : f32
    %50 = vector.broadcast %cst_23 : f32 to vector<8x1xf32>
    %51 = arith.divf %49, %50 : vector<8x1xf32>
    %52 = vector.broadcast %51 : vector<8x1xf32> to vector<8x8xf32>
    %53 = arith.subf %47, %52 : vector<8x8xf32>
    %54 = arith.mulf %53, %53 : vector<8x8xf32>
    %cst_24 = arith.constant dense<0.000000e+00> : vector<8xf32>
    %55 = vector.multi_reduction <add>, %54, %cst_24 [1] : vector<8x8xf32> to vector<8xf32>
    %56 = vector.shape_cast %55 : vector<8xf32> to vector<8x1xf32>
    %cst_25 = arith.constant 8.000000e+00 : f32
    %57 = vector.broadcast %cst_25 : f32 to vector<8x1xf32>
    %58 = arith.divf %56, %57 : vector<8x1xf32>
    %59 = vector.broadcast %51 : vector<8x1xf32> to vector<8x8xf32>
    %60 = arith.subf %47, %59 : vector<8x8xf32>
    %cst_26 = arith.constant 9.99999974E-6 : f32
    %61 = vector.broadcast %cst_26 : f32 to vector<8x1xf32>
    %62 = arith.addf %58, %61 : vector<8x1xf32>
    %63 = math.rsqrt %62 : vector<8x1xf32>
    %64 = vector.broadcast %63 : vector<8x1xf32> to vector<8x8xf32>
    %65 = arith.mulf %60, %64 : vector<8x8xf32>
    %66 = vector.broadcast %9 : vector<1x8xf32> to vector<8x8xf32>
    %67 = arith.mulf %65, %66 : vector<8x8xf32>
    %68 = vector.broadcast %10 : vector<1x8xf32> to vector<8x8xf32>
    %69 = arith.addf %67, %68 : vector<8x8xf32>
    %cst_27 = arith.constant 5.000000e-01 : f32
    %70 = vector.broadcast %cst_27 : f32 to vector<8x8xf32>
    %71 = arith.mulf %70, %69 : vector<8x8xf32>
    %cst_28 = arith.constant 4.471500e-02 : f32
    %72 = vector.broadcast %cst_28 : f32 to vector<8x8xf32>
    %73 = arith.mulf %72, %69 : vector<8x8xf32>
    %74 = arith.mulf %73, %69 : vector<8x8xf32>
    %75 = arith.mulf %74, %69 : vector<8x8xf32>
    %76 = arith.addf %69, %75 : vector<8x8xf32>
    %cst_29 = arith.constant 0.797884583 : f32
    %77 = vector.broadcast %cst_29 : f32 to vector<8x8xf32>
    %78 = arith.mulf %77, %76 : vector<8x8xf32>
    %79 = math.tanh %78 : vector<8x8xf32>
    %cst_30 = arith.constant 1.000000e+00 : f32
    %80 = vector.broadcast %cst_30 : f32 to vector<8x8xf32>
    %81 = arith.addf %80, %79 : vector<8x8xf32>
    %82 = arith.mulf %71, %81 : vector<8x8xf32>
    %83 = vector.extract_strided_slice %8 {offsets = [0, 16], sizes = [8, 8], strides = [1, 1]} : vector<8x64xf32> to vector<8x8xf32>
    %cst_31 = arith.constant dense<0.000000e+00> : vector<8xf32>
    %84 = vector.multi_reduction <add>, %83, %cst_31 [1] : vector<8x8xf32> to vector<8xf32>
    %85 = vector.shape_cast %84 : vector<8xf32> to vector<8x1xf32>
    %cst_32 = arith.constant 8.000000e+00 : f32
    %86 = vector.broadcast %cst_32 : f32 to vector<8x1xf32>
    %87 = arith.divf %85, %86 : vector<8x1xf32>
    %88 = vector.broadcast %87 : vector<8x1xf32> to vector<8x8xf32>
    %89 = arith.subf %83, %88 : vector<8x8xf32>
    %90 = arith.mulf %89, %89 : vector<8x8xf32>
    %cst_33 = arith.constant dense<0.000000e+00> : vector<8xf32>
    %91 = vector.multi_reduction <add>, %90, %cst_33 [1] : vector<8x8xf32> to vector<8xf32>
    %92 = vector.shape_cast %91 : vector<8xf32> to vector<8x1xf32>
    %cst_34 = arith.constant 8.000000e+00 : f32
    %93 = vector.broadcast %cst_34 : f32 to vector<8x1xf32>
    %94 = arith.divf %92, %93 : vector<8x1xf32>
    %95 = vector.broadcast %87 : vector<8x1xf32> to vector<8x8xf32>
    %96 = arith.subf %83, %95 : vector<8x8xf32>
    %cst_35 = arith.constant 9.99999974E-6 : f32
    %97 = vector.broadcast %cst_35 : f32 to vector<8x1xf32>
    %98 = arith.addf %94, %97 : vector<8x1xf32>
    %99 = math.rsqrt %98 : vector<8x1xf32>
    %100 = vector.broadcast %99 : vector<8x1xf32> to vector<8x8xf32>
    %101 = arith.mulf %96, %100 : vector<8x8xf32>
    %102 = vector.broadcast %9 : vector<1x8xf32> to vector<8x8xf32>
    %103 = arith.mulf %101, %102 : vector<8x8xf32>
    %104 = vector.broadcast %10 : vector<1x8xf32> to vector<8x8xf32>
    %105 = arith.addf %103, %104 : vector<8x8xf32>
    %cst_36 = arith.constant 5.000000e-01 : f32
    %106 = vector.broadcast %cst_36 : f32 to vector<8x8xf32>
    %107 = arith.mulf %106, %105 : vector<8x8xf32>
    %cst_37 = arith.constant 4.471500e-02 : f32
    %108 = vector.broadcast %cst_37 : f32 to vector<8x8xf32>
    %109 = arith.mulf %108, %105 : vector<8x8xf32>
    %110 = arith.mulf %109, %105 : vector<8x8xf32>
    %111 = arith.mulf %110, %105 : vector<8x8xf32>
    %112 = arith.addf %105, %111 : vector<8x8xf32>
    %cst_38 = arith.constant 0.797884583 : f32
    %113 = vector.broadcast %cst_38 : f32 to vector<8x8xf32>
    %114 = arith.mulf %113, %112 : vector<8x8xf32>
    %115 = math.tanh %114 : vector<8x8xf32>
    %cst_39 = arith.constant 1.000000e+00 : f32
    %116 = vector.broadcast %cst_39 : f32 to vector<8x8xf32>
    %117 = arith.addf %116, %115 : vector<8x8xf32>
    %118 = arith.mulf %107, %117 : vector<8x8xf32>
    %119 = vector.extract_strided_slice %8 {offsets = [0, 24], sizes = [8, 8], strides = [1, 1]} : vector<8x64xf32> to vector<8x8xf32>
    %cst_40 = arith.constant dense<0.000000e+00> : vector<8xf32>
    %120 = vector.multi_reduction <add>, %119, %cst_40 [1] : vector<8x8xf32> to vector<8xf32>
    %121 = vector.shape_cast %120 : vector<8xf32> to vector<8x1xf32>
    %cst_41 = arith.constant 8.000000e+00 : f32
    %122 = vector.broadcast %cst_41 : f32 to vector<8x1xf32>
    %123 = arith.divf %121, %122 : vector<8x1xf32>
    %124 = vector.broadcast %123 : vector<8x1xf32> to vector<8x8xf32>
    %125 = arith.subf %119, %124 : vector<8x8xf32>
    %126 = arith.mulf %125, %125 : vector<8x8xf32>
    %cst_42 = arith.constant dense<0.000000e+00> : vector<8xf32>
    %127 = vector.multi_reduction <add>, %126, %cst_42 [1] : vector<8x8xf32> to vector<8xf32>
    %128 = vector.shape_cast %127 : vector<8xf32> to vector<8x1xf32>
    %cst_43 = arith.constant 8.000000e+00 : f32
    %129 = vector.broadcast %cst_43 : f32 to vector<8x1xf32>
    %130 = arith.divf %128, %129 : vector<8x1xf32>
    %131 = vector.broadcast %123 : vector<8x1xf32> to vector<8x8xf32>
    %132 = arith.subf %119, %131 : vector<8x8xf32>
    %cst_44 = arith.constant 9.99999974E-6 : f32
    %133 = vector.broadcast %cst_44 : f32 to vector<8x1xf32>
    %134 = arith.addf %130, %133 : vector<8x1xf32>
    %135 = math.rsqrt %134 : vector<8x1xf32>
    %136 = vector.broadcast %135 : vector<8x1xf32> to vector<8x8xf32>
    %137 = arith.mulf %132, %136 : vector<8x8xf32>
    %138 = vector.broadcast %9 : vector<1x8xf32> to vector<8x8xf32>
    %139 = arith.mulf %137, %138 : vector<8x8xf32>
    %140 = vector.broadcast %10 : vector<1x8xf32> to vector<8x8xf32>
    %141 = arith.addf %139, %140 : vector<8x8xf32>
    %cst_45 = arith.constant 5.000000e-01 : f32
    %142 = vector.broadcast %cst_45 : f32 to vector<8x8xf32>
    %143 = arith.mulf %142, %141 : vector<8x8xf32>
    %cst_46 = arith.constant 4.471500e-02 : f32
    %144 = vector.broadcast %cst_46 : f32 to vector<8x8xf32>
    %145 = arith.mulf %144, %141 : vector<8x8xf32>
    %146 = arith.mulf %145, %141 : vector<8x8xf32>
    %147 = arith.mulf %146, %141 : vector<8x8xf32>
    %148 = arith.addf %141, %147 : vector<8x8xf32>
    %cst_47 = arith.constant 0.797884583 : f32
    %149 = vector.broadcast %cst_47 : f32 to vector<8x8xf32>
    %150 = arith.mulf %149, %148 : vector<8x8xf32>
    %151 = math.tanh %150 : vector<8x8xf32>
    %cst_48 = arith.constant 1.000000e+00 : f32
    %152 = vector.broadcast %cst_48 : f32 to vector<8x8xf32>
    %153 = arith.addf %152, %151 : vector<8x8xf32>
    %154 = arith.mulf %143, %153 : vector<8x8xf32>
    %155 = vector.extract_strided_slice %8 {offsets = [0, 32], sizes = [8, 8], strides = [1, 1]} : vector<8x64xf32> to vector<8x8xf32>
    %cst_49 = arith.constant dense<0.000000e+00> : vector<8xf32>
    %156 = vector.multi_reduction <add>, %155, %cst_49 [1] : vector<8x8xf32> to vector<8xf32>
    %157 = vector.shape_cast %156 : vector<8xf32> to vector<8x1xf32>
    %cst_50 = arith.constant 8.000000e+00 : f32
    %158 = vector.broadcast %cst_50 : f32 to vector<8x1xf32>
    %159 = arith.divf %157, %158 : vector<8x1xf32>
    %160 = vector.broadcast %159 : vector<8x1xf32> to vector<8x8xf32>
    %161 = arith.subf %155, %160 : vector<8x8xf32>
    %162 = arith.mulf %161, %161 : vector<8x8xf32>
    %cst_51 = arith.constant dense<0.000000e+00> : vector<8xf32>
    %163 = vector.multi_reduction <add>, %162, %cst_51 [1] : vector<8x8xf32> to vector<8xf32>
    %164 = vector.shape_cast %163 : vector<8xf32> to vector<8x1xf32>
    %cst_52 = arith.constant 8.000000e+00 : f32
    %165 = vector.broadcast %cst_52 : f32 to vector<8x1xf32>
    %166 = arith.divf %164, %165 : vector<8x1xf32>
    %167 = vector.broadcast %159 : vector<8x1xf32> to vector<8x8xf32>
    %168 = arith.subf %155, %167 : vector<8x8xf32>
    %cst_53 = arith.constant 9.99999974E-6 : f32
    %169 = vector.broadcast %cst_53 : f32 to vector<8x1xf32>
    %170 = arith.addf %166, %169 : vector<8x1xf32>
    %171 = math.rsqrt %170 : vector<8x1xf32>
    %172 = vector.broadcast %171 : vector<8x1xf32> to vector<8x8xf32>
    %173 = arith.mulf %168, %172 : vector<8x8xf32>
    %174 = vector.broadcast %9 : vector<1x8xf32> to vector<8x8xf32>
    %175 = arith.mulf %173, %174 : vector<8x8xf32>
    %176 = vector.broadcast %10 : vector<1x8xf32> to vector<8x8xf32>
    %177 = arith.addf %175, %176 : vector<8x8xf32>
    %cst_54 = arith.constant 5.000000e-01 : f32
    %178 = vector.broadcast %cst_54 : f32 to vector<8x8xf32>
    %179 = arith.mulf %178, %177 : vector<8x8xf32>
    %cst_55 = arith.constant 4.471500e-02 : f32
    %180 = vector.broadcast %cst_55 : f32 to vector<8x8xf32>
    %181 = arith.mulf %180, %177 : vector<8x8xf32>
    %182 = arith.mulf %181, %177 : vector<8x8xf32>
    %183 = arith.mulf %182, %177 : vector<8x8xf32>
    %184 = arith.addf %177, %183 : vector<8x8xf32>
    %cst_56 = arith.constant 0.797884583 : f32
    %185 = vector.broadcast %cst_56 : f32 to vector<8x8xf32>
    %186 = arith.mulf %185, %184 : vector<8x8xf32>
    %187 = math.tanh %186 : vector<8x8xf32>
    %cst_57 = arith.constant 1.000000e+00 : f32
    %188 = vector.broadcast %cst_57 : f32 to vector<8x8xf32>
    %189 = arith.addf %188, %187 : vector<8x8xf32>
    %190 = arith.mulf %179, %189 : vector<8x8xf32>
    %191 = vector.extract_strided_slice %8 {offsets = [0, 40], sizes = [8, 8], strides = [1, 1]} : vector<8x64xf32> to vector<8x8xf32>
    %cst_58 = arith.constant dense<0.000000e+00> : vector<8xf32>
    %192 = vector.multi_reduction <add>, %191, %cst_58 [1] : vector<8x8xf32> to vector<8xf32>
    %193 = vector.shape_cast %192 : vector<8xf32> to vector<8x1xf32>
    %cst_59 = arith.constant 8.000000e+00 : f32
    %194 = vector.broadcast %cst_59 : f32 to vector<8x1xf32>
    %195 = arith.divf %193, %194 : vector<8x1xf32>
    %196 = vector.broadcast %195 : vector<8x1xf32> to vector<8x8xf32>
    %197 = arith.subf %191, %196 : vector<8x8xf32>
    %198 = arith.mulf %197, %197 : vector<8x8xf32>
    %cst_60 = arith.constant dense<0.000000e+00> : vector<8xf32>
    %199 = vector.multi_reduction <add>, %198, %cst_60 [1] : vector<8x8xf32> to vector<8xf32>
    %200 = vector.shape_cast %199 : vector<8xf32> to vector<8x1xf32>
    %cst_61 = arith.constant 8.000000e+00 : f32
    %201 = vector.broadcast %cst_61 : f32 to vector<8x1xf32>
    %202 = arith.divf %200, %201 : vector<8x1xf32>
    %203 = vector.broadcast %195 : vector<8x1xf32> to vector<8x8xf32>
    %204 = arith.subf %191, %203 : vector<8x8xf32>
    %cst_62 = arith.constant 9.99999974E-6 : f32
    %205 = vector.broadcast %cst_62 : f32 to vector<8x1xf32>
    %206 = arith.addf %202, %205 : vector<8x1xf32>
    %207 = math.rsqrt %206 : vector<8x1xf32>
    %208 = vector.broadcast %207 : vector<8x1xf32> to vector<8x8xf32>
    %209 = arith.mulf %204, %208 : vector<8x8xf32>
    %210 = vector.broadcast %9 : vector<1x8xf32> to vector<8x8xf32>
    %211 = arith.mulf %209, %210 : vector<8x8xf32>
    %212 = vector.broadcast %10 : vector<1x8xf32> to vector<8x8xf32>
    %213 = arith.addf %211, %212 : vector<8x8xf32>
    %cst_63 = arith.constant 5.000000e-01 : f32
    %214 = vector.broadcast %cst_63 : f32 to vector<8x8xf32>
    %215 = arith.mulf %214, %213 : vector<8x8xf32>
    %cst_64 = arith.constant 4.471500e-02 : f32
    %216 = vector.broadcast %cst_64 : f32 to vector<8x8xf32>
    %217 = arith.mulf %216, %213 : vector<8x8xf32>
    %218 = arith.mulf %217, %213 : vector<8x8xf32>
    %219 = arith.mulf %218, %213 : vector<8x8xf32>
    %220 = arith.addf %213, %219 : vector<8x8xf32>
    %cst_65 = arith.constant 0.797884583 : f32
    %221 = vector.broadcast %cst_65 : f32 to vector<8x8xf32>
    %222 = arith.mulf %221, %220 : vector<8x8xf32>
    %223 = math.tanh %222 : vector<8x8xf32>
    %cst_66 = arith.constant 1.000000e+00 : f32
    %224 = vector.broadcast %cst_66 : f32 to vector<8x8xf32>
    %225 = arith.addf %224, %223 : vector<8x8xf32>
    %226 = arith.mulf %215, %225 : vector<8x8xf32>
    %227 = vector.extract_strided_slice %8 {offsets = [0, 48], sizes = [8, 8], strides = [1, 1]} : vector<8x64xf32> to vector<8x8xf32>
    %cst_67 = arith.constant dense<0.000000e+00> : vector<8xf32>
    %228 = vector.multi_reduction <add>, %227, %cst_67 [1] : vector<8x8xf32> to vector<8xf32>
    %229 = vector.shape_cast %228 : vector<8xf32> to vector<8x1xf32>
    %cst_68 = arith.constant 8.000000e+00 : f32
    %230 = vector.broadcast %cst_68 : f32 to vector<8x1xf32>
    %231 = arith.divf %229, %230 : vector<8x1xf32>
    %232 = vector.broadcast %231 : vector<8x1xf32> to vector<8x8xf32>
    %233 = arith.subf %227, %232 : vector<8x8xf32>
    %234 = arith.mulf %233, %233 : vector<8x8xf32>
    %cst_69 = arith.constant dense<0.000000e+00> : vector<8xf32>
    %235 = vector.multi_reduction <add>, %234, %cst_69 [1] : vector<8x8xf32> to vector<8xf32>
    %236 = vector.shape_cast %235 : vector<8xf32> to vector<8x1xf32>
    %cst_70 = arith.constant 8.000000e+00 : f32
    %237 = vector.broadcast %cst_70 : f32 to vector<8x1xf32>
    %238 = arith.divf %236, %237 : vector<8x1xf32>
    %239 = vector.broadcast %231 : vector<8x1xf32> to vector<8x8xf32>
    %240 = arith.subf %227, %239 : vector<8x8xf32>
    %cst_71 = arith.constant 9.99999974E-6 : f32
    %241 = vector.broadcast %cst_71 : f32 to vector<8x1xf32>
    %242 = arith.addf %238, %241 : vector<8x1xf32>
    %243 = math.rsqrt %242 : vector<8x1xf32>
    %244 = vector.broadcast %243 : vector<8x1xf32> to vector<8x8xf32>
    %245 = arith.mulf %240, %244 : vector<8x8xf32>
    %246 = vector.broadcast %9 : vector<1x8xf32> to vector<8x8xf32>
    %247 = arith.mulf %245, %246 : vector<8x8xf32>
    %248 = vector.broadcast %10 : vector<1x8xf32> to vector<8x8xf32>
    %249 = arith.addf %247, %248 : vector<8x8xf32>
    %cst_72 = arith.constant 5.000000e-01 : f32
    %250 = vector.broadcast %cst_72 : f32 to vector<8x8xf32>
    %251 = arith.mulf %250, %249 : vector<8x8xf32>
    %cst_73 = arith.constant 4.471500e-02 : f32
    %252 = vector.broadcast %cst_73 : f32 to vector<8x8xf32>
    %253 = arith.mulf %252, %249 : vector<8x8xf32>
    %254 = arith.mulf %253, %249 : vector<8x8xf32>
    %255 = arith.mulf %254, %249 : vector<8x8xf32>
    %256 = arith.addf %249, %255 : vector<8x8xf32>
    %cst_74 = arith.constant 0.797884583 : f32
    %257 = vector.broadcast %cst_74 : f32 to vector<8x8xf32>
    %258 = arith.mulf %257, %256 : vector<8x8xf32>
    %259 = math.tanh %258 : vector<8x8xf32>
    %cst_75 = arith.constant 1.000000e+00 : f32
    %260 = vector.broadcast %cst_75 : f32 to vector<8x8xf32>
    %261 = arith.addf %260, %259 : vector<8x8xf32>
    %262 = arith.mulf %251, %261 : vector<8x8xf32>
    %263 = vector.extract_strided_slice %8 {offsets = [0, 56], sizes = [8, 8], strides = [1, 1]} : vector<8x64xf32> to vector<8x8xf32>
    %cst_76 = arith.constant dense<0.000000e+00> : vector<8xf32>
    %264 = vector.multi_reduction <add>, %263, %cst_76 [1] : vector<8x8xf32> to vector<8xf32>
    %265 = vector.shape_cast %264 : vector<8xf32> to vector<8x1xf32>
    %cst_77 = arith.constant 8.000000e+00 : f32
    %266 = vector.broadcast %cst_77 : f32 to vector<8x1xf32>
    %267 = arith.divf %265, %266 : vector<8x1xf32>
    %268 = vector.broadcast %267 : vector<8x1xf32> to vector<8x8xf32>
    %269 = arith.subf %263, %268 : vector<8x8xf32>
    %270 = arith.mulf %269, %269 : vector<8x8xf32>
    %cst_78 = arith.constant dense<0.000000e+00> : vector<8xf32>
    %271 = vector.multi_reduction <add>, %270, %cst_78 [1] : vector<8x8xf32> to vector<8xf32>
    %272 = vector.shape_cast %271 : vector<8xf32> to vector<8x1xf32>
    %cst_79 = arith.constant 8.000000e+00 : f32
    %273 = vector.broadcast %cst_79 : f32 to vector<8x1xf32>
    %274 = arith.divf %272, %273 : vector<8x1xf32>
    %275 = vector.broadcast %267 : vector<8x1xf32> to vector<8x8xf32>
    %276 = arith.subf %263, %275 : vector<8x8xf32>
    %cst_80 = arith.constant 9.99999974E-6 : f32
    %277 = vector.broadcast %cst_80 : f32 to vector<8x1xf32>
    %278 = arith.addf %274, %277 : vector<8x1xf32>
    %279 = math.rsqrt %278 : vector<8x1xf32>
    %280 = vector.broadcast %279 : vector<8x1xf32> to vector<8x8xf32>
    %281 = arith.mulf %276, %280 : vector<8x8xf32>
    %282 = vector.broadcast %9 : vector<1x8xf32> to vector<8x8xf32>
    %283 = arith.mulf %281, %282 : vector<8x8xf32>
    %284 = vector.broadcast %10 : vector<1x8xf32> to vector<8x8xf32>
    %285 = arith.addf %283, %284 : vector<8x8xf32>
    %cst_81 = arith.constant 5.000000e-01 : f32
    %286 = vector.broadcast %cst_81 : f32 to vector<8x8xf32>
    %287 = arith.mulf %286, %285 : vector<8x8xf32>
    %cst_82 = arith.constant 4.471500e-02 : f32
    %288 = vector.broadcast %cst_82 : f32 to vector<8x8xf32>
    %289 = arith.mulf %288, %285 : vector<8x8xf32>
    %290 = arith.mulf %289, %285 : vector<8x8xf32>
    %291 = arith.mulf %290, %285 : vector<8x8xf32>
    %292 = arith.addf %285, %291 : vector<8x8xf32>
    %cst_83 = arith.constant 0.797884583 : f32
    %293 = vector.broadcast %cst_83 : f32 to vector<8x8xf32>
    %294 = arith.mulf %293, %292 : vector<8x8xf32>
    %295 = math.tanh %294 : vector<8x8xf32>
    %cst_84 = arith.constant 1.000000e+00 : f32
    %296 = vector.broadcast %cst_84 : f32 to vector<8x8xf32>
    %297 = arith.addf %296, %295 : vector<8x8xf32>
    %298 = arith.mulf %287, %297 : vector<8x8xf32>
    %299 = tpu.concatenate %46, %82, %118, %154, %190, %226, %262, %298 in 1 : vector<8x8xf32>, vector<8x8xf32>, vector<8x8xf32>, vector<8x8xf32>, vector<8x8xf32>, vector<8x8xf32>, vector<8x8xf32>, vector<8x8xf32> -> vector<8x64xf32>
    %c0_85 = arith.constant 0 : index
    %c0_86 = arith.constant 0 : index
    %300 = vector.load %arg7[%c0_85, %c0_86] : memref<8x64xf32, #tpu.memory_space<vmem>>, vector<8x64xf32>
    %301 = arith.addf %299, %300 : vector<8x64xf32>
    %c0_87 = arith.constant 0 : index
    %c0_88 = arith.constant 0 : index
    %302 = vector.load %arg12[%c0_87, %c0_88] : memref<25x64xf32, #tpu.memory_space<vmem>>, vector<8x64xf32>
    tpu.vector_store %arg12[%c0_87, %c0_88], %301 {strides = array<i32>} : memref<25x64xf32, #tpu.memory_space<vmem>>, vector<8x64xf32>,
    %c8 = arith.constant 8 : index
    %c0_89 = arith.constant 0 : index
    %303 = vector.load %arg12[%c8, %c0_89] : memref<25x64xf32, #tpu.memory_space<vmem>>, vector<17x64xf32>
    tpu.vector_store %arg12[%c8, %c0_89], %1 {strides = array<i32>} : memref<25x64xf32, #tpu.memory_space<vmem>>, vector<17x64xf32>,
    %c0_90 = arith.constant 0 : index
    %c0_91 = arith.constant 0 : index
    %304 = vector.load %arg12[%c0_90, %c0_91] : memref<25x64xf32, #tpu.memory_space<vmem>>, vector<25x64xf32>
    %c0_92 = arith.constant 0 : index
    %c0_93 = arith.constant 0 : index
    %305 = vector.load %arg8[%c0_92, %c0_93] : memref<64x192xf32, #tpu.memory_space<vmem>>, vector<64x192xf32>
    %cst_94 = arith.constant dense<0.000000e+00> : vector<25x192xf32>
    %306 = tpu.matmul %304, %305, %cst_94 {dimension_numbers = #tpu.dot_dimension_numbers<[1], [0], [0], [1], [0, 0, 1, 1], [], []>} : vector<25x64xf32>, vector<64x192xf32>, vector<25x192xf32> -> vector<25x192xf32>
    %307 = vector.extract_strided_slice %306 {offsets = [0, 0], sizes = [25, 64], strides = [1, 1]} : vector<25x192xf32> to vector<25x64xf32>
    %308 = vector.extract_strided_slice %306 {offsets = [0, 64], sizes = [25, 64], strides = [1, 1]} : vector<25x192xf32> to vector<25x64xf32>
    %309 = vector.extract_strided_slice %306 {offsets = [0, 128], sizes = [25, 64], strides = [1, 1]} : vector<25x192xf32> to vector<25x64xf32>
    %cst_95 = arith.constant 0.000000e+00 : f32
    %310 = vector.broadcast %cst_95 : f32 to vector<25x64xf32>
    %311 = vector.extract_strided_slice %307 {offsets = [0, 0], sizes = [25, 8], strides = [1, 1]} : vector<25x64xf32> to vector<25x8xf32>
    %312 = vector.extract_strided_slice %308 {offsets = [0, 0], sizes = [25, 8], strides = [1, 1]} : vector<25x64xf32> to vector<25x8xf32>
    %313 = vector.extract_strided_slice %309 {offsets = [0, 0], sizes = [25, 8], strides = [1, 1]} : vector<25x64xf32> to vector<25x8xf32>
    %cst_96 = arith.constant dense<0.000000e+00> : vector<25x25xf32>
    %314 = tpu.matmul %311, %312, %cst_96 {dimension_numbers = #tpu.dot_dimension_numbers<[1], [1], [0], [0], [0, 0, 1, 0], [], []>} : vector<25x8xf32>, vector<25x8xf32>, vector<25x25xf32> -> vector<25x25xf32>
    %cst_97 = arith.constant 0.353553385 : f32
    %315 = vector.broadcast %cst_97 : f32 to vector<25x25xf32>
    %316 = arith.mulf %314, %315 : vector<25x25xf32>
    %cst_98 = arith.constant dense<0xFF800000> : vector<25xf32>
    %317 = vector.multi_reduction <maximumf>, %316, %cst_98 [1] : vector<25x25xf32> to vector<25xf32>
    %318 = vector.shape_cast %317 : vector<25xf32> to vector<25x1xf32>
    %319 = vector.broadcast %318 : vector<25x1xf32> to vector<25x25xf32>
    %320 = arith.subf %316, %319 : vector<25x25xf32>
    %321 = math.exp %320 : vector<25x25xf32>
    %cst_99 = arith.constant dense<0.000000e+00> : vector<25xf32>
    %322 = vector.multi_reduction <add>, %321, %cst_99 [1] : vector<25x25xf32> to vector<25xf32>
    %323 = vector.shape_cast %322 : vector<25xf32> to vector<25x1xf32>
    %324 = tpu.reciprocal %323 {approx = true} : vector<25x1xf32> -> vector<25x1xf32>
    %325 = vector.broadcast %324 : vector<25x1xf32> to vector<25x25xf32>
    %326 = arith.mulf %321, %325 : vector<25x25xf32>
    %cst_100 = arith.constant dense<0.000000e+00> : vector<25x8xf32>
    %327 = tpu.matmul %326, %313, %cst_100 {dimension_numbers = #tpu.dot_dimension_numbers<[1], [0], [0], [1], [0, 0, 1, 1], [], []>} : vector<25x25xf32>, vector<25x8xf32>, vector<25x8xf32> -> vector<25x8xf32>
    %c0_101 = arith.constant 0 : index
    %c0_102 = arith.constant 0 : index
    %328 = vector.load %arg9[%c0_101, %c0_102] : memref<64x64xf32, #tpu.memory_space<vmem>>, vector<8x64xf32>
    %cst_103 = arith.constant dense<0.000000e+00> : vector<25x64xf32>
    %329 = tpu.matmul %327, %328, %cst_103 {dimension_numbers = #tpu.dot_dimension_numbers<[1], [0], [0], [1], [0, 0, 1, 1], [], []>} : vector<25x8xf32>, vector<8x64xf32>, vector<25x64xf32> -> vector<25x64xf32>
    %330 = arith.addf %310, %329 : vector<25x64xf32>
    %331 = vector.extract_strided_slice %307 {offsets = [0, 8], sizes = [25, 8], strides = [1, 1]} : vector<25x64xf32> to vector<25x8xf32>
    %332 = vector.extract_strided_slice %308 {offsets = [0, 8], sizes = [25, 8], strides = [1, 1]} : vector<25x64xf32> to vector<25x8xf32>
    %333 = vector.extract_strided_slice %309 {offsets = [0, 8], sizes = [25, 8], strides = [1, 1]} : vector<25x64xf32> to vector<25x8xf32>
    %cst_104 = arith.constant dense<0.000000e+00> : vector<25x25xf32>
    %334 = tpu.matmul %331, %332, %cst_104 {dimension_numbers = #tpu.dot_dimension_numbers<[1], [1], [0], [0], [0, 0, 1, 0], [], []>} : vector<25x8xf32>, vector<25x8xf32>, vector<25x25xf32> -> vector<25x25xf32>
    %cst_105 = arith.constant 0.353553385 : f32
    %335 = vector.broadcast %cst_105 : f32 to vector<25x25xf32>
    %336 = arith.mulf %334, %335 : vector<25x25xf32>
    %cst_106 = arith.constant dense<0xFF800000> : vector<25xf32>
    %337 = vector.multi_reduction <maximumf>, %336, %cst_106 [1] : vector<25x25xf32> to vector<25xf32>
    %338 = vector.shape_cast %337 : vector<25xf32> to vector<25x1xf32>
    %339 = vector.broadcast %338 : vector<25x1xf32> to vector<25x25xf32>
    %340 = arith.subf %336, %339 : vector<25x25xf32>
    %341 = math.exp %340 : vector<25x25xf32>
    %cst_107 = arith.constant dense<0.000000e+00> : vector<25xf32>
    %342 = vector.multi_reduction <add>, %341, %cst_107 [1] : vector<25x25xf32> to vector<25xf32>
    %343 = vector.shape_cast %342 : vector<25xf32> to vector<25x1xf32>
    %344 = tpu.reciprocal %343 {approx = true} : vector<25x1xf32> -> vector<25x1xf32>
    %345 = vector.broadcast %344 : vector<25x1xf32> to vector<25x25xf32>
    %346 = arith.mulf %341, %345 : vector<25x25xf32>
    %cst_108 = arith.constant dense<0.000000e+00> : vector<25x8xf32>
    %347 = tpu.matmul %346, %333, %cst_108 {dimension_numbers = #tpu.dot_dimension_numbers<[1], [0], [0], [1], [0, 0, 1, 1], [], []>} : vector<25x25xf32>, vector<25x8xf32>, vector<25x8xf32> -> vector<25x8xf32>
    %c8_109 = arith.constant 8 : index
    %c0_110 = arith.constant 0 : index
    %348 = vector.load %arg9[%c8_109, %c0_110] : memref<64x64xf32, #tpu.memory_space<vmem>>, vector<8x64xf32>
    %cst_111 = arith.constant dense<0.000000e+00> : vector<25x64xf32>
    %349 = tpu.matmul %347, %348, %cst_111 {dimension_numbers = #tpu.dot_dimension_numbers<[1], [0], [0], [1], [0, 0, 1, 1], [], []>} : vector<25x8xf32>, vector<8x64xf32>, vector<25x64xf32> -> vector<25x64xf32>
    %350 = arith.addf %330, %349 : vector<25x64xf32>
    %351 = vector.extract_strided_slice %307 {offsets = [0, 16], sizes = [25, 8], strides = [1, 1]} : vector<25x64xf32> to vector<25x8xf32>
    %352 = vector.extract_strided_slice %308 {offsets = [0, 16], sizes = [25, 8], strides = [1, 1]} : vector<25x64xf32> to vector<25x8xf32>
    %353 = vector.extract_strided_slice %309 {offsets = [0, 16], sizes = [25, 8], strides = [1, 1]} : vector<25x64xf32> to vector<25x8xf32>
    %cst_112 = arith.constant dense<0.000000e+00> : vector<25x25xf32>
    %354 = tpu.matmul %351, %352, %cst_112 {dimension_numbers = #tpu.dot_dimension_numbers<[1], [1], [0], [0], [0, 0, 1, 0], [], []>} : vector<25x8xf32>, vector<25x8xf32>, vector<25x25xf32> -> vector<25x25xf32>
    %cst_113 = arith.constant 0.353553385 : f32
    %355 = vector.broadcast %cst_113 : f32 to vector<25x25xf32>
    %356 = arith.mulf %354, %355 : vector<25x25xf32>
    %cst_114 = arith.constant dense<0xFF800000> : vector<25xf32>
    %357 = vector.multi_reduction <maximumf>, %356, %cst_114 [1] : vector<25x25xf32> to vector<25xf32>
    %358 = vector.shape_cast %357 : vector<25xf32> to vector<25x1xf32>
    %359 = vector.broadcast %358 : vector<25x1xf32> to vector<25x25xf32>
    %360 = arith.subf %356, %359 : vector<25x25xf32>
    %361 = math.exp %360 : vector<25x25xf32>
    %cst_115 = arith.constant dense<0.000000e+00> : vector<25xf32>
    %362 = vector.multi_reduction <add>, %361, %cst_115 [1] : vector<25x25xf32> to vector<25xf32>
    %363 = vector.shape_cast %362 : vector<25xf32> to vector<25x1xf32>
    %364 = tpu.reciprocal %363 {approx = true} : vector<25x1xf32> -> vector<25x1xf32>
    %365 = vector.broadcast %364 : vector<25x1xf32> to vector<25x25xf32>
    %366 = arith.mulf %361, %365 : vector<25x25xf32>
    %cst_116 = arith.constant dense<0.000000e+00> : vector<25x8xf32>
    %367 = tpu.matmul %366, %353, %cst_116 {dimension_numbers = #tpu.dot_dimension_numbers<[1], [0], [0], [1], [0, 0, 1, 1], [], []>} : vector<25x25xf32>, vector<25x8xf32>, vector<25x8xf32> -> vector<25x8xf32>
    %c16 = arith.constant 16 : index
    %c0_117 = arith.constant 0 : index
    %368 = vector.load %arg9[%c16, %c0_117] : memref<64x64xf32, #tpu.memory_space<vmem>>, vector<8x64xf32>
    %cst_118 = arith.constant dense<0.000000e+00> : vector<25x64xf32>
    %369 = tpu.matmul %367, %368, %cst_118 {dimension_numbers = #tpu.dot_dimension_numbers<[1], [0], [0], [1], [0, 0, 1, 1], [], []>} : vector<25x8xf32>, vector<8x64xf32>, vector<25x64xf32> -> vector<25x64xf32>
    %370 = arith.addf %350, %369 : vector<25x64xf32>
    %371 = vector.extract_strided_slice %307 {offsets = [0, 24], sizes = [25, 8], strides = [1, 1]} : vector<25x64xf32> to vector<25x8xf32>
    %372 = vector.extract_strided_slice %308 {offsets = [0, 24], sizes = [25, 8], strides = [1, 1]} : vector<25x64xf32> to vector<25x8xf32>
    %373 = vector.extract_strided_slice %309 {offsets = [0, 24], sizes = [25, 8], strides = [1, 1]} : vector<25x64xf32> to vector<25x8xf32>
    %cst_119 = arith.constant dense<0.000000e+00> : vector<25x25xf32>
    %374 = tpu.matmul %371, %372, %cst_119 {dimension_numbers = #tpu.dot_dimension_numbers<[1], [1], [0], [0], [0, 0, 1, 0], [], []>} : vector<25x8xf32>, vector<25x8xf32>, vector<25x25xf32> -> vector<25x25xf32>
    %cst_120 = arith.constant 0.353553385 : f32
    %375 = vector.broadcast %cst_120 : f32 to vector<25x25xf32>
    %376 = arith.mulf %374, %375 : vector<25x25xf32>
    %cst_121 = arith.constant dense<0xFF800000> : vector<25xf32>
    %377 = vector.multi_reduction <maximumf>, %376, %cst_121 [1] : vector<25x25xf32> to vector<25xf32>
    %378 = vector.shape_cast %377 : vector<25xf32> to vector<25x1xf32>
    %379 = vector.broadcast %378 : vector<25x1xf32> to vector<25x25xf32>
    %380 = arith.subf %376, %379 : vector<25x25xf32>
    %381 = math.exp %380 : vector<25x25xf32>
    %cst_122 = arith.constant dense<0.000000e+00> : vector<25xf32>
    %382 = vector.multi_reduction <add>, %381, %cst_122 [1] : vector<25x25xf32> to vector<25xf32>
    %383 = vector.shape_cast %382 : vector<25xf32> to vector<25x1xf32>
    %384 = tpu.reciprocal %383 {approx = true} : vector<25x1xf32> -> vector<25x1xf32>
    %385 = vector.broadcast %384 : vector<25x1xf32> to vector<25x25xf32>
    %386 = arith.mulf %381, %385 : vector<25x25xf32>
    %cst_123 = arith.constant dense<0.000000e+00> : vector<25x8xf32>
    %387 = tpu.matmul %386, %373, %cst_123 {dimension_numbers = #tpu.dot_dimension_numbers<[1], [0], [0], [1], [0, 0, 1, 1], [], []>} : vector<25x25xf32>, vector<25x8xf32>, vector<25x8xf32> -> vector<25x8xf32>
    %c24 = arith.constant 24 : index
    %c0_124 = arith.constant 0 : index
    %388 = vector.load %arg9[%c24, %c0_124] : memref<64x64xf32, #tpu.memory_space<vmem>>, vector<8x64xf32>
    %cst_125 = arith.constant dense<0.000000e+00> : vector<25x64xf32>
    %389 = tpu.matmul %387, %388, %cst_125 {dimension_numbers = #tpu.dot_dimension_numbers<[1], [0], [0], [1], [0, 0, 1, 1], [], []>} : vector<25x8xf32>, vector<8x64xf32>, vector<25x64xf32> -> vector<25x64xf32>
    %390 = arith.addf %370, %389 : vector<25x64xf32>
    %391 = vector.extract_strided_slice %307 {offsets = [0, 32], sizes = [25, 8], strides = [1, 1]} : vector<25x64xf32> to vector<25x8xf32>
    %392 = vector.extract_strided_slice %308 {offsets = [0, 32], sizes = [25, 8], strides = [1, 1]} : vector<25x64xf32> to vector<25x8xf32>
    %393 = vector.extract_strided_slice %309 {offsets = [0, 32], sizes = [25, 8], strides = [1, 1]} : vector<25x64xf32> to vector<25x8xf32>
    %cst_126 = arith.constant dense<0.000000e+00> : vector<25x25xf32>
    %394 = tpu.matmul %391, %392, %cst_126 {dimension_numbers = #tpu.dot_dimension_numbers<[1], [1], [0], [0], [0, 0, 1, 0], [], []>} : vector<25x8xf32>, vector<25x8xf32>, vector<25x25xf32> -> vector<25x25xf32>
    %cst_127 = arith.constant 0.353553385 : f32
    %395 = vector.broadcast %cst_127 : f32 to vector<25x25xf32>
    %396 = arith.mulf %394, %395 : vector<25x25xf32>
    %cst_128 = arith.constant dense<0xFF800000> : vector<25xf32>
    %397 = vector.multi_reduction <maximumf>, %396, %cst_128 [1] : vector<25x25xf32> to vector<25xf32>
    %398 = vector.shape_cast %397 : vector<25xf32> to vector<25x1xf32>
    %399 = vector.broadcast %398 : vector<25x1xf32> to vector<25x25xf32>
    %400 = arith.subf %396, %399 : vector<25x25xf32>
    %401 = math.exp %400 : vector<25x25xf32>
    %cst_129 = arith.constant dense<0.000000e+00> : vector<25xf32>
    %402 = vector.multi_reduction <add>, %401, %cst_129 [1] : vector<25x25xf32> to vector<25xf32>
    %403 = vector.shape_cast %402 : vector<25xf32> to vector<25x1xf32>
    %404 = tpu.reciprocal %403 {approx = true} : vector<25x1xf32> -> vector<25x1xf32>
    %405 = vector.broadcast %404 : vector<25x1xf32> to vector<25x25xf32>
    %406 = arith.mulf %401, %405 : vector<25x25xf32>
    %cst_130 = arith.constant dense<0.000000e+00> : vector<25x8xf32>
    %407 = tpu.matmul %406, %393, %cst_130 {dimension_numbers = #tpu.dot_dimension_numbers<[1], [0], [0], [1], [0, 0, 1, 1], [], []>} : vector<25x25xf32>, vector<25x8xf32>, vector<25x8xf32> -> vector<25x8xf32>
    %c32 = arith.constant 32 : index
    %c0_131 = arith.constant 0 : index
    %408 = vector.load %arg9[%c32, %c0_131] : memref<64x64xf32, #tpu.memory_space<vmem>>, vector<8x64xf32>
    %cst_132 = arith.constant dense<0.000000e+00> : vector<25x64xf32>
    %409 = tpu.matmul %407, %408, %cst_132 {dimension_numbers = #tpu.dot_dimension_numbers<[1], [0], [0], [1], [0, 0, 1, 1], [], []>} : vector<25x8xf32>, vector<8x64xf32>, vector<25x64xf32> -> vector<25x64xf32>
    %410 = arith.addf %390, %409 : vector<25x64xf32>
    %411 = vector.extract_strided_slice %307 {offsets = [0, 40], sizes = [25, 8], strides = [1, 1]} : vector<25x64xf32> to vector<25x8xf32>
    %412 = vector.extract_strided_slice %308 {offsets = [0, 40], sizes = [25, 8], strides = [1, 1]} : vector<25x64xf32> to vector<25x8xf32>
    %413 = vector.extract_strided_slice %309 {offsets = [0, 40], sizes = [25, 8], strides = [1, 1]} : vector<25x64xf32> to vector<25x8xf32>
    %cst_133 = arith.constant dense<0.000000e+00> : vector<25x25xf32>
    %414 = tpu.matmul %411, %412, %cst_133 {dimension_numbers = #tpu.dot_dimension_numbers<[1], [1], [0], [0], [0, 0, 1, 0], [], []>} : vector<25x8xf32>, vector<25x8xf32>, vector<25x25xf32> -> vector<25x25xf32>
    %cst_134 = arith.constant 0.353553385 : f32
    %415 = vector.broadcast %cst_134 : f32 to vector<25x25xf32>
    %416 = arith.mulf %414, %415 : vector<25x25xf32>
    %cst_135 = arith.constant dense<0xFF800000> : vector<25xf32>
    %417 = vector.multi_reduction <maximumf>, %416, %cst_135 [1] : vector<25x25xf32> to vector<25xf32>
    %418 = vector.shape_cast %417 : vector<25xf32> to vector<25x1xf32>
    %419 = vector.broadcast %418 : vector<25x1xf32> to vector<25x25xf32>
    %420 = arith.subf %416, %419 : vector<25x25xf32>
    %421 = math.exp %420 : vector<25x25xf32>
    %cst_136 = arith.constant dense<0.000000e+00> : vector<25xf32>
    %422 = vector.multi_reduction <add>, %421, %cst_136 [1] : vector<25x25xf32> to vector<25xf32>
    %423 = vector.shape_cast %422 : vector<25xf32> to vector<25x1xf32>
    %424 = tpu.reciprocal %423 {approx = true} : vector<25x1xf32> -> vector<25x1xf32>
    %425 = vector.broadcast %424 : vector<25x1xf32> to vector<25x25xf32>
    %426 = arith.mulf %421, %425 : vector<25x25xf32>
    %cst_137 = arith.constant dense<0.000000e+00> : vector<25x8xf32>
    %427 = tpu.matmul %426, %413, %cst_137 {dimension_numbers = #tpu.dot_dimension_numbers<[1], [0], [0], [1], [0, 0, 1, 1], [], []>} : vector<25x25xf32>, vector<25x8xf32>, vector<25x8xf32> -> vector<25x8xf32>
    %c40 = arith.constant 40 : index
    %c0_138 = arith.constant 0 : index
    %428 = vector.load %arg9[%c40, %c0_138] : memref<64x64xf32, #tpu.memory_space<vmem>>, vector<8x64xf32>
    %cst_139 = arith.constant dense<0.000000e+00> : vector<25x64xf32>
    %429 = tpu.matmul %427, %428, %cst_139 {dimension_numbers = #tpu.dot_dimension_numbers<[1], [0], [0], [1], [0, 0, 1, 1], [], []>} : vector<25x8xf32>, vector<8x64xf32>, vector<25x64xf32> -> vector<25x64xf32>
    %430 = arith.addf %410, %429 : vector<25x64xf32>
    %431 = vector.extract_strided_slice %307 {offsets = [0, 48], sizes = [25, 8], strides = [1, 1]} : vector<25x64xf32> to vector<25x8xf32>
    %432 = vector.extract_strided_slice %308 {offsets = [0, 48], sizes = [25, 8], strides = [1, 1]} : vector<25x64xf32> to vector<25x8xf32>
    %433 = vector.extract_strided_slice %309 {offsets = [0, 48], sizes = [25, 8], strides = [1, 1]} : vector<25x64xf32> to vector<25x8xf32>
    %cst_140 = arith.constant dense<0.000000e+00> : vector<25x25xf32>
    %434 = tpu.matmul %431, %432, %cst_140 {dimension_numbers = #tpu.dot_dimension_numbers<[1], [1], [0], [0], [0, 0, 1, 0], [], []>} : vector<25x8xf32>, vector<25x8xf32>, vector<25x25xf32> -> vector<25x25xf32>
    %cst_141 = arith.constant 0.353553385 : f32
    %435 = vector.broadcast %cst_141 : f32 to vector<25x25xf32>
    %436 = arith.mulf %434, %435 : vector<25x25xf32>
    %cst_142 = arith.constant dense<0xFF800000> : vector<25xf32>
    %437 = vector.multi_reduction <maximumf>, %436, %cst_142 [1] : vector<25x25xf32> to vector<25xf32>
    %438 = vector.shape_cast %437 : vector<25xf32> to vector<25x1xf32>
    %439 = vector.broadcast %438 : vector<25x1xf32> to vector<25x25xf32>
    %440 = arith.subf %436, %439 : vector<25x25xf32>
    %441 = math.exp %440 : vector<25x25xf32>
    %cst_143 = arith.constant dense<0.000000e+00> : vector<25xf32>
    %442 = vector.multi_reduction <add>, %441, %cst_143 [1] : vector<25x25xf32> to vector<25xf32>
    %443 = vector.shape_cast %442 : vector<25xf32> to vector<25x1xf32>
    %444 = tpu.reciprocal %443 {approx = true} : vector<25x1xf32> -> vector<25x1xf32>
    %445 = vector.broadcast %444 : vector<25x1xf32> to vector<25x25xf32>
    %446 = arith.mulf %441, %445 : vector<25x25xf32>
    %cst_144 = arith.constant dense<0.000000e+00> : vector<25x8xf32>
    %447 = tpu.matmul %446, %433, %cst_144 {dimension_numbers = #tpu.dot_dimension_numbers<[1], [0], [0], [1], [0, 0, 1, 1], [], []>} : vector<25x25xf32>, vector<25x8xf32>, vector<25x8xf32> -> vector<25x8xf32>
    %c48 = arith.constant 48 : index
    %c0_145 = arith.constant 0 : index
    %448 = vector.load %arg9[%c48, %c0_145] : memref<64x64xf32, #tpu.memory_space<vmem>>, vector<8x64xf32>
    %cst_146 = arith.constant dense<0.000000e+00> : vector<25x64xf32>
    %449 = tpu.matmul %447, %448, %cst_146 {dimension_numbers = #tpu.dot_dimension_numbers<[1], [0], [0], [1], [0, 0, 1, 1], [], []>} : vector<25x8xf32>, vector<8x64xf32>, vector<25x64xf32> -> vector<25x64xf32>
    %450 = arith.addf %430, %449 : vector<25x64xf32>
    %451 = vector.extract_strided_slice %307 {offsets = [0, 56], sizes = [25, 8], strides = [1, 1]} : vector<25x64xf32> to vector<25x8xf32>
    %452 = vector.extract_strided_slice %308 {offsets = [0, 56], sizes = [25, 8], strides = [1, 1]} : vector<25x64xf32> to vector<25x8xf32>
    %453 = vector.extract_strided_slice %309 {offsets = [0, 56], sizes = [25, 8], strides = [1, 1]} : vector<25x64xf32> to vector<25x8xf32>
    %cst_147 = arith.constant dense<0.000000e+00> : vector<25x25xf32>
    %454 = tpu.matmul %451, %452, %cst_147 {dimension_numbers = #tpu.dot_dimension_numbers<[1], [1], [0], [0], [0, 0, 1, 0], [], []>} : vector<25x8xf32>, vector<25x8xf32>, vector<25x25xf32> -> vector<25x25xf32>
    %cst_148 = arith.constant 0.353553385 : f32
    %455 = vector.broadcast %cst_148 : f32 to vector<25x25xf32>
    %456 = arith.mulf %454, %455 : vector<25x25xf32>
    %cst_149 = arith.constant dense<0xFF800000> : vector<25xf32>
    %457 = vector.multi_reduction <maximumf>, %456, %cst_149 [1] : vector<25x25xf32> to vector<25xf32>
    %458 = vector.shape_cast %457 : vector<25xf32> to vector<25x1xf32>
    %459 = vector.broadcast %458 : vector<25x1xf32> to vector<25x25xf32>
    %460 = arith.subf %456, %459 : vector<25x25xf32>
    %461 = math.exp %460 : vector<25x25xf32>
    %cst_150 = arith.constant dense<0.000000e+00> : vector<25xf32>
    %462 = vector.multi_reduction <add>, %461, %cst_150 [1] : vector<25x25xf32> to vector<25xf32>
    %463 = vector.shape_cast %462 : vector<25xf32> to vector<25x1xf32>
    %464 = tpu.reciprocal %463 {approx = true} : vector<25x1xf32> -> vector<25x1xf32>
    %465 = vector.broadcast %464 : vector<25x1xf32> to vector<25x25xf32>
    %466 = arith.mulf %461, %465 : vector<25x25xf32>
    %cst_151 = arith.constant dense<0.000000e+00> : vector<25x8xf32>
    %467 = tpu.matmul %466, %453, %cst_151 {dimension_numbers = #tpu.dot_dimension_numbers<[1], [0], [0], [1], [0, 0, 1, 1], [], []>} : vector<25x25xf32>, vector<25x8xf32>, vector<25x8xf32> -> vector<25x8xf32>
    %c56 = arith.constant 56 : index
    %c0_152 = arith.constant 0 : index
    %468 = vector.load %arg9[%c56, %c0_152] : memref<64x64xf32, #tpu.memory_space<vmem>>, vector<8x64xf32>
    %cst_153 = arith.constant dense<0.000000e+00> : vector<25x64xf32>
    %469 = tpu.matmul %467, %468, %cst_153 {dimension_numbers = #tpu.dot_dimension_numbers<[1], [0], [0], [1], [0, 0, 1, 1], [], []>} : vector<25x8xf32>, vector<8x64xf32>, vector<25x64xf32> -> vector<25x64xf32>
    %470 = arith.addf %450, %469 : vector<25x64xf32>
    %c0_154 = arith.constant 0 : index
    %c0_155 = arith.constant 0 : index
    %471 = vector.load %arg10[%c0_154, %c0_155] : memref<1x64xf32, #tpu.memory_space<vmem>>, vector<1x64xf32>
    %472 = vector.broadcast %471 : vector<1x64xf32> to vector<25x64xf32>
    %473 = arith.addf %470, %472 : vector<25x64xf32>
    %474 = vector.extract_strided_slice %473 {offsets = [0, 0], sizes = [8, 64], strides = [1, 1]} : vector<25x64xf32> to vector<8x64xf32>
    %cst_156 = arith.constant dense<0.000000e+00> : vector<64xf32>
    %475 = vector.multi_reduction <add>, %474, %cst_156 [0] : vector<8x64xf32> to vector<64xf32>
    %476 = vector.shape_cast %475 : vector<64xf32> to vector<1x64xf32>
    %cst_157 = arith.constant 8.000000e+00 : f32
    %477 = vector.broadcast %cst_157 : f32 to vector<1x64xf32>
    %478 = arith.divf %476, %477 : vector<1x64xf32>
    %479 = vector.extract_strided_slice %473 {offsets = [8, 0], sizes = [17, 64], strides = [1, 1]} : vector<25x64xf32> to vector<17x64xf32>
    %480 = tpu.iota {dimensions = array<i32: 0>} : vector<17x64xi32>
    %c0_i32 = arith.constant 0 : i32
    %481 = vector.broadcast %c0_i32 : i32 to vector<17x64xi32>
    %482 = arith.cmpi eq, %480, %481 : vector<17x64xi32>
    %483 = vector.shape_cast %478 : vector<1x64xf32> to vector<1x64xf32>
    %484 = vector.broadcast %483 : vector<1x64xf32> to vector<17x64xf32>
    %cst_158 = arith.constant 0.000000e+00 : f32
    %485 = vector.broadcast %cst_158 : f32 to vector<17x64xf32>
    %486 = arith.select %482, %484, %485 : vector<17x64xi1>, vector<17x64xf32>
    %487 = arith.addf %479, %486 : vector<17x64xf32>
    %c0_159 = arith.constant 0 : index
    %c0_160 = arith.constant 0 : index
    %c0_161 = arith.constant 0 : index
    %488 = vector.load %arg11[%c0_159, %c0_160, %c0_161] : memref<1x17x64xf32, #tpu.memory_space<vmem>>, vector<1x17x64xf32>
    %489 = vector.shape_cast %488 : vector<1x17x64xf32> to vector<17x64xf32>
    %490 = vector.shape_cast %487 : vector<17x64xf32> to vector<1x17x64xf32>
    tpu.vector_store %arg11[%c0_159, %c0_160, %c0_161], %490 {strides = array<i32>} : memref<1x17x64xf32, #tpu.memory_space<vmem>>, vector<1x17x64xf32>,
    return
  }
  func.func @transform_0(%arg0: i32) -> (i32, i32, i32) {
    %c0_i32 = arith.constant 0 : i32
    %c0_i32_0 = arith.constant 0 : i32
    %c0_i32_1 = arith.constant 0 : i32
    return %arg0, %c0_i32, %c0_i32_0 : i32, i32, i32
  }
  func.func @transform_1(%arg0: i32) -> (i32, i32, i32) {
    %c0_i32 = arith.constant 0 : i32
    %c0_i32_0 = arith.constant 0 : i32
    %c0_i32_1 = arith.constant 0 : i32
    return %arg0, %c0_i32, %c0_i32_0 : i32, i32, i32
  }
  func.func @transform_2(%arg0: i32) -> (i32, i32) {
    %c0_i32 = arith.constant 0 : i32
    %c0_i32_0 = arith.constant 0 : i32
    %c0_i32_1 = arith.constant 0 : i32
    return %c0_i32, %c0_i32_0 : i32, i32
  }
  func.func @transform_3(%arg0: i32) -> (i32, i32) {
    %c0_i32 = arith.constant 0 : i32
    %c0_i32_0 = arith.constant 0 : i32
    %c0_i32_1 = arith.constant 0 : i32
    return %c0_i32, %c0_i32_0 : i32, i32
  }
  func.func @transform_4(%arg0: i32) -> (i32, i32) {
    %c0_i32 = arith.constant 0 : i32
    %c0_i32_0 = arith.constant 0 : i32
    %c0_i32_1 = arith.constant 0 : i32
    return %c0_i32, %c0_i32_0 : i32, i32
  }
  func.func @transform_5(%arg0: i32) -> (i32, i32) {
    %c0_i32 = arith.constant 0 : i32
    %c0_i32_0 = arith.constant 0 : i32
    %c0_i32_1 = arith.constant 0 : i32
    return %c0_i32, %c0_i32_0 : i32, i32
  }
  func.func @transform_6(%arg0: i32) -> (i32, i32) {
    %c0_i32 = arith.constant 0 : i32
    %c0_i32_0 = arith.constant 0 : i32
    %c0_i32_1 = arith.constant 0 : i32
    return %c0_i32, %c0_i32_0 : i32, i32
  }
  func.func @transform_7(%arg0: i32) -> (i32, i32) {
    %c0_i32 = arith.constant 0 : i32
    %c0_i32_0 = arith.constant 0 : i32
    %c0_i32_1 = arith.constant 0 : i32
    return %c0_i32, %c0_i32_0 : i32, i32
  }
  func.func @transform_8(%arg0: i32) -> (i32, i32) {
    %c0_i32 = arith.constant 0 : i32
    %c0_i32_0 = arith.constant 0 : i32
    %c0_i32_1 = arith.constant 0 : i32
    return %c0_i32, %c0_i32_0 : i32, i32
  }
  func.func @transform_9(%arg0: i32) -> (i32, i32) {
    %c0_i32 = arith.constant 0 : i32
    %c0_i32_0 = arith.constant 0 : i32
    %c0_i32_1 = arith.constant 0 : i32
    return %c0_i32, %c0_i32_0 : i32, i32
  }
  func.func @transform_10(%arg0: i32) -> (i32, i32, i32) {
    %c0_i32 = arith.constant 0 : i32
    %c0_i32_0 = arith.constant 0 : i32
    %c0_i32_1 = arith.constant 0 : i32
    return %arg0, %c0_i32, %c0_i32_0 : i32, i32, i32
  }
}

</mosaic_0001>

<llo_original>
// kernel: hi_attention_forward.1
$region0: #{hi_attention_forward.1}
  #allocation0 [shape = 'u32[]', space=smem, size = 0x4, offset = 0x4, fixed_abs, tag = 'smem constant byte address 0x4 - core index']
  #allocation1 [shape = 'u32[144,128]{1,0:T(1,128)}', space=vmem, size = 0x12000, scoped, tag = 'internal scratch']
  #allocation2 [shape = 'f32[25,64]{1,0:T(8,128)}', space=vmem, size = 0x4000, scoped, tag = 'scratch operand']
  %s0 = inlined_call_operand.vmem [shape: f32[2,17,64], index: 0, kind: input, shape index: {}]
  %s1 = inlined_call_operand.vmem [shape: f32[2,8,8], index: 1, kind: input, shape index: {}]
  %s2 = inlined_call_operand.vmem [shape: f32[8,64], index: 2, kind: input, shape index: {}]
  %s3 = inlined_call_operand.vmem [shape: f32[1,64], index: 3, kind: input, shape index: {}]
  %s4 = inlined_call_operand.vmem [shape: f32[1,8], index: 4, kind: input, shape index: {}]
  %s5 = inlined_call_operand.vmem [shape: f32[1,8], index: 5, kind: input, shape index: {}]
  %s6 = inlined_call_operand.vmem [shape: f32[8,64], index: 6, kind: input, shape index: {}]
  %s7 = inlined_call_operand.vmem [shape: f32[64,192], index: 7, kind: input, shape index: {}]
  %s8 = inlined_call_operand.hbm [shape: f32[64,64], index: 8, kind: input, shape index: {}]
  %s9 = inlined_call_operand.vmem [shape: f32[1,64], index: 9, kind: input, shape index: {}]
  %s10 = inlined_call_operand.vmem [shape: f32[2,17,64], index: 10, kind: output, shape index: {}]
  %s11 = sld [smem:[#allocation0]]
  $region77: #{hi_attention_forward.1} parent=0
    _
  %s13 = ssub.s32 1, %s11
  %s14 = scalar_select 0, %s13, %s11
  $region1: #{hi_attention_forward.1} parent=0
    #allocation3 [shape = 'u8[32768]{0}', space=vmem, size = 0x8000, scoped, tag = 'input window, operand 8, single buffered']
    #allocation4 [shape = 's32[2]{0}', space=sflag, size = 0x8, scoped, tag = 'scoped memory for hi_attention_forward.1']
    %15 = vsyncpa [#allocation4], 0
    loop: start=0, step=1, limit=4
    $region2: #{hi_attention_forward.1} parent=1 // loop_pre_header
      _
    $region3: #{hi_attention_forward.1} parent=1 // loop_header
      %s17 = sphi 0, %s21
      %p18 = scmp.ge.s32.totalorder %s17, 4
      %s27 = sphi 0, %s29
      %s30 = sphi 0, %s27
      %s31 = sphi 0, %s30
      %s47 = sphi 0, %s31
      %s53 = sphi 0, %s55
      %s56 = sphi 0, %s53
      %s57 = sphi 0, %s56
      %s73 = sphi 0, %s57
      %s77 = sphi 0, %s77
      %s79 = sphi 0, %s77
      %s80 = sphi 0, %s79
      %s94 = sphi 0, %s80
      %s98 = sphi 0, %s98
      %s100 = sphi 0, %s98
      %s101 = sphi 0, %s100
      %s115 = sphi 0, %s101
      %s119 = sphi 0, %s119
      %s121 = sphi 0, %s119
      %s122 = sphi 0, %s121
      %s136 = sphi 0, %s122
      %s140 = sphi 0, %s140
      %s142 = sphi 0, %s140
      %s143 = sphi 0, %s142
      %s157 = sphi 0, %s143
      %s161 = sphi 0, %s161
      %s163 = sphi 0, %s161
      %s164 = sphi 0, %s163
      %s178 = sphi 0, %s164
      %s182 = sphi 0, %s182
      %s184 = sphi 0, %s182
      %s185 = sphi 0, %s184
      %s199 = sphi 0, %s185
      %s203 = sphi 0, %s203
      %s205 = sphi 0, %s203
      %s206 = sphi 0, %s205
      %s220 = sphi 0, %s206
      %s224 = sphi 0, %s224
      %s226 = sphi 0, %s224
      %s227 = sphi 0, %s226
      %s241 = sphi 0, %s227
      %s247 = sphi 0, %s249
      %s250 = sphi 0, %s247
      %s251 = sphi 0, %s250
      %s267 = sphi 0, %s251
    $region4: #{hi_attention_forward.1} parent=1 // loop_header_branch
      %20 = sbr.rel (%p18) target = $region8
    $region5: #{hi_attention_forward.1} parent=1 // loop_body
      %s22 = ssub.s32 %s17, 1
      %s23 = ssub.s32 %s17, 2
      %s24 = sadd.s32 %s17, 1
      %s25 = ssub.s32 %s17, %s24
      %p26 = scmp.eq.s32.totalorder %s25, 0
      %s28 = sadd.s32 %s27, 1
      %s29 = scalar_select %p26, %s27, %s28
      %p32 = pneg %p26
      %p33 = scmp.eq.s32.totalorder %s17, 1
      %p34 = por %p32, %p33
      %p35 = scmp.ne.s32.totalorder %s27, %s30
      %p36 = scmp.eq.s32.totalorder %s17, 0
      %p37 = por %p35, %p36
      %p38 = scmp.ne.s32.totalorder %s27, %s30
      %p39 = scmp.eq.s32.totalorder %s22, 1
      %p40 = por %p38, %p39
      %p41 = scmp.ne.s32.totalorder %s30, %s31
      %p42 = scmp.eq.s32.totalorder %s22, 0
      %p43 = por %p41, %p42
      %p44 = scmp.ne.s32.totalorder %s30, %s31
      %p45 = scmp.eq.s32.totalorder %s23, 1
      %p46 = por %p44, %p45
      %p48 = scmp.ne.s32.totalorder %s31, %s47
      %p49 = scmp.eq.s32.totalorder %s23, 0
      %p50 = por %p48, %p49
      %s51 = ssub.s32 %s17, %s24
      %p52 = scmp.eq.s32.totalorder %s51, 0
      %s54 = sadd.s32 %s53, 1
      %s55 = scalar_select %p52, %s53, %s54
      %p58 = pneg %p52
      %p59 = scmp.eq.s32.totalorder %s17, 1
      %p60 = por %p58, %p59
      %p61 = scmp.ne.s32.totalorder %s53, %s56
      %p62 = scmp.eq.s32.totalorder %s17, 0
      %p63 = por %p61, %p62
      %p64 = scmp.ne.s32.totalorder %s53, %s56
      %p65 = scmp.eq.s32.totalorder %s22, 1
      %p66 = por %p64, %p65
      %p67 = scmp.ne.s32.totalorder %s56, %s57
      %p68 = scmp.eq.s32.totalorder %s22, 0
      %p69 = por %p67, %p68
      %p70 = scmp.ne.s32.totalorder %s56, %s57
      %p71 = scmp.eq.s32.totalorder %s23, 1
      %p72 = por %p70, %p71
      %p74 = scmp.ne.s32.totalorder %s57, %s73
      %p75 = scmp.eq.s32.totalorder %s23, 0
      %p76 = por %p74, %p75
      %s78 = sadd.s32 %s77, 1
      %p81 = scmp.eq.s32.totalorder %s17, 1
      %p82 = scmp.ne.s32.totalorder %s77, %s79
      %p83 = scmp.eq.s32.totalorder %s17, 0
      %p84 = por %p82, %p83
      %p85 = scmp.ne.s32.totalorder %s77, %s79
      %p86 = scmp.eq.s32.totalorder %s22, 1
      %p87 = por %p85, %p86
      %p88 = scmp.ne.s32.totalorder %s79, %s80
      %p89 = scmp.eq.s32.totalorder %s22, 0
      %p90 = por %p88, %p89
      %p91 = scmp.ne.s32.totalorder %s79, %s80
      %p92 = scmp.eq.s32.totalorder %s23, 1
      %p93 = por %p91, %p92
      %p95 = scmp.ne.s32.totalorder %s80, %s94
      %p96 = scmp.eq.s32.totalorder %s23, 0
      %p97 = por %p95, %p96
      %s99 = sadd.s32 %s98, 1
      %p102 = scmp.eq.s32.totalorder %s17, 1
      %p103 = scmp.ne.s32.totalorder %s98, %s100
      %p104 = scmp.eq.s32.totalorder %s17, 0
      %p105 = por %p103, %p104
      %p106 = scmp.ne.s32.totalorder %s98, %s100
      %p107 = scmp.eq.s32.totalorder %s22, 1
      %p108 = por %p106, %p107
      %p109 = scmp.ne.s32.totalorder %s100, %s101
      %p110 = scmp.eq.s32.totalorder %s22, 0
      %p111 = por %p109, %p110
      %p112 = scmp.ne.s32.totalorder %s100, %s101
      %p113 = scmp.eq.s32.totalorder %s23, 1
      %p114 = por %p112, %p113
      %p116 = scmp.ne.s32.totalorder %s101, %s115
      %p117 = scmp.eq.s32.totalorder %s23, 0
      %p118 = por %p116, %p117
      %s120 = sadd.s32 %s119, 1
      %p123 = scmp.eq.s32.totalorder %s17, 1
      %p124 = scmp.ne.s32.totalorder %s119, %s121
      %p125 = scmp.eq.s32.totalorder %s17, 0
      %p126 = por %p124, %p125
      %p127 = scmp.ne.s32.totalorder %s119, %s121
      %p128 = scmp.eq.s32.totalorder %s22, 1
      %p129 = por %p127, %p128
      %p130 = scmp.ne.s32.totalorder %s121, %s122
      %p131 = scmp.eq.s32.totalorder %s22, 0
      %p132 = por %p130, %p131
      %p133 = scmp.ne.s32.totalorder %s121, %s122
      %p134 = scmp.eq.s32.totalorder %s23, 1
      %p135 = por %p133, %p134
      %p137 = scmp.ne.s32.totalorder %s122, %s136
      %p138 = scmp.eq.s32.totalorder %s23, 0
      %p139 = por %p137, %p138
      %s141 = sadd.s32 %s140, 1
      %p144 = scmp.eq.s32.totalorder %s17, 1
      %p145 = scmp.ne.s32.totalorder %s140, %s142
      %p146 = scmp.eq.s32.totalorder %s17, 0
      %p147 = por %p145, %p146
      %p148 = scmp.ne.s32.totalorder %s140, %s142
      %p149 = scmp.eq.s32.totalorder %s22, 1
      %p150 = por %p148, %p149
      %p151 = scmp.ne.s32.totalorder %s142, %s143
      %p152 = scmp.eq.s32.totalorder %s22, 0
      %p153 = por %p151, %p152
      %p154 = scmp.ne.s32.totalorder %s142, %s143
      %p155 = scmp.eq.s32.totalorder %s23, 1
      %p156 = por %p154, %p155
      %p158 = scmp.ne.s32.totalorder %s143, %s157
      %p159 = scmp.eq.s32.totalorder %s23, 0
      %p160 = por %p158, %p159
      %s162 = sadd.s32 %s161, 1
      %p165 = scmp.eq.s32.totalorder %s17, 1
      %p166 = scmp.ne.s32.totalorder %s161, %s163
      %p167 = scmp.eq.s32.totalorder %s17, 0
      %p168 = por %p166, %p167
      %p169 = scmp.ne.s32.totalorder %s161, %s163
      %p170 = scmp.eq.s32.totalorder %s22, 1
      %p171 = por %p169, %p170
      %p172 = scmp.ne.s32.totalorder %s163, %s164
      %p173 = scmp.eq.s32.totalorder %s22, 0
      %p174 = por %p172, %p173
      %p175 = scmp.ne.s32.totalorder %s163, %s164
      %p176 = scmp.eq.s32.totalorder %s23, 1
      %p177 = por %p175, %p176
      %p179 = scmp.ne.s32.totalorder %s164, %s178
      %p180 = scmp.eq.s32.totalorder %s23, 0
      %p181 = por %p179, %p180
      %s183 = sadd.s32 %s182, 1
      %p186 = scmp.eq.s32.totalorder %s17, 1
      %p187 = scmp.ne.s32.totalorder %s182, %s184
      %p188 = scmp.eq.s32.totalorder %s17, 0
      %p189 = por %p187, %p188
      %p190 = scmp.ne.s32.totalorder %s182, %s184
      %p191 = scmp.eq.s32.totalorder %s22, 1
      %p192 = por %p190, %p191
      %p193 = scmp.ne.s32.totalorder %s184, %s185
      %p194 = scmp.eq.s32.totalorder %s22, 0
      %p195 = por %p193, %p194
      %p196 = scmp.ne.s32.totalorder %s184, %s185
      %p197 = scmp.eq.s32.totalorder %s23, 1
      %p198 = por %p196, %p197
      %p200 = scmp.ne.s32.totalorder %s185, %s199
      %p201 = scmp.eq.s32.totalorder %s23, 0
      %p202 = por %p200, %p201
      %s204 = sadd.s32 %s203, 1
      %p207 = scmp.eq.s32.totalorder %s17, 1
      %p208 = scmp.ne.s32.totalorder %s203, %s205
      %p209 = scmp.eq.s32.totalorder %s17, 0
      %p210 = por %p208, %p209
      %p211 = scmp.ne.s32.totalorder %s203, %s205
      %p212 = scmp.eq.s32.totalorder %s22, 1
      %p213 = por %p211, %p212
      %p214 = scmp.ne.s32.totalorder %s205, %s206
      %p215 = scmp.eq.s32.totalorder %s22, 0
      %p216 = por %p214, %p215
      %p217 = scmp.ne.s32.totalorder %s205, %s206
      %p218 = scmp.eq.s32.totalorder %s23, 1
      %p219 = por %p217, %p218
      %p221 = scmp.ne.s32.totalorder %s206, %s220
      %p222 = scmp.eq.s32.totalorder %s23, 0
      %p223 = por %p221, %p222
      %s225 = sadd.s32 %s224, 1
      %p228 = scmp.eq.s32.totalorder %s17, 1
      %p229 = scmp.ne.s32.totalorder %s224, %s226
      %p230 = scmp.eq.s32.totalorder %s17, 0
      %p231 = por %p229, %p230
      %p232 = scmp.ne.s32.totalorder %s224, %s226
      %p233 = scmp.eq.s32.totalorder %s22, 1
      %p234 = por %p232, %p233
      %p235 = scmp.ne.s32.totalorder %s226, %s227
      %p236 = scmp.eq.s32.totalorder %s22, 0
      %p237 = por %p235, %p236
      %p238 = scmp.ne.s32.totalorder %s226, %s227
      %p239 = scmp.eq.s32.totalorder %s23, 1
      %p240 = por %p238, %p239
      %p242 = scmp.ne.s32.totalorder %s227, %s241
      %p243 = scmp.eq.s32.totalorder %s23, 0
      %p244 = por %p242, %p243
      %s245 = ssub.s32 %s17, %s24
      %p246 = scmp.eq.s32.totalorder %s245, 0
      %s248 = sadd.s32 %s247, 1
      %s249 = scalar_select %p246, %s247, %s248
      %p252 = pneg %p246
      %p253 = scmp.eq.s32.totalorder %s17, 1
      %p254 = por %p252, %p253
      %p255 = scmp.ne.s32.totalorder %s247, %s250
      %p256 = scmp.eq.s32.totalorder %s17, 0
      %p257 = por %p255, %p256
      %p258 = scmp.ne.s32.totalorder %s247, %s250
      %p259 = scmp.eq.s32.totalorder %s22, 1
      %p260 = por %p258, %p259
      %p261 = scmp.ne.s32.totalorder %s250, %s251
      %p262 = scmp.eq.s32.totalorder %s22, 0
      %p263 = por %p261, %p262
      %p264 = scmp.ne.s32.totalorder %s250, %s251
      %p265 = scmp.eq.s32.totalorder %s23, 1
      %p266 = por %p264, %p265
      %p268 = scmp.ne.s32.totalorder %s251, %s267
      %p269 = scmp.eq.s32.totalorder %s23, 0
      %p270 = por %p268, %p269
      %p271 = scmp.le.s32.totalorder 1, %s17
      %p272 = scmp.lt.s32.totalorder %s17, 3
      %p273 = pnand %p271, %p272
      %p274 = pneg %p273
      // Predicated region
      $region9: #{hi_attention_forward.1} parent=5 // pred_check
        _
      $region10: #{hi_attention_forward.1} parent=5 // pred_check_branch
        %276 = sbr.rel (%p273) target = $region12
      $region11: #{hi_attention_forward.1} parent=5 // pred_region
        %s277 = ssub.s32 %s17, 1
        // Predicated region
        $region13: #{hi_attention_forward.1} parent=11 // pred_check
          %p278 = pneg %p90
        $region14: #{hi_attention_forward.1} parent=11 // pred_check_branch
          %280 = sbr.rel (%p278) target = $region16
        $region15: #{hi_attention_forward.1} parent=11 // pred_region
          _
        $region16: #{hi_attention_forward.1} parent=11 // pred_fallthru
          _
        // Predicated region
        $region17: #{hi_attention_forward.1} parent=11 // pred_check
          %p281 = pneg %p111
        $region18: #{hi_attention_forward.1} parent=11 // pred_check_branch
          %283 = sbr.rel (%p281) target = $region20
        $region19: #{hi_attention_forward.1} parent=11 // pred_region
          _
        $region20: #{hi_attention_forward.1} parent=11 // pred_fallthru
          _
        // Predicated region
        $region21: #{hi_attention_forward.1} parent=11 // pred_check
          %p284 = pneg %p132
        $region22: #{hi_attention_forward.1} parent=11 // pred_check_branch
          %286 = sbr.rel (%p284) target = $region24
        $region23: #{hi_attention_forward.1} parent=11 // pred_region
          _
        $region24: #{hi_attention_forward.1} parent=11 // pred_fallthru
          _
        // Predicated region
        $region25: #{hi_attention_forward.1} parent=11 // pred_check
          %p287 = pneg %p153
        $region26: #{hi_attention_forward.1} parent=11 // pred_check_branch
          %289 = sbr.rel (%p287) target = $region28
        $region27: #{hi_attention_forward.1} parent=11 // pred_region
          _
        $region28: #{hi_attention_forward.1} parent=11 // pred_fallthru
          _
        // Predicated region
        $region29: #{hi_attention_forward.1} parent=11 // pred_check
          %p290 = pneg %p174
        $region30: #{hi_attention_forward.1} parent=11 // pred_check_branch
          %292 = sbr.rel (%p290) target = $region32
        $region31: #{hi_attention_forward.1} parent=11 // pred_region
          _
        $region32: #{hi_attention_forward.1} parent=11 // pred_fallthru
          _
        // Predicated region
        $region33: #{hi_attention_forward.1} parent=11 // pred_check
          %p293 = pneg %p195
        $region34: #{hi_attention_forward.1} parent=11 // pred_check_branch
          %295 = sbr.rel (%p293) target = $region36
        $region35: #{hi_attention_forward.1} parent=11 // pred_region
          _
        $region36: #{hi_attention_forward.1} parent=11 // pred_fallthru
          _
        // Predicated region
        $region37: #{hi_attention_forward.1} parent=11 // pred_check
          %p296 = pneg %p216
        $region38: #{hi_attention_forward.1} parent=11 // pred_check_branch
          %298 = sbr.rel (%p296) target = $region40
        $region39: #{hi_attention_forward.1} parent=11 // pred_region
          %s300 = ssub.s32 1024, 1024
          %301 = vsyncadd [#allocation4], %s300
          %s302 = sshll.u32 [#allocation3], 4
          %s303 = int_to_ptr.vmem [resolvable:$true] %s302
          %308 = dma.hbm_to_vmem [thread:$0]  %s8, 1024, %s303, [#allocation4], 128, 128, 8
        $region40: #{hi_attention_forward.1} parent=11 // pred_fallthru
          _
        // Predicated region
        $region41: #{hi_attention_forward.1} parent=11 // pred_check
          %p309 = pneg %p237
        $region42: #{hi_attention_forward.1} parent=11 // pred_check_branch
          %311 = sbr.rel (%p309) target = $region44
        $region43: #{hi_attention_forward.1} parent=11 // pred_region
          _
        $region44: #{hi_attention_forward.1} parent=11 // pred_fallthru
          _
      $region12: #{hi_attention_forward.1} parent=5 // pred_fallthru
        _
      %p312 = scmp.lt.s32.totalorder %s17, 2
      // Predicated region
      $region45: #{hi_attention_forward.1} parent=5 // pred_check
        %p313 = pneg %p312
      $region46: #{hi_attention_forward.1} parent=5 // pred_check_branch
        %315 = sbr.rel (%p313) target = $region48
      $region47: #{hi_attention_forward.1} parent=5 // pred_region
        // Predicated region
        $region49: #{hi_attention_forward.1} parent=47 // pred_check
          %p316 = pneg %p37
        $region50: #{hi_attention_forward.1} parent=47 // pred_check_branch
          %318 = sbr.rel (%p316) target = $region52
        $region51: #{hi_attention_forward.1} parent=47 // pred_region
          %p319 = scmp.lt.s32.totalorder %s17, 1
          %s320 = scalar_select %p319, %s17, 1
          %s321 = smul.addr %s320, 3
          %s322 = smul.addr %s321, 8
          %s323 = scalar_lea.vmem %s0, %s322
        $region52: #{hi_attention_forward.1} parent=47 // pred_fallthru
          _
        // Predicated region
        $region53: #{hi_attention_forward.1} parent=47 // pred_check
          %p324 = pneg %p63
        $region54: #{hi_attention_forward.1} parent=47 // pred_check_branch
          %326 = sbr.rel (%p324) target = $region56
        $region55: #{hi_attention_forward.1} parent=47 // pred_region
          %p327 = scmp.lt.s32.totalorder %s17, 1
          %s328 = scalar_select %p327, %s17, 1
          %s329 = smul.addr %s328, 8
          %s330 = scalar_lea.vmem %s1, %s329
        $region56: #{hi_attention_forward.1} parent=47 // pred_fallthru
          _
      $region48: #{hi_attention_forward.1} parent=5 // pred_fallthru
        _
      %p331 = scmp.le.s32.totalorder 1, %s17
      %p332 = scmp.lt.s32.totalorder %s17, 3
      %p333 = pnand %p331, %p332
      %p334 = pneg %p333
      // Predicated region
      $region57: #{hi_attention_forward.1} parent=5 // pred_check
        _
      $region58: #{hi_attention_forward.1} parent=5 // pred_check_branch
        %336 = sbr.rel (%p333) target = $region60
      $region59: #{hi_attention_forward.1} parent=5 // pred_region
        %s337 = ssub.s32 %s17, 1
        // Predicated region
        $region61: #{hi_attention_forward.1} parent=59 // pred_check
          %p338 = pneg %p216
        $region62: #{hi_attention_forward.1} parent=59 // pred_check_branch
          %340 = sbr.rel (%p338) target = $region64
        $region63: #{hi_attention_forward.1} parent=59 // pred_region
          %341 = dma.done [#allocation4], 1024
        $region64: #{hi_attention_forward.1} parent=59 // pred_fallthru
          _
        %p342 = scmp.lt.s32.totalorder %s22, 1
        %s343 = scalar_select %p342, %s22, 1
        %s344 = smul.addr %s343, 3
        %s345 = smul.addr %s344, 8
        %s346 = scalar_lea.vmem %s0, %s345
        %p347 = pneg %p43
        %p348 = pneg %p40
        %p349 = scmp.lt.s32.totalorder %s22, 1
        %s350 = scalar_select %p349, %s22, 1
        %s351 = smul.addr %s350, 8
        %s352 = scalar_lea.vmem %s1, %s351
        %p353 = pneg %p69
        %p354 = pneg %p66
        %p355 = pneg %p90
        %p356 = pneg %p87
        %p357 = pneg %p111
        %p358 = pneg %p108
        %p359 = pneg %p132
        %p360 = pneg %p129
        %p361 = pneg %p153
        %p362 = pneg %p150
        %p363 = pneg %p174
        %p364 = pneg %p171
        %p365 = pneg %p195
        %p366 = pneg %p192
        %p367 = pneg %p216
        %p368 = pneg %p213
        %p369 = pneg %p237
        %p370 = pneg %p234
        %p371 = pneg %p263
        %p372 = pneg %p260
        %p373 = scmp.lt.s32.totalorder %s22, 1
        %s374 = scalar_select %p373, %s22, 1
        %s375 = smul.addr %s374, 3
        %s376 = smul.addr %s375, 8
        %s377 = scalar_lea.vmem %s10, %s376
        %p378 = scmp.lt.s32.totalorder %s22, 1
        %s379 = scalar_select %p378, %s22, 1
        %s380 = smul.addr %s379, 3
        %s381 = smul.addr %s380, 8
        %s382 = scalar_lea.vmem %s0, %s381
        %p383 = scmp.lt.s32.totalorder %s22, 1
        %s384 = scalar_select %p383, %s22, 1
        %s385 = smul.addr %s384, 8
        %s386 = scalar_lea.vmem %s1, %s385
        %p387 = scmp.lt.s32.totalorder %s22, 1
        %s388 = scalar_select %p387, %s22, 1
        %s389 = smul.addr %s388, 3
        %s390 = smul.addr %s389, 8
        %s391 = scalar_lea.vmem %s10, %s390
        %v392 = vld [vmem:[%s382] sm:$0xff]
        %v393 = vld [vmem:[%s382 + $0x8] sm:$0xff]
        %v394 = vld [vmem:[%s382 + $0x10] sm:$0x1]
        %v395 = vld [vmem:[%s386] sm:$0xff]
        %v396 = vld [vmem:[%s2] sm:$0xff]
        %v397 = vld [vmem:[%s3] sm:$0x1]
        %v399 = vlaneseq
        %v400 = vshrl.u32 %v399, 7
        %v401 = vsub.s32 0, %v400
        %v402 = vrot.slane %v397, %v401
        %vm404 = vcmask 64512
        %v406 = vsel %vm404, %v395, 0
        %408 = vmatprep.subr.mxu0 0.0
        %409 = vmatpush1.msra.mxu0 %v396
        %410 = vmatprep.subr.mxu0 0.0
        %411 = vmatpush1.msra.mxu0 0.0
        %412 = vmatprep.subr.mxu0 0.0
        %413 = vmatpush1.msra.mxu0 0.0
        %414 = vmatprep.subr.mxu0 0.0
        %415 = vmatpush1.msra.mxu0 0.0
        %416 = vmatprep.subr.mxu0 0.0
        %417 = vmatpush1.msra.mxu0 0.0
        %418 = vmatprep.subr.mxu0 0.0
        %419 = vmatpush1.msra.mxu0 0.0
        %420 = vmatprep.subr.mxu0 0.0
        %421 = vmatpush1.msra.mxu0 0.0
        %422 = vmatprep.subr.mxu0 0.0
        %423 = vmatpush1.msra.mxu0 0.0
        %424 = vmatprep.subr.mxu0 0.0
        %425 = vmatpush1.msra.mxu0 0.0
        %426 = vmatprep.subr.mxu0 0.0
        %427 = vmatpush1.msra.mxu0 0.0
        %428 = vmatprep.subr.mxu0 0.0
        %429 = vmatpush1.msra.mxu0 0.0
        %430 = vmatprep.subr.mxu0 0.0
        %431 = vmatpush1.msra.mxu0 0.0
        %432 = vmatprep.subr.mxu0 0.0
        %433 = vmatpush1.msra.mxu0 0.0
        %434 = vmatprep.subr.mxu0 0.0
        %435 = vmatpush1.msra.mxu0 0.0
        %436 = vmatprep.subr.mxu0 0.0
        %437 = vmatpush1.msra.mxu0 0.0
        %438 = vmatprep.subr.mxu0 0.0
        %439 = vmatpush1.msra.mxu0 0.0
        %440 = vmatprep.subr.mxu0 0.0
        %441 = vmatpush1.msra.mxu0 0.0
        %442 = vmatprep.subr.mxu0 0.0
        %443 = vmatpush1.msra.mxu0 0.0
        %444 = vmatprep.subr.mxu0 0.0
        %445 = vmatpush1.msra.mxu0 0.0
        %446 = vmatprep.subr.mxu0 0.0
        %447 = vmatpush1.msra.mxu0 0.0
        %448 = vmatprep.subr.mxu0 0.0
        %449 = vmatpush1.msra.mxu0 0.0
        %450 = vmatprep.subr.mxu0 0.0
        %451 = vmatpush1.msra.mxu0 0.0
        %452 = vmatprep.subr.mxu0 0.0
        %453 = vmatpush1.msra.mxu0 0.0
        %454 = vmatprep.subr.mxu0 0.0
        %455 = vmatpush1.msra.mxu0 0.0
        %456 = vmatprep.subr.mxu0 0.0
        %457 = vmatpush1.msra.mxu0 0.0
        %458 = vmatprep.subr.mxu0 0.0
        %459 = vmatpush1.msra.mxu0 0.0
        %460 = vmatprep.subr.mxu0 0.0
        %461 = vmatpush1.msra.mxu0 0.0
        %462 = vmatprep.subr.mxu0 0.0
        %463 = vmatpush1.msra.mxu0 0.0
        %464 = vmatprep.subr.mxu0 0.0
        %465 = vmatpush1.msra.mxu0 0.0
        %466 = vmatprep.subr.mxu0 0.0
        %467 = vmatpush1.msra.mxu0 0.0
        %468 = vmatprep.subr.mxu0 0.0
        %469 = vmatpush1.msra.mxu0 0.0
        %470 = vmatprep.subr.mxu0 0.0
        %471 = vmatpush1.msra.mxu0 0.0
        %472 = vmatprep.mubr.f32.mxu0 0.0
        %473 = vmatmul.mubr.f32.gmra.mrb[0].mxu0 %v406
        %v474 = vpop.f32.mrb[0].mxu0
        %v475 = vadd.f32 %v402, %v474
        %v476 = vpop.f32.mrb[0].mxu0
        %477 = vdwg.mxu0
        %v478 = vld [vmem:[%s4] sm:$0x1]
        %v479 = vld [vmem:[%s5] sm:$0x1]
        %v480 = vsel %vm404, %v475, 0.0
        %481 = vadd.xlane.f32.xlu0 %v480
        %v482 = vpop.xlane.xlu0 %481
        %v483 = vrcp.pop 8.0
        %v484 = vmul.f32 %v482, %v483
        %v485 = vsub.f32 %v475, %v484
        %v486 = vmul.f32 %v485, %v485
        %v487 = vsel %vm404, %v486, 0.0
        %488 = vadd.xlane.f32.xlu0 %v487
        %v489 = vpop.xlane.xlu0 %488
        %v490 = vmul.f32 %v489, %v483
        %v491 = vadd.f32 %v490, 1e-05
        %v492 = vrsqrt.pop %v491
        %v493 = vmul.f32 %v485, %v492
        %v495 = vlaneseq
        %v496 = vshrl.u32 %v495, 7
        %v497 = vsub.s32 0, %v496
        %v498 = vrot.slane %v478, %v497
        %v500 = vmul.f32 %v493, %v498
        %v502 = vlaneseq
        %v503 = vshrl.u32 %v502, 7
        %v504 = vsub.s32 0, %v503
        %v505 = vrot.slane %v479, %v504
        %v507 = vadd.f32 %v500, %v505
        %v508 = vmul.f32 %v507, 0.5
        %v509 = vmul.f32 %v507, 0.044715
        %v510 = vmul.f32 %v509, %v507
        %v511 = vmul.f32 %v510, %v507
        %v512 = vadd.f32 %v507, %v511
        %v513 = vmul.f32 %v512, 0.7978846
        %v514 = vtanh.pop %v513
        %v515 = vadd.f32 %v514, 1.0
        %v516 = vmul.f32 %v508, %v515
        %518 = vrot.lane.b32.xlu0 %v475, 120
        %v519 = vpop.permute.xlu0 %518
        %v521 = vsel %vm404, %v519, 0.0
        %522 = vadd.xlane.f32.xlu0 %v521
        %v523 = vpop.xlane.xlu0 %522
        %v524 = vmul.f32 %v523, %v483
        %v525 = vsub.f32 %v475, %v524
        %v526 = vmul.f32 %v525, %v525
        %528 = vrot.lane.b32.xlu0 %v526, 120
        %v529 = vpop.permute.xlu0 %528
        %v531 = vsel %vm404, %v529, 0.0
        %532 = vadd.xlane.f32.xlu0 %v531
        %v533 = vpop.xlane.xlu0 %532
        %v534 = vmul.f32 %v533, %v483
        %v535 = vadd.f32 %v534, 1e-05
        %v536 = vrsqrt.pop %v535
        %v537 = vmul.f32 %v525, %v536
        %538 = vrot.lane.b32.xlu0 %v498, 8
        %v539 = vpop.permute.xlu0 %538
        %v541 = vmul.f32 %v537, %v539
        %542 = vrot.lane.b32.xlu0 %v505, 8
        %v543 = vpop.permute.xlu0 %542
        %v545 = vadd.f32 %v541, %v543
        %v546 = vmul.f32 %v545, 0.5
        %v547 = vmul.f32 %v545, 0.044715
        %v548 = vmul.f32 %v547, %v545
        %v549 = vmul.f32 %v548, %v545
        %v550 = vadd.f32 %v545, %v549
        %v551 = vmul.f32 %v550, 0.7978846
        %v552 = vtanh.pop %v551
        %v553 = vadd.f32 %v552, 1.0
        %v554 = vmul.f32 %v546, %v553
        %555 = vrot.lane.b32.xlu0 %v475, 112
        %v556 = vpop.permute.xlu0 %555
        %v558 = vsel %vm404, %v556, 0.0
        %559 = vadd.xlane.f32.xlu0 %v558
        %v560 = vpop.xlane.xlu0 %559
        %v561 = vmul.f32 %v560, %v483
        %v562 = vsub.f32 %v475, %v561
        %v563 = vmul.f32 %v562, %v562
        %565 = vrot.lane.b32.xlu0 %v563, 112
        %v566 = vpop.permute.xlu0 %565
        %v568 = vsel %vm404, %v566, 0.0
        %569 = vadd.xlane.f32.xlu0 %v568
        %v570 = vpop.xlane.xlu0 %569
        %v571 = vmul.f32 %v570, %v483
        %v572 = vadd.f32 %v571, 1e-05
        %v573 = vrsqrt.pop %v572
        %v574 = vmul.f32 %v562, %v573
        %575 = vrot.lane.b32.xlu0 %v498, 16
        %v576 = vpop.permute.xlu0 %575
        %v578 = vmul.f32 %v574, %v576
        %579 = vrot.lane.b32.xlu0 %v505, 16
        %v580 = vpop.permute.xlu0 %579
        %v582 = vadd.f32 %v578, %v580
        %v583 = vmul.f32 %v582, 0.5
        %v584 = vmul.f32 %v582, 0.044715
        %v585 = vmul.f32 %v584, %v582
        %v586 = vmul.f32 %v585, %v582
        %v587 = vadd.f32 %v582, %v586
        %v588 = vmul.f32 %v587, 0.7978846
        %v589 = vtanh.pop %v588
        %v590 = vadd.f32 %v589, 1.0
        %v591 = vmul.f32 %v583, %v590
        %592 = vrot.lane.b32.xlu0 %v475, 104
        %v593 = vpop.permute.xlu0 %592
        %v595 = vsel %vm404, %v593, 0.0
        %596 = vadd.xlane.f32.xlu0 %v595
        %v597 = vpop.xlane.xlu0 %596
        %v598 = vmul.f32 %v597, %v483
        %v599 = vsub.f32 %v475, %v598
        %v600 = vmul.f32 %v599, %v599
        %602 = vrot.lane.b32.xlu0 %v600, 104
        %v603 = vpop.permute.xlu0 %602
        %v605 = vsel %vm404, %v603, 0.0
        %606 = vadd.xlane.f32.xlu0 %v605
        %v607 = vpop.xlane.xlu0 %606
        %v608 = vmul.f32 %v607, %v483
        %v609 = vadd.f32 %v608, 1e-05
        %v610 = vrsqrt.pop %v609
        %v611 = vmul.f32 %v599, %v610
        %612 = vrot.lane.b32.xlu0 %v498, 24
        %v613 = vpop.permute.xlu0 %612
        %v615 = vmul.f32 %v611, %v613
        %616 = vrot.lane.b32.xlu0 %v505, 24
        %v617 = vpop.permute.xlu0 %616
        %v619 = vadd.f32 %v615, %v617
        %v620 = vmul.f32 %v619, 0.5
        %v621 = vmul.f32 %v619, 0.044715
        %v622 = vmul.f32 %v621, %v619
        %v623 = vmul.f32 %v622, %v619
        %v624 = vadd.f32 %v619, %v623
        %v625 = vmul.f32 %v624, 0.7978846
        %v626 = vtanh.pop %v625
        %v627 = vadd.f32 %v626, 1.0
        %v628 = vmul.f32 %v620, %v627
        %629 = vrot.lane.b32.xlu0 %v475, 96
        %v630 = vpop.permute.xlu0 %629
        %v632 = vsel %vm404, %v630, 0.0
        %633 = vadd.xlane.f32.xlu0 %v632
        %v634 = vpop.xlane.xlu0 %633
        %v635 = vmul.f32 %v634, %v483
        %v636 = vsub.f32 %v475, %v635
        %v637 = vmul.f32 %v636, %v636
        %639 = vrot.lane.b32.xlu0 %v637, 96
        %v640 = vpop.permute.xlu0 %639
        %v642 = vsel %vm404, %v640, 0.0
        %643 = vadd.xlane.f32.xlu0 %v642
        %v644 = vpop.xlane.xlu0 %643
        %v645 = vmul.f32 %v644, %v483
        %v646 = vadd.f32 %v645, 1e-05
        %v647 = vrsqrt.pop %v646
        %v648 = vmul.f32 %v636, %v647
        %649 = vrot.lane.b32.xlu0 %v498, 32
        %v650 = vpop.permute.xlu0 %649
        %v652 = vmul.f32 %v648, %v650
        %653 = vrot.lane.b32.xlu0 %v505, 32
        %v654 = vpop.permute.xlu0 %653
        %v656 = vadd.f32 %v652, %v654
        %v657 = vmul.f32 %v656, 0.5
        %v658 = vmul.f32 %v656, 0.044715
        %v659 = vmul.f32 %v658, %v656
        %v660 = vmul.f32 %v659, %v656
        %v661 = vadd.f32 %v656, %v660
        %v662 = vmul.f32 %v661, 0.7978846
        %v663 = vtanh.pop %v662
        %v664 = vadd.f32 %v663, 1.0
        %v665 = vmul.f32 %v657, %v664
        %666 = vrot.lane.b32.xlu0 %v475, 88
        %v667 = vpop.permute.xlu0 %666
        %v669 = vsel %vm404, %v667, 0.0
        %670 = vadd.xlane.f32.xlu0 %v669
        %v671 = vpop.xlane.xlu0 %670
        %v672 = vmul.f32 %v671, %v483
        %v673 = vsub.f32 %v475, %v672
        %v674 = vmul.f32 %v673, %v673
        %676 = vrot.lane.b32.xlu0 %v674, 88
        %v677 = vpop.permute.xlu0 %676
        %v679 = vsel %vm404, %v677, 0.0
        %680 = vadd.xlane.f32.xlu0 %v679
        %v681 = vpop.xlane.xlu0 %680
        %v682 = vmul.f32 %v681, %v483
        %v683 = vadd.f32 %v682, 1e-05
        %v684 = vrsqrt.pop %v683
        %v685 = vmul.f32 %v673, %v684
        %686 = vrot.lane.b32.xlu0 %v498, 40
        %v687 = vpop.permute.xlu0 %686
        %v689 = vmul.f32 %v685, %v687
        %690 = vrot.lane.b32.xlu0 %v505, 40
        %v691 = vpop.permute.xlu0 %690
        %v693 = vadd.f32 %v689, %v691
        %v694 = vmul.f32 %v693, 0.5
        %v695 = vmul.f32 %v693, 0.044715
        %v696 = vmul.f32 %v695, %v693
        %v697 = vmul.f32 %v696, %v693
        %v698 = vadd.f32 %v693, %v697
        %v699 = vmul.f32 %v698, 0.7978846
        %v700 = vtanh.pop %v699
        %v701 = vadd.f32 %v700, 1.0
        %v702 = vmul.f32 %v694, %v701
        %703 = vrot.lane.b32.xlu0 %v475, 80
        %v704 = vpop.permute.xlu0 %703
        %v706 = vsel %vm404, %v704, 0.0
        %707 = vadd.xlane.f32.xlu0 %v706
        %v708 = vpop.xlane.xlu0 %707
        %v709 = vmul.f32 %v708, %v483
        %v710 = vsub.f32 %v475, %v709
        %v711 = vmul.f32 %v710, %v710
        %713 = vrot.lane.b32.xlu0 %v711, 80
        %v714 = vpop.permute.xlu0 %713
        %v716 = vsel %vm404, %v714, 0.0
        %717 = vadd.xlane.f32.xlu0 %v716
        %v718 = vpop.xlane.xlu0 %717
        %v719 = vmul.f32 %v718, %v483
        %v720 = vadd.f32 %v719, 1e-05
        %v721 = vrsqrt.pop %v720
        %v722 = vmul.f32 %v710, %v721
        %723 = vrot.lane.b32.xlu0 %v498, 48
        %v724 = vpop.permute.xlu0 %723
        %v726 = vmul.f32 %v722, %v724
        %727 = vrot.lane.b32.xlu0 %v505, 48
        %v728 = vpop.permute.xlu0 %727
        %v730 = vadd.f32 %v726, %v728
        %v731 = vmul.f32 %v730, 0.5
        %v732 = vmul.f32 %v730, 0.044715
        %v733 = vmul.f32 %v732, %v730
        %v734 = vmul.f32 %v733, %v730
        %v735 = vadd.f32 %v730, %v734
        %v736 = vmul.f32 %v735, 0.7978846
        %v737 = vtanh.pop %v736
        %v738 = vadd.f32 %v737, 1.0
        %v739 = vmul.f32 %v731, %v738
        %740 = vrot.lane.b32.xlu0 %v475, 72
        %v741 = vpop.permute.xlu0 %740
        %v743 = vsel %vm404, %v741, 0.0
        %744 = vadd.xlane.f32.xlu0 %v743
        %v745 = vpop.xlane.xlu0 %744
        %v746 = vmul.f32 %v745, %v483
        %v747 = vsub.f32 %v475, %v746
        %v748 = vmul.f32 %v747, %v747
        %750 = vrot.lane.b32.xlu0 %v748, 72
        %v751 = vpop.permute.xlu0 %750
        %v753 = vsel %vm404, %v751, 0.0
        %754 = vadd.xlane.f32.xlu0 %v753
        %v755 = vpop.xlane.xlu0 %754
        %v756 = vmul.f32 %v755, %v483
        %v757 = vadd.f32 %v756, 1e-05
        %v758 = vrsqrt.pop %v757
        %v759 = vmul.f32 %v747, %v758
        %760 = vrot.lane.b32.xlu0 %v498, 56
        %v761 = vpop.permute.xlu0 %760
        %v763 = vmul.f32 %v759, %v761
        %764 = vrot.lane.b32.xlu0 %v505, 56
        %v765 = vpop.permute.xlu0 %764
        %v767 = vadd.f32 %v763, %v765
        %v768 = vmul.f32 %v767, 0.5
        %v769 = vmul.f32 %v767, 0.044715
        %v770 = vmul.f32 %v769, %v767
        %v771 = vmul.f32 %v770, %v767
        %v772 = vadd.f32 %v767, %v771
        %v773 = vmul.f32 %v772, 0.7978846
        %v774 = vtanh.pop %v773
        %v775 = vadd.f32 %v774, 1.0
        %v776 = vmul.f32 %v768, %v775
        %v777 = vsel %vm404, %v516, %v554
        %vm778 = vcmask 130048
        %v779 = vsel %vm778, %v777, %v591
        %vm780 = vcmask 195584
        %v781 = vsel %vm780, %v779, %v628
        %vm782 = vcmask 261120
        %v783 = vsel %vm782, %v781, %v665
        %vm784 = vcmask 326656
        %v785 = vsel %vm784, %v783, %v702
        %vm786 = vcmask 392192
        %v787 = vsel %vm786, %v785, %v739
        %vm788 = vcmask 457728
        %v789 = vsel %vm788, %v787, %v776
        %v790 = vld [vmem:[%s6] sm:$0xff]
        %v791 = vadd.f32 %v789, %v790
        %vm792 = vcmask 523264
        %793 = vst.msk [vmem:[#allocation2] sm:$0xff] %vm792, %v791
        %794 = vst.msk [vmem:[#allocation2 + $0x8] sm:$0xff] %vm792, %v392
        %795 = vst.msk [vmem:[#allocation2 + $0x10] sm:$0xff] %vm792, %v393
        %vm796 = vcmask 516096
        %797 = vst.msk [vmem:[#allocation2 + $0x18] sm:$0x1] %vm796, %v394
        %v798 = vld [vmem:[#allocation2] sm:$0xff]
        %v799 = vld [vmem:[#allocation2 + $0x8] sm:$0xff]
        %v800 = vld [vmem:[#allocation2 + $0x10] sm:$0xff]
        %v801 = vld [vmem:[#allocation2 + $0x18] sm:$0x1]
        %v802 = vld [vmem:[%s7] sm:$0xff]
        %v803 = vld [vmem:[%s7 + $0x8] sm:$0xff]
        %v804 = vld [vmem:[%s7 + $0x10] sm:$0xff]
        %v805 = vld [vmem:[%s7 + $0x18] sm:$0xff]
        %v806 = vld [vmem:[%s7 + $0x20] sm:$0xff]
        %v807 = vld [vmem:[%s7 + $0x28] sm:$0xff]
        %v808 = vld [vmem:[%s7 + $0x30] sm:$0xff]
        %v809 = vld [vmem:[%s7 + $0x38] sm:$0xff]
        %v810 = vld [vmem:[%s7 + $0x40] sm:$0xff]
        %v811 = vld [vmem:[%s7 + $0x48] sm:$0xff]
        %v812 = vld [vmem:[%s7 + $0x50] sm:$0xff]
        %v813 = vld [vmem:[%s7 + $0x58] sm:$0xff]
        %v814 = vld [vmem:[%s7 + $0x60] sm:$0xff]
        %v815 = vld [vmem:[%s7 + $0x68] sm:$0xff]
        %v816 = vld [vmem:[%s7 + $0x70] sm:$0xff]
        %v817 = vld [vmem:[%s7 + $0x78] sm:$0xff]
        %v819 = vsel %vm792, %v798, 0
        %v822 = vsel %vm792, %v799, 0
        %v825 = vsel %vm792, %v800, 0
        %v828 = vsel %vm792, %v801, 0
        %830 = vmatprep.subr.mxu0 %v803
        %831 = vmatpush1.msra.mxu0 %v802
        %832 = vmatprep.subr.mxu0 %v805
        %833 = vmatpush1.msra.mxu0 %v804
        %834 = vmatprep.subr.mxu0 %v807
        %835 = vmatpush1.msra.mxu0 %v806
        %836 = vmatprep.subr.mxu0 %v809
        %837 = vmatpush1.msra.mxu0 %v808
        %838 = vmatprep.subr.mxu0 %v811
        %839 = vmatpush1.msra.mxu0 %v810
        %840 = vmatprep.subr.mxu0 %v813
        %841 = vmatpush1.msra.mxu0 %v812
        %842 = vmatprep.subr.mxu0 %v815
        %843 = vmatpush1.msra.mxu0 %v814
        %844 = vmatprep.subr.mxu0 %v817
        %845 = vmatpush1.msra.mxu0 %v816
        %846 = vmatprep.subr.mxu0 0.0
        %847 = vmatpush1.msra.mxu0 0.0
        %848 = vmatprep.subr.mxu0 0.0
        %849 = vmatpush1.msra.mxu0 0.0
        %850 = vmatprep.subr.mxu0 0.0
        %851 = vmatpush1.msra.mxu0 0.0
        %852 = vmatprep.subr.mxu0 0.0
        %853 = vmatpush1.msra.mxu0 0.0
        %854 = vmatprep.subr.mxu0 0.0
        %855 = vmatpush1.msra.mxu0 0.0
        %856 = vmatprep.subr.mxu0 0.0
        %857 = vmatpush1.msra.mxu0 0.0
        %858 = vmatprep.subr.mxu0 0.0
        %859 = vmatpush1.msra.mxu0 0.0
        %860 = vmatprep.subr.mxu0 0.0
        %861 = vmatpush1.msra.mxu0 0.0
        %862 = vmatprep.subr.mxu0 0.0
        %863 = vmatpush1.msra.mxu0 0.0
        %864 = vmatprep.subr.mxu0 0.0
        %865 = vmatpush1.msra.mxu0 0.0
        %866 = vmatprep.subr.mxu0 0.0
        %867 = vmatpush1.msra.mxu0 0.0
        %868 = vmatprep.subr.mxu0 0.0
        %869 = vmatpush1.msra.mxu0 0.0
        %870 = vmatprep.subr.mxu0 0.0
        %871 = vmatpush1.msra.mxu0 0.0
        %872 = vmatprep.subr.mxu0 0.0
        %873 = vmatpush1.msra.mxu0 0.0
        %874 = vmatprep.subr.mxu0 0.0
        %875 = vmatpush1.msra.mxu0 0.0
        %876 = vmatprep.subr.mxu0 0.0
        %877 = vmatpush1.msra.mxu0 0.0
        %878 = vmatprep.subr.mxu0 0.0
        %879 = vmatpush1.msra.mxu0 0.0
        %880 = vmatprep.subr.mxu0 0.0
        %881 = vmatpush1.msra.mxu0 0.0
        %882 = vmatprep.subr.mxu0 0.0
        %883 = vmatpush1.msra.mxu0 0.0
        %884 = vmatprep.subr.mxu0 0.0
        %885 = vmatpush1.msra.mxu0 0.0
        %886 = vmatprep.subr.mxu0 0.0
        %887 = vmatpush1.msra.mxu0 0.0
        %888 = vmatprep.subr.mxu0 0.0
        %889 = vmatpush1.msra.mxu0 0.0
        %890 = vmatprep.subr.mxu0 0.0
        %891 = vmatpush1.msra.mxu0 0.0
        %892 = vmatprep.subr.mxu0 0.0
        %893 = vmatpush1.msra.mxu0 0.0
        %894 = vmatprep.mubr.f32.mxu0 0.0
        %895 = vmatmul.mubr.f32.gmra.mrb[0].mxu0 %v819
        %v896 = vpop.f32.mrb[0].mxu0
        %v897 = vadd.f32 0.0, %v896
        %v898 = vpop.f32.mrb[0].mxu0
        %v899 = vadd.f32 0.0, %v898
        %900 = vmatprep.mubr.f32.mxu0 0.0
        %901 = vmatmul.mubr.f32.gmra.mrb[0].mxu0 %v822
        %v902 = vpop.f32.mrb[0].mxu0
        %v903 = vadd.f32 0.0, %v902
        %v904 = vpop.f32.mrb[0].mxu0
        %v905 = vadd.f32 0.0, %v904
        %906 = vmatprep.mubr.f32.mxu0 0.0
        %907 = vmatmul.mubr.f32.gmra.mrb[0].mxu0 %v825
        %v908 = vpop.f32.mrb[0].mxu0
        %v909 = vadd.f32 0.0, %v908
        %v910 = vpop.f32.mrb[0].mxu0
        %v911 = vadd.f32 0.0, %v910
        %912 = vmatprep.mubr.f32.mxu0 0.0
        %913 = vmatmul.mubr.f32.gmra.mrb[0].mxu0 %v828
        %v914 = vpop.f32.mrb[0].mxu0
        %v915 = vadd.f32 0.0, %v914
        %v916 = vpop.f32.mrb[0].mxu0
        %v917 = vadd.f32 0.0, %v916
        %918 = vdwg.mxu0
        %923 = vrot.lane.b32.xlu0 %v897, 64
        %v924 = vpop.permute.xlu0 %923
        %925 = vrot.lane.b32.xlu0 %v903, 64
        %v926 = vpop.permute.xlu0 %925
        %927 = vrot.lane.b32.xlu0 %v909, 64
        %v928 = vpop.permute.xlu0 %927
        %929 = vrot.lane.b32.xlu0 %v915, 64
        %v930 = vpop.permute.xlu0 %929
        %v931 = vsel %vm404, %v897, 0
        %v933 = vsel %vm404, %v903, 0
        %v935 = vsel %vm404, %v909, 0
        %v937 = vsel %vm404, %v915, 0
        %v939 = vsel %vm404, %v924, 0
        %v941 = vsel %vm404, %v926, 0
        %v943 = vsel %vm404, %v928, 0
        %v945 = vsel %vm404, %v930, 0
        %947 = vmatprep.subr.mxu0 0.0
        %948 = vmatpush1.xpose.msra.mxu0 %v939
        %949 = vmatprep.subr.mxu0 0.0
        %950 = vmatpush1.xpose.msra.mxu0 %v941
        %951 = vmatprep.subr.mxu0 0.0
        %952 = vmatpush1.xpose.msra.mxu0 %v943
        %953 = vmatprep.subr.mxu0 0.0
        %954 = vmatpush1.xpose.msra.mxu0 %v945
        %955 = vmatprep.subr.mxu0 0.0
        %956 = vmatpush1.xpose.msra.mxu0 0.0
        %957 = vmatprep.subr.mxu0 0.0
        %958 = vmatpush1.xpose.msra.mxu0 0.0
        %959 = vmatprep.subr.mxu0 0.0
        %960 = vmatpush1.xpose.msra.mxu0 0.0
        %961 = vmatprep.subr.mxu0 0.0
        %962 = vmatpush1.xpose.msra.mxu0 0.0
        %963 = vmatprep.subr.mxu0 0.0
        %964 = vmatpush1.xpose.msra.mxu0 0.0
        %965 = vmatprep.subr.mxu0 0.0
        %966 = vmatpush1.xpose.msra.mxu0 0.0
        %967 = vmatprep.subr.mxu0 0.0
        %968 = vmatpush1.xpose.msra.mxu0 0.0
        %969 = vmatprep.subr.mxu0 0.0
        %970 = vmatpush1.xpose.msra.mxu0 0.0
        %971 = vmatprep.subr.mxu0 0.0
        %972 = vmatpush1.xpose.msra.mxu0 0.0
        %973 = vmatprep.subr.mxu0 0.0
        %974 = vmatpush1.xpose.msra.mxu0 0.0
        %975 = vmatprep.subr.mxu0 0.0
        %976 = vmatpush1.xpose.msra.mxu0 0.0
        %977 = vmatprep.subr.mxu0 0.0
        %978 = vmatpush1.xpose.msra.mxu0 0.0
        %979 = vmatprep.subr.mxu0 0.0
        %980 = vmatpush1.xpose.msra.mxu0 0.0
        %981 = vmatprep.subr.mxu0 0.0
        %982 = vmatpush1.xpose.msra.mxu0 0.0
        %983 = vmatprep.subr.mxu0 0.0
        %984 = vmatpush1.xpose.msra.mxu0 0.0
        %985 = vmatprep.subr.mxu0 0.0
        %986 = vmatpush1.xpose.msra.mxu0 0.0
        %987 = vmatprep.subr.mxu0 0.0
        %988 = vmatpush1.xpose.msra.mxu0 0.0
        %989 = vmatprep.subr.mxu0 0.0
        %990 = vmatpush1.xpose.msra.mxu0 0.0
        %991 = vmatprep.subr.mxu0 0.0
        %992 = vmatpush1.xpose.msra.mxu0 0.0
        %993 = vmatprep.subr.mxu0 0.0
        %994 = vmatpush1.xpose.msra.mxu0 0.0
        %995 = vmatprep.subr.mxu0 0.0
        %996 = vmatpush1.xpose.msra.mxu0 0.0
        %997 = vmatprep.subr.mxu0 0.0
        %998 = vmatpush1.xpose.msra.mxu0 0.0
        %999 = vmatprep.subr.mxu0 0.0
        %1000 = vmatpush1.xpose.msra.mxu0 0.0
        %1001 = vmatprep.subr.mxu0 0.0
        %1002 = vmatpush1.xpose.msra.mxu0 0.0
        %1003 = vmatprep.subr.mxu0 0.0
        %1004 = vmatpush1.xpose.msra.mxu0 0.0
        %1005 = vmatprep.subr.mxu0 0.0
        %1006 = vmatpush1.xpose.msra.mxu0 0.0
        %1007 = vmatprep.subr.mxu0 0.0
        %1008 = vmatpush1.xpose.msra.mxu0 0.0
        %1009 = vmatprep.subr.mxu0 0.0
        %1010 = vmatpush1.xpose.msra.mxu0 0.0
        %1011 = vmatprep.mubr.f32.mxu0 0.0
        %1012 = vmatmul.mubr.f32.gmra.mrb[0].mxu0 %v931
        %v1013 = vpop.f32.mrb[0].mxu0
        %v1014 = vadd.f32 0.0, %v1013
        %v1015 = vpop.f32.mrb[0].mxu0
        %1016 = vmatprep.mubr.f32.mxu0 0.0
        %1017 = vmatmul.mubr.f32.gmra.mrb[0].mxu0 %v933
        %v1018 = vpop.f32.mrb[0].mxu0
        %v1019 = vadd.f32 0.0, %v1018
        %v1020 = vpop.f32.mrb[0].mxu0
        %1021 = vmatprep.mubr.f32.mxu0 0.0
        %1022 = vmatmul.mubr.f32.gmra.mrb[0].mxu0 %v935
        %v1023 = vpop.f32.mrb[0].mxu0
        %v1024 = vadd.f32 0.0, %v1023
        %v1025 = vpop.f32.mrb[0].mxu0
        %1026 = vmatprep.mubr.f32.mxu0 0.0
        %1027 = vmatmul.mubr.f32.gmra.mrb[0].mxu0 %v937
        %v1028 = vpop.f32.mrb[0].mxu0
        %v1029 = vadd.f32 0.0, %v1028
        %v1030 = vpop.f32.mrb[0].mxu0
        %1031 = vdwg.mxu0
        %v1032 = vmul.f32 %v1014, 0.35355338
        %v1033 = vmul.f32 %v1019, 0.35355338
        %v1034 = vmul.f32 %v1024, 0.35355338
        %v1035 = vmul.f32 %v1029, 0.35355338
        %vm1036 = vcmask 203776
        %v1037 = vsel %vm1036, %v1032, -inf
        %1038 = vmax.xlane.f32.xlu0 %v1037
        %v1039 = vpop.xlane.xlu0 %1038
        %v1040 = vsel %vm1036, %v1033, -inf
        %1041 = vmax.xlane.f32.xlu0 %v1040
        %v1042 = vpop.xlane.xlu0 %1041
        %v1043 = vsel %vm1036, %v1034, -inf
        %1044 = vmax.xlane.f32.xlu0 %v1043
        %v1045 = vpop.xlane.xlu0 %1044
        %vm1046 = vcmask 196608
        %v1047 = vsel %vm1046, %v1035, -inf
        %1048 = vmax.xlane.f32.xlu0 %v1047
        %v1049 = vpop.xlane.xlu0 %1048
        %v1050 = vsub.f32 %v1032, %v1039
        %v1051 = vsub.f32 %v1033, %v1042
        %v1052 = vsub.f32 %v1034, %v1045
        %v1053 = vsub.f32 %v1035, %v1049
        %v1054 = vmul.f32 %v1050, 1.442695
        %v1055 = vpow.pop %v1054
        %v1056 = vmul.f32 %v1051, 1.442695
        %v1057 = vpow.pop %v1056
        %v1058 = vmul.f32 %v1052, 1.442695
        %v1059 = vpow.pop %v1058
        %v1060 = vmul.f32 %v1053, 1.442695
        %v1061 = vpow.pop %v1060
        %v1062 = vsel %vm1036, %v1055, 0.0
        %1063 = vadd.xlane.f32.xlu0 %v1062
        %v1064 = vpop.xlane.xlu0 %1063
        %v1065 = vsel %vm1036, %v1057, 0.0
        %1066 = vadd.xlane.f32.xlu0 %v1065
        %v1067 = vpop.xlane.xlu0 %1066
        %v1068 = vsel %vm1036, %v1059, 0.0
        %1069 = vadd.xlane.f32.xlu0 %v1068
        %v1070 = vpop.xlane.xlu0 %1069
        %v1071 = vsel %vm1046, %v1061, 0.0
        %1072 = vadd.xlane.f32.xlu0 %v1071
        %v1073 = vpop.xlane.xlu0 %1072
        %v1074 = vrcp.pop %v1064
        %v1075 = vrcp.pop %v1067
        %v1076 = vrcp.pop %v1070
        %v1077 = vrcp.pop %v1073
        %v1078 = vmul.f32 %v1055, %v1074
        %v1079 = vmul.f32 %v1057, %v1075
        %v1080 = vmul.f32 %v1059, %v1076
        %v1081 = vmul.f32 %v1061, %v1077
        %v1083 = vsel %vm1036, %v1078, 0
        %v1086 = vsel %vm1036, %v1079, 0
        %v1089 = vsel %vm1036, %v1080, 0
        %v1092 = vsel %vm1036, %v1081, 0
        %vm1094 = vcmask 1040384
        %v1096 = vsel %vm1094, %v917, 0
        %1098 = vmatprep.subr.mxu0 0.0
        %1099 = vmatpush1.msra.mxu0 %v899
        %1100 = vmatprep.subr.mxu0 0.0
        %1101 = vmatpush1.msra.mxu0 %v905
        %1102 = vmatprep.subr.mxu0 0.0
        %1103 = vmatpush1.msra.mxu0 %v911
        %1104 = vmatprep.subr.mxu0 0.0
        %1105 = vmatpush1.msra.mxu0 %v1096
        %1106 = vmatprep.subr.mxu0 0.0
        %1107 = vmatpush1.msra.mxu0 0.0
        %1108 = vmatprep.subr.mxu0 0.0
        %1109 = vmatpush1.msra.mxu0 0.0
        %1110 = vmatprep.subr.mxu0 0.0
        %1111 = vmatpush1.msra.mxu0 0.0
        %1112 = vmatprep.subr.mxu0 0.0
        %1113 = vmatpush1.msra.mxu0 0.0
        %1114 = vmatprep.subr.mxu0 0.0
        %1115 = vmatpush1.msra.mxu0 0.0
        %1116 = vmatprep.subr.mxu0 0.0
        %1117 = vmatpush1.msra.mxu0 0.0
        %1118 = vmatprep.subr.mxu0 0.0
        %1119 = vmatpush1.msra.mxu0 0.0
        %1120 = vmatprep.subr.mxu0 0.0
        %1121 = vmatpush1.msra.mxu0 0.0
        %1122 = vmatprep.subr.mxu0 0.0
        %1123 = vmatpush1.msra.mxu0 0.0
        %1124 = vmatprep.subr.mxu0 0.0
        %1125 = vmatpush1.msra.mxu0 0.0
        %1126 = vmatprep.subr.mxu0 0.0
        %1127 = vmatpush1.msra.mxu0 0.0
        %1128 = vmatprep.subr.mxu0 0.0
        %1129 = vmatpush1.msra.mxu0 0.0
        %1130 = vmatprep.subr.mxu0 0.0
        %1131 = vmatpush1.msra.mxu0 0.0
        %1132 = vmatprep.subr.mxu0 0.0
        %1133 = vmatpush1.msra.mxu0 0.0
        %1134 = vmatprep.subr.mxu0 0.0
        %1135 = vmatpush1.msra.mxu0 0.0
        %1136 = vmatprep.subr.mxu0 0.0
        %1137 = vmatpush1.msra.mxu0 0.0
        %1138 = vmatprep.subr.mxu0 0.0
        %1139 = vmatpush1.msra.mxu0 0.0
        %1140 = vmatprep.subr.mxu0 0.0
        %1141 = vmatpush1.msra.mxu0 0.0
        %1142 = vmatprep.subr.mxu0 0.0
        %1143 = vmatpush1.msra.mxu0 0.0
        %1144 = vmatprep.subr.mxu0 0.0
        %1145 = vmatpush1.msra.mxu0 0.0
        %1146 = vmatprep.subr.mxu0 0.0
        %1147 = vmatpush1.msra.mxu0 0.0
        %1148 = vmatprep.subr.mxu0 0.0
        %1149 = vmatpush1.msra.mxu0 0.0
        %1150 = vmatprep.subr.mxu0 0.0
        %1151 = vmatpush1.msra.mxu0 0.0
        %1152 = vmatprep.subr.mxu0 0.0
        %1153 = vmatpush1.msra.mxu0 0.0
        %1154 = vmatprep.subr.mxu0 0.0
        %1155 = vmatpush1.msra.mxu0 0.0
        %1156 = vmatprep.subr.mxu0 0.0
        %1157 = vmatpush1.msra.mxu0 0.0
        %1158 = vmatprep.subr.mxu0 0.0
        %1159 = vmatpush1.msra.mxu0 0.0
        %1160 = vmatprep.subr.mxu0 0.0
        %1161 = vmatpush1.msra.mxu0 0.0
        %1162 = vmatprep.mubr.f32.mxu0 0.0
        %1163 = vmatmul.mubr.f32.gmra.mrb[0].mxu0 %v1083
        %v1164 = vpop.f32.mrb[0].mxu0
        %v1165 = vadd.f32 0.0, %v1164
        %v1166 = vpop.f32.mrb[0].mxu0
        %1167 = vmatprep.mubr.f32.mxu0 0.0
        %1168 = vmatmul.mubr.f32.gmra.mrb[0].mxu0 %v1086
        %v1169 = vpop.f32.mrb[0].mxu0
        %v1170 = vadd.f32 0.0, %v1169
        %v1171 = vpop.f32.mrb[0].mxu0
        %1172 = vmatprep.mubr.f32.mxu0 0.0
        %1173 = vmatmul.mubr.f32.gmra.mrb[0].mxu0 %v1089
        %v1174 = vpop.f32.mrb[0].mxu0
        %v1175 = vadd.f32 0.0, %v1174
        %v1176 = vpop.f32.mrb[0].mxu0
        %1177 = vmatprep.mubr.f32.mxu0 0.0
        %1178 = vmatmul.mubr.f32.gmra.mrb[0].mxu0 %v1092
        %v1179 = vpop.f32.mrb[0].mxu0
        %v1180 = vadd.f32 0.0, %v1179
        %v1181 = vpop.f32.mrb[0].mxu0
        %1182 = vdwg.mxu0
        %v1183 = vld [vmem:[#allocation3] sm:$0xff]
        %1184 = vrot.lane.b32.xlu0 %v897, 120
        %v1185 = vpop.permute.xlu0 %1184
        %1186 = vrot.lane.b32.xlu0 %v903, 120
        %v1187 = vpop.permute.xlu0 %1186
        %1188 = vrot.lane.b32.xlu0 %v909, 120
        %v1189 = vpop.permute.xlu0 %1188
        %1190 = vrot.lane.b32.xlu0 %v915, 120
        %v1191 = vpop.permute.xlu0 %1190
        %1192 = vrot.lane.b32.xlu0 %v897, 56
        %v1193 = vpop.permute.xlu0 %1192
        %1194 = vrot.lane.b32.xlu0 %v903, 56
        %v1195 = vpop.permute.xlu0 %1194
        %1196 = vrot.lane.b32.xlu0 %v909, 56
        %v1197 = vpop.permute.xlu0 %1196
        %1198 = vrot.lane.b32.xlu0 %v915, 56
        %v1199 = vpop.permute.xlu0 %1198
        %v1200 = vsel %vm404, %v1185, 0
        %v1202 = vsel %vm404, %v1187, 0
        %v1204 = vsel %vm404, %v1189, 0
        %v1206 = vsel %vm404, %v1191, 0
        %v1208 = vsel %vm404, %v1193, 0
        %v1210 = vsel %vm404, %v1195, 0
        %v1212 = vsel %vm404, %v1197, 0
        %v1214 = vsel %vm404, %v1199, 0
        %1216 = vmatprep.subr.mxu0 0.0
        %1217 = vmatpush1.xpose.msra.mxu0 %v1208
        %1218 = vmatprep.subr.mxu0 0.0
        %1219 = vmatpush1.xpose.msra.mxu0 %v1210
        %1220 = vmatprep.subr.mxu0 0.0
        %1221 = vmatpush1.xpose.msra.mxu0 %v1212
        %1222 = vmatprep.subr.mxu0 0.0
        %1223 = vmatpush1.xpose.msra.mxu0 %v1214
        %1224 = vmatprep.subr.mxu0 0.0
        %1225 = vmatpush1.xpose.msra.mxu0 0.0
        %1226 = vmatprep.subr.mxu0 0.0
        %1227 = vmatpush1.xpose.msra.mxu0 0.0
        %1228 = vmatprep.subr.mxu0 0.0
        %1229 = vmatpush1.xpose.msra.mxu0 0.0
        %1230 = vmatprep.subr.mxu0 0.0
        %1231 = vmatpush1.xpose.msra.mxu0 0.0
        %1232 = vmatprep.subr.mxu0 0.0
        %1233 = vmatpush1.xpose.msra.mxu0 0.0
        %1234 = vmatprep.subr.mxu0 0.0
        %1235 = vmatpush1.xpose.msra.mxu0 0.0
        %1236 = vmatprep.subr.mxu0 0.0
        %1237 = vmatpush1.xpose.msra.mxu0 0.0
        %1238 = vmatprep.subr.mxu0 0.0
        %1239 = vmatpush1.xpose.msra.mxu0 0.0
        %1240 = vmatprep.subr.mxu0 0.0
        %1241 = vmatpush1.xpose.msra.mxu0 0.0
        %1242 = vmatprep.subr.mxu0 0.0
        %1243 = vmatpush1.xpose.msra.mxu0 0.0
        %1244 = vmatprep.subr.mxu0 0.0
        %1245 = vmatpush1.xpose.msra.mxu0 0.0
        %1246 = vmatprep.subr.mxu0 0.0
        %1247 = vmatpush1.xpose.msra.mxu0 0.0
        %1248 = vmatprep.subr.mxu0 0.0
        %1249 = vmatpush1.xpose.msra.mxu0 0.0
        %1250 = vmatprep.subr.mxu0 0.0
        %1251 = vmatpush1.xpose.msra.mxu0 0.0
        %1252 = vmatprep.subr.mxu0 0.0
        %1253 = vmatpush1.xpose.msra.mxu0 0.0
        %1254 = vmatprep.subr.mxu0 0.0
        %1255 = vmatpush1.xpose.msra.mxu0 0.0
        %1256 = vmatprep.subr.mxu0 0.0
        %1257 = vmatpush1.xpose.msra.mxu0 0.0
        %1258 = vmatprep.subr.mxu0 0.0
        %1259 = vmatpush1.xpose.msra.mxu0 0.0
        %1260 = vmatprep.subr.mxu0 0.0
        %1261 = vmatpush1.xpose.msra.mxu0 0.0
        %1262 = vmatprep.subr.mxu0 0.0
        %1263 = vmatpush1.xpose.msra.mxu0 0.0
        %1264 = vmatprep.subr.mxu0 0.0
        %1265 = vmatpush1.xpose.msra.mxu0 0.0
        %1266 = vmatprep.subr.mxu0 0.0
        %1267 = vmatpush1.xpose.msra.mxu0 0.0
        %1268 = vmatprep.subr.mxu0 0.0
        %1269 = vmatpush1.xpose.msra.mxu0 0.0
        %1270 = vmatprep.subr.mxu0 0.0
        %1271 = vmatpush1.xpose.msra.mxu0 0.0
        %1272 = vmatprep.subr.mxu0 0.0
        %1273 = vmatpush1.xpose.msra.mxu0 0.0
        %1274 = vmatprep.subr.mxu0 0.0
        %1275 = vmatpush1.xpose.msra.mxu0 0.0
        %1276 = vmatprep.subr.mxu0 0.0
        %1277 = vmatpush1.xpose.msra.mxu0 0.0
        %1278 = vmatprep.subr.mxu0 0.0
        %1279 = vmatpush1.xpose.msra.mxu0 0.0
        %1280 = vmatprep.mubr.f32.mxu0 0.0
        %1281 = vmatmul.mubr.f32.gmra.mrb[0].mxu0 %v1200
        %v1282 = vpop.f32.mrb[0].mxu0
        %v1283 = vadd.f32 0.0, %v1282
        %v1284 = vpop.f32.mrb[0].mxu0
        %1285 = vmatprep.mubr.f32.mxu0 0.0
        %1286 = vmatmul.mubr.f32.gmra.mrb[0].mxu0 %v1202
        %v1287 = vpop.f32.mrb[0].mxu0
        %v1288 = vadd.f32 0.0, %v1287
        %v1289 = vpop.f32.mrb[0].mxu0
        %1290 = vmatprep.mubr.f32.mxu0 0.0
        %1291 = vmatmul.mubr.f32.gmra.mrb[0].mxu0 %v1204
        %v1292 = vpop.f32.mrb[0].mxu0
        %v1293 = vadd.f32 0.0, %v1292
        %v1294 = vpop.f32.mrb[0].mxu0
        %1295 = vmatprep.mubr.f32.mxu0 0.0
        %1296 = vmatmul.mubr.f32.gmra.mrb[0].mxu0 %v1206
        %v1297 = vpop.f32.mrb[0].mxu0
        %v1298 = vadd.f32 0.0, %v1297
        %v1299 = vpop.f32.mrb[0].mxu0
        %1300 = vdwg.mxu0
        %v1301 = vmul.f32 %v1283, 0.35355338
        %v1302 = vmul.f32 %v1288, 0.35355338
        %v1303 = vmul.f32 %v1293, 0.35355338
        %v1304 = vmul.f32 %v1298, 0.35355338
        %v1305 = vsel %vm1036, %v1301, -inf
        %1306 = vmax.xlane.f32.xlu0 %v1305
        %v1307 = vpop.xlane.xlu0 %1306
        %v1308 = vsel %vm1036, %v1302, -inf
        %1309 = vmax.xlane.f32.xlu0 %v1308
        %v1310 = vpop.xlane.xlu0 %1309
        %v1311 = vsel %vm1036, %v1303, -inf
        %1312 = vmax.xlane.f32.xlu0 %v1311
        %v1313 = vpop.xlane.xlu0 %1312
        %v1314 = vsel %vm1046, %v1304, -inf
        %1315 = vmax.xlane.f32.xlu0 %v1314
        %v1316 = vpop.xlane.xlu0 %1315
        %v1317 = vsub.f32 %v1301, %v1307
        %v1318 = vsub.f32 %v1302, %v1310
        %v1319 = vsub.f32 %v1303, %v1313
        %v1320 = vsub.f32 %v1304, %v1316
        %v1321 = vmul.f32 %v1317, 1.442695
        %v1322 = vpow.pop %v1321
        %v1323 = vmul.f32 %v1318, 1.442695
        %v1324 = vpow.pop %v1323
        %v1325 = vmul.f32 %v1319, 1.442695
        %v1326 = vpow.pop %v1325
        %v1327 = vmul.f32 %v1320, 1.442695
        %v1328 = vpow.pop %v1327
        %v1329 = vsel %vm1036, %v1322, 0.0
        %1330 = vadd.xlane.f32.xlu0 %v1329
        %v1331 = vpop.xlane.xlu0 %1330
        %v1332 = vsel %vm1036, %v1324, 0.0
        %1333 = vadd.xlane.f32.xlu0 %v1332
        %v1334 = vpop.xlane.xlu0 %1333
        %v1335 = vsel %vm1036, %v1326, 0.0
        %1336 = vadd.xlane.f32.xlu0 %v1335
        %v1337 = vpop.xlane.xlu0 %1336
        %v1338 = vsel %vm1046, %v1328, 0.0
        %1339 = vadd.xlane.f32.xlu0 %v1338
        %v1340 = vpop.xlane.xlu0 %1339
        %v1341 = vrcp.pop %v1331
        %v1342 = vrcp.pop %v1334
        %v1343 = vrcp.pop %v1337
        %v1344 = vrcp.pop %v1340
        %v1345 = vmul.f32 %v1322, %v1341
        %v1346 = vmul.f32 %v1324, %v1342
        %v1347 = vmul.f32 %v1326, %v1343
        %v1348 = vmul.f32 %v1328, %v1344
        %1352 = vrot.lane.b32.xlu0 %v899, 120
        %v1353 = vpop.permute.xlu0 %1352
        %1354 = vrot.lane.b32.xlu0 %v905, 120
        %v1355 = vpop.permute.xlu0 %1354
        %1356 = vrot.lane.b32.xlu0 %v911, 120
        %v1357 = vpop.permute.xlu0 %1356
        %1358 = vrot.lane.b32.xlu0 %v917, 120
        %v1359 = vpop.permute.xlu0 %1358
        %v1364 = vsel %vm1036, %v1345, 0
        %v1367 = vsel %vm1036, %v1346, 0
        %v1370 = vsel %vm1036, %v1347, 0
        %v1373 = vsel %vm1036, %v1348, 0
        %v1375 = vsel %vm1094, %v1359, 0
        %1377 = vmatprep.subr.mxu0 0.0
        %1378 = vmatpush1.msra.mxu0 %v1353
        %1379 = vmatprep.subr.mxu0 0.0
        %1380 = vmatpush1.msra.mxu0 %v1355
        %1381 = vmatprep.subr.mxu0 0.0
        %1382 = vmatpush1.msra.mxu0 %v1357
        %1383 = vmatprep.subr.mxu0 0.0
        %1384 = vmatpush1.msra.mxu0 %v1375
        %1385 = vmatprep.subr.mxu0 0.0
        %1386 = vmatpush1.msra.mxu0 0.0
        %1387 = vmatprep.subr.mxu0 0.0
        %1388 = vmatpush1.msra.mxu0 0.0
        %1389 = vmatprep.subr.mxu0 0.0
        %1390 = vmatpush1.msra.mxu0 0.0
        %1391 = vmatprep.subr.mxu0 0.0
        %1392 = vmatpush1.msra.mxu0 0.0
        %1393 = vmatprep.subr.mxu0 0.0
        %1394 = vmatpush1.msra.mxu0 0.0
        %1395 = vmatprep.subr.mxu0 0.0
        %1396 = vmatpush1.msra.mxu0 0.0
        %1397 = vmatprep.subr.mxu0 0.0
        %1398 = vmatpush1.msra.mxu0 0.0
        %1399 = vmatprep.subr.mxu0 0.0
        %1400 = vmatpush1.msra.mxu0 0.0
        %1401 = vmatprep.subr.mxu0 0.0
        %1402 = vmatpush1.msra.mxu0 0.0
        %1403 = vmatprep.subr.mxu0 0.0
        %1404 = vmatpush1.msra.mxu0 0.0
        %1405 = vmatprep.subr.mxu0 0.0
        %1406 = vmatpush1.msra.mxu0 0.0
        %1407 = vmatprep.subr.mxu0 0.0
        %1408 = vmatpush1.msra.mxu0 0.0
        %1409 = vmatprep.subr.mxu0 0.0
        %1410 = vmatpush1.msra.mxu0 0.0
        %1411 = vmatprep.subr.mxu0 0.0
        %1412 = vmatpush1.msra.mxu0 0.0
        %1413 = vmatprep.subr.mxu0 0.0
        %1414 = vmatpush1.msra.mxu0 0.0
        %1415 = vmatprep.subr.mxu0 0.0
        %1416 = vmatpush1.msra.mxu0 0.0
        %1417 = vmatprep.subr.mxu0 0.0
        %1418 = vmatpush1.msra.mxu0 0.0
        %1419 = vmatprep.subr.mxu0 0.0
        %1420 = vmatpush1.msra.mxu0 0.0
        %1421 = vmatprep.subr.mxu0 0.0
        %1422 = vmatpush1.msra.mxu0 0.0
        %1423 = vmatprep.subr.mxu0 0.0
        %1424 = vmatpush1.msra.mxu0 0.0
        %1425 = vmatprep.subr.mxu0 0.0
        %1426 = vmatpush1.msra.mxu0 0.0
        %1427 = vmatprep.subr.mxu0 0.0
        %1428 = vmatpush1.msra.mxu0 0.0
        %1429 = vmatprep.subr.mxu0 0.0
        %1430 = vmatpush1.msra.mxu0 0.0
        %1431 = vmatprep.subr.mxu0 0.0
        %1432 = vmatpush1.msra.mxu0 0.0
        %1433 = vmatprep.subr.mxu0 0.0
        %1434 = vmatpush1.msra.mxu0 0.0
        %1435 = vmatprep.subr.mxu0 0.0
        %1436 = vmatpush1.msra.mxu0 0.0
        %1437 = vmatprep.subr.mxu0 0.0
        %1438 = vmatpush1.msra.mxu0 0.0
        %1439 = vmatprep.subr.mxu0 0.0
        %1440 = vmatpush1.msra.mxu0 0.0
        %1441 = vmatprep.mubr.f32.mxu0 0.0
        %1442 = vmatmul.mubr.f32.gmra.mrb[0].mxu0 %v1364
        %v1443 = vpop.f32.mrb[0].mxu0
        %v1444 = vadd.f32 0.0, %v1443
        %v1445 = vpop.f32.mrb[0].mxu0
        %1446 = vmatprep.mubr.f32.mxu0 0.0
        %1447 = vmatmul.mubr.f32.gmra.mrb[0].mxu0 %v1367
        %v1448 = vpop.f32.mrb[0].mxu0
        %v1449 = vadd.f32 0.0, %v1448
        %v1450 = vpop.f32.mrb[0].mxu0
        %1451 = vmatprep.mubr.f32.mxu0 0.0
        %1452 = vmatmul.mubr.f32.gmra.mrb[0].mxu0 %v1370
        %v1453 = vpop.f32.mrb[0].mxu0
        %v1454 = vadd.f32 0.0, %v1453
        %v1455 = vpop.f32.mrb[0].mxu0
        %1456 = vmatprep.mubr.f32.mxu0 0.0
        %1457 = vmatmul.mubr.f32.gmra.mrb[0].mxu0 %v1373
        %v1458 = vpop.f32.mrb[0].mxu0
        %v1459 = vadd.f32 0.0, %v1458
        %v1460 = vpop.f32.mrb[0].mxu0
        %1461 = vdwg.mxu0
        %v1462 = vld [vmem:[#allocation3 + $0x8] sm:$0xff]
        %v1464 = vsel %vm404, %v1444, 0
        %v1467 = vsel %vm404, %v1449, 0
        %v1470 = vsel %vm404, %v1454, 0
        %v1473 = vsel %vm404, %v1459, 0
        %1475 = vmatprep.subr.mxu0 0.0
        %1476 = vmatpush1.msra.mxu0 %v1462
        %1477 = vmatprep.subr.mxu0 0.0
        %1478 = vmatpush1.msra.mxu0 0.0
        %1479 = vmatprep.subr.mxu0 0.0
        %1480 = vmatpush1.msra.mxu0 0.0
        %1481 = vmatprep.subr.mxu0 0.0
        %1482 = vmatpush1.msra.mxu0 0.0
        %1483 = vmatprep.subr.mxu0 0.0
        %1484 = vmatpush1.msra.mxu0 0.0
        %1485 = vmatprep.subr.mxu0 0.0
        %1486 = vmatpush1.msra.mxu0 0.0
        %1487 = vmatprep.subr.mxu0 0.0
        %1488 = vmatpush1.msra.mxu0 0.0
        %1489 = vmatprep.subr.mxu0 0.0
        %1490 = vmatpush1.msra.mxu0 0.0
        %1491 = vmatprep.subr.mxu0 0.0
        %1492 = vmatpush1.msra.mxu0 0.0
        %1493 = vmatprep.subr.mxu0 0.0
        %1494 = vmatpush1.msra.mxu0 0.0
        %1495 = vmatprep.subr.mxu0 0.0
        %1496 = vmatpush1.msra.mxu0 0.0
        %1497 = vmatprep.subr.mxu0 0.0
        %1498 = vmatpush1.msra.mxu0 0.0
        %1499 = vmatprep.subr.mxu0 0.0
        %1500 = vmatpush1.msra.mxu0 0.0
        %1501 = vmatprep.subr.mxu0 0.0
        %1502 = vmatpush1.msra.mxu0 0.0
        %1503 = vmatprep.subr.mxu0 0.0
        %1504 = vmatpush1.msra.mxu0 0.0
        %1505 = vmatprep.subr.mxu0 0.0
        %1506 = vmatpush1.msra.mxu0 0.0
        %1507 = vmatprep.subr.mxu0 0.0
        %1508 = vmatpush1.msra.mxu0 0.0
        %1509 = vmatprep.subr.mxu0 0.0
        %1510 = vmatpush1.msra.mxu0 0.0
        %1511 = vmatprep.subr.mxu0 0.0
        %1512 = vmatpush1.msra.mxu0 0.0
        %1513 = vmatprep.subr.mxu0 0.0
        %1514 = vmatpush1.msra.mxu0 0.0
        %1515 = vmatprep.subr.mxu0 0.0
        %1516 = vmatpush1.msra.mxu0 0.0
        %1517 = vmatprep.subr.mxu0 0.0
        %1518 = vmatpush1.msra.mxu0 0.0
        %1519 = vmatprep.subr.mxu0 0.0
        %1520 = vmatpush1.msra.mxu0 0.0
        %1521 = vmatprep.subr.mxu0 0.0
        %1522 = vmatpush1.msra.mxu0 0.0
        %1523 = vmatprep.subr.mxu0 0.0
        %1524 = vmatpush1.msra.mxu0 0.0
        %1525 = vmatprep.subr.mxu0 0.0
        %1526 = vmatpush1.msra.mxu0 0.0
        %1527 = vmatprep.subr.mxu0 0.0
        %1528 = vmatpush1.msra.mxu0 0.0
        %1529 = vmatprep.subr.mxu0 0.0
        %1530 = vmatpush1.msra.mxu0 0.0
        %1531 = vmatprep.subr.mxu0 0.0
        %1532 = vmatpush1.msra.mxu0 0.0
        %1533 = vmatprep.subr.mxu0 0.0
        %1534 = vmatpush1.msra.mxu0 0.0
        %1535 = vmatprep.subr.mxu0 0.0
        %1536 = vmatpush1.msra.mxu0 0.0
        %1537 = vmatprep.subr.mxu0 0.0
        %1538 = vmatpush1.msra.mxu0 0.0
        %1539 = vmatprep.mubr.f32.mxu0 0.0
        %1540 = vmatmul.mubr.f32.gmra.mrb[0].mxu0 %v1464
        %v1541 = vpop.f32.mrb[0].mxu0
        %v1542 = vadd.f32 0.0, %v1541
        %v1543 = vpop.f32.mrb[0].mxu0
        %1544 = vmatprep.mubr.f32.mxu0 0.0
        %1545 = vmatmul.mubr.f32.gmra.mrb[0].mxu0 %v1467
        %v1546 = vpop.f32.mrb[0].mxu0
        %v1547 = vadd.f32 0.0, %v1546
        %v1548 = vpop.f32.mrb[0].mxu0
        %1549 = vmatprep.mubr.f32.mxu0 0.0
        %1550 = vmatmul.mubr.f32.gmra.mrb[0].mxu0 %v1470
        %v1551 = vpop.f32.mrb[0].mxu0
        %v1552 = vadd.f32 0.0, %v1551
        %v1553 = vpop.f32.mrb[0].mxu0
        %1554 = vmatprep.mubr.f32.mxu0 0.0
        %1555 = vmatmul.mubr.f32.gmra.mrb[0].mxu0 %v1473
        %v1556 = vpop.f32.mrb[0].mxu0
        %v1557 = vadd.f32 0.0, %v1556
        %v1558 = vpop.f32.mrb[0].mxu0
        %1559 = vdwg.mxu0
        %v1561 = vsel %vm404, %v1165, 0
        %v1564 = vsel %vm404, %v1170, 0
        %v1567 = vsel %vm404, %v1175, 0
        %v1570 = vsel %vm404, %v1180, 0
        %1572 = vmatprep.subr.mxu0 0.0
        %1573 = vmatpush1.msra.mxu0 %v1183
        %1574 = vmatprep.subr.mxu0 0.0
        %1575 = vmatpush1.msra.mxu0 0.0
        %1576 = vmatprep.subr.mxu0 0.0
        %1577 = vmatpush1.msra.mxu0 0.0
        %1578 = vmatprep.subr.mxu0 0.0
        %1579 = vmatpush1.msra.mxu0 0.0
        %1580 = vmatprep.subr.mxu0 0.0
        %1581 = vmatpush1.msra.mxu0 0.0
        %1582 = vmatprep.subr.mxu0 0.0
        %1583 = vmatpush1.msra.mxu0 0.0
        %1584 = vmatprep.subr.mxu0 0.0
        %1585 = vmatpush1.msra.mxu0 0.0
        %1586 = vmatprep.subr.mxu0 0.0
        %1587 = vmatpush1.msra.mxu0 0.0
        %1588 = vmatprep.subr.mxu0 0.0
        %1589 = vmatpush1.msra.mxu0 0.0
        %1590 = vmatprep.subr.mxu0 0.0
        %1591 = vmatpush1.msra.mxu0 0.0
        %1592 = vmatprep.subr.mxu0 0.0
        %1593 = vmatpush1.msra.mxu0 0.0
        %1594 = vmatprep.subr.mxu0 0.0
        %1595 = vmatpush1.msra.mxu0 0.0
        %1596 = vmatprep.subr.mxu0 0.0
        %1597 = vmatpush1.msra.mxu0 0.0
        %1598 = vmatprep.subr.mxu0 0.0
        %1599 = vmatpush1.msra.mxu0 0.0
        %1600 = vmatprep.subr.mxu0 0.0
        %1601 = vmatpush1.msra.mxu0 0.0
        %1602 = vmatprep.subr.mxu0 0.0
        %1603 = vmatpush1.msra.mxu0 0.0
        %1604 = vmatprep.subr.mxu0 0.0
        %1605 = vmatpush1.msra.mxu0 0.0
        %1606 = vmatprep.subr.mxu0 0.0
        %1607 = vmatpush1.msra.mxu0 0.0
        %1608 = vmatprep.subr.mxu0 0.0
        %1609 = vmatpush1.msra.mxu0 0.0
        %1610 = vmatprep.subr.mxu0 0.0
        %1611 = vmatpush1.msra.mxu0 0.0
        %1612 = vmatprep.subr.mxu0 0.0
        %1613 = vmatpush1.msra.mxu0 0.0
        %1614 = vmatprep.subr.mxu0 0.0
        %1615 = vmatpush1.msra.mxu0 0.0
        %1616 = vmatprep.subr.mxu0 0.0
        %1617 = vmatpush1.msra.mxu0 0.0
        %1618 = vmatprep.subr.mxu0 0.0
        %1619 = vmatpush1.msra.mxu0 0.0
        %1620 = vmatprep.subr.mxu0 0.0
        %1621 = vmatpush1.msra.mxu0 0.0
        %1622 = vmatprep.subr.mxu0 0.0
        %1623 = vmatpush1.msra.mxu0 0.0
        %1624 = vmatprep.subr.mxu0 0.0
        %1625 = vmatpush1.msra.mxu0 0.0
        %1626 = vmatprep.subr.mxu0 0.0
        %1627 = vmatpush1.msra.mxu0 0.0
        %1628 = vmatprep.subr.mxu0 0.0
        %1629 = vmatpush1.msra.mxu0 0.0
        %1630 = vmatprep.subr.mxu0 0.0
        %1631 = vmatpush1.msra.mxu0 0.0
        %1632 = vmatprep.subr.mxu0 0.0
        %1633 = vmatpush1.msra.mxu0 0.0
        %1634 = vmatprep.subr.mxu0 0.0
        %1635 = vmatpush1.msra.mxu0 0.0
        %1636 = vmatprep.mubr.f32.mxu0 0.0
        %1637 = vmatmul.mubr.f32.gmra.mrb[0].mxu0 %v1561
        %v1638 = vpop.f32.mrb[0].mxu0
        %v1639 = vadd.f32 %v1542, %v1638
        %v1640 = vpop.f32.mrb[0].mxu0
        %1641 = vmatprep.mubr.f32.mxu0 0.0
        %1642 = vmatmul.mubr.f32.gmra.mrb[0].mxu0 %v1564
        %v1643 = vpop.f32.mrb[0].mxu0
        %v1644 = vadd.f32 %v1547, %v1643
        %v1645 = vpop.f32.mrb[0].mxu0
        %1646 = vmatprep.mubr.f32.mxu0 0.0
        %1647 = vmatmul.mubr.f32.gmra.mrb[0].mxu0 %v1567
        %v1648 = vpop.f32.mrb[0].mxu0
        %v1649 = vadd.f32 %v1552, %v1648
        %v1650 = vpop.f32.mrb[0].mxu0
        %1651 = vmatprep.mubr.f32.mxu0 0.0
        %1652 = vmatmul.mubr.f32.gmra.mrb[0].mxu0 %v1570
        %v1653 = vpop.f32.mrb[0].mxu0
        %v1654 = vadd.f32 %v1557, %v1653
        %v1655 = vpop.f32.mrb[0].mxu0
        %1656 = vdwg.mxu0
        %1657 = vrot.lane.b32.xlu0 %v897, 112
        %v1658 = vpop.permute.xlu0 %1657
        %1659 = vrot.lane.b32.xlu0 %v903, 112
        %v1660 = vpop.permute.xlu0 %1659
        %1661 = vrot.lane.b32.xlu0 %v909, 112
        %v1662 = vpop.permute.xlu0 %1661
        %1663 = vrot.lane.b32.xlu0 %v915, 112
        %v1664 = vpop.permute.xlu0 %1663
        %1665 = vrot.lane.b32.xlu0 %v897, 48
        %v1666 = vpop.permute.xlu0 %1665
        %1667 = vrot.lane.b32.xlu0 %v903, 48
        %v1668 = vpop.permute.xlu0 %1667
        %1669 = vrot.lane.b32.xlu0 %v909, 48
        %v1670 = vpop.permute.xlu0 %1669
        %1671 = vrot.lane.b32.xlu0 %v915, 48
        %v1672 = vpop.permute.xlu0 %1671
        %v1673 = vsel %vm404, %v1658, 0
        %v1675 = vsel %vm404, %v1660, 0
        %v1677 = vsel %vm404, %v1662, 0
        %v1679 = vsel %vm404, %v1664, 0
        %v1681 = vsel %vm404, %v1666, 0
        %v1683 = vsel %vm404, %v1668, 0
        %v1685 = vsel %vm404, %v1670, 0
        %v1687 = vsel %vm404, %v1672, 0
        %1689 = vmatprep.subr.mxu0 0.0
        %1690 = vmatpush1.xpose.msra.mxu0 %v1681
        %1691 = vmatprep.subr.mxu0 0.0
        %1692 = vmatpush1.xpose.msra.mxu0 %v1683
        %1693 = vmatprep.subr.mxu0 0.0
        %1694 = vmatpush1.xpose.msra.mxu0 %v1685
        %1695 = vmatprep.subr.mxu0 0.0
        %1696 = vmatpush1.xpose.msra.mxu0 %v1687
        %1697 = vmatprep.subr.mxu0 0.0
        %1698 = vmatpush1.xpose.msra.mxu0 0.0
        %1699 = vmatprep.subr.mxu0 0.0
        %1700 = vmatpush1.xpose.msra.mxu0 0.0
        %1701 = vmatprep.subr.mxu0 0.0
        %1702 = vmatpush1.xpose.msra.mxu0 0.0
        %1703 = vmatprep.subr.mxu0 0.0
        %1704 = vmatpush1.xpose.msra.mxu0 0.0
        %1705 = vmatprep.subr.mxu0 0.0
        %1706 = vmatpush1.xpose.msra.mxu0 0.0
        %1707 = vmatprep.subr.mxu0 0.0
        %1708 = vmatpush1.xpose.msra.mxu0 0.0
        %1709 = vmatprep.subr.mxu0 0.0
        %1710 = vmatpush1.xpose.msra.mxu0 0.0
        %1711 = vmatprep.subr.mxu0 0.0
        %1712 = vmatpush1.xpose.msra.mxu0 0.0
        %1713 = vmatprep.subr.mxu0 0.0
        %1714 = vmatpush1.xpose.msra.mxu0 0.0
        %1715 = vmatprep.subr.mxu0 0.0
        %1716 = vmatpush1.xpose.msra.mxu0 0.0
        %1717 = vmatprep.subr.mxu0 0.0
        %1718 = vmatpush1.xpose.msra.mxu0 0.0
        %1719 = vmatprep.subr.mxu0 0.0
        %1720 = vmatpush1.xpose.msra.mxu0 0.0
        %1721 = vmatprep.subr.mxu0 0.0
        %1722 = vmatpush1.xpose.msra.mxu0 0.0
        %1723 = vmatprep.subr.mxu0 0.0
        %1724 = vmatpush1.xpose.msra.mxu0 0.0
        %1725 = vmatprep.subr.mxu0 0.0
        %1726 = vmatpush1.xpose.msra.mxu0 0.0
        %1727 = vmatprep.subr.mxu0 0.0
        %1728 = vmatpush1.xpose.msra.mxu0 0.0
        %1729 = vmatprep.subr.mxu0 0.0
        %1730 = vmatpush1.xpose.msra.mxu0 0.0
        %1731 = vmatprep.subr.mxu0 0.0
        %1732 = vmatpush1.xpose.msra.mxu0 0.0
        %1733 = vmatprep.subr.mxu0 0.0
        %1734 = vmatpush1.xpose.msra.mxu0 0.0
        %1735 = vmatprep.subr.mxu0 0.0
        %1736 = vmatpush1.xpose.msra.mxu0 0.0
        %1737 = vmatprep.subr.mxu0 0.0
        %1738 = vmatpush1.xpose.msra.mxu0 0.0
        %1739 = vmatprep.subr.mxu0 0.0
        %1740 = vmatpush1.xpose.msra.mxu0 0.0
        %1741 = vmatprep.subr.mxu0 0.0
        %1742 = vmatpush1.xpose.msra.mxu0 0.0
        %1743 = vmatprep.subr.mxu0 0.0
        %1744 = vmatpush1.xpose.msra.mxu0 0.0
        %1745 = vmatprep.subr.mxu0 0.0
        %1746 = vmatpush1.xpose.msra.mxu0 0.0
        %1747 = vmatprep.subr.mxu0 0.0
        %1748 = vmatpush1.xpose.msra.mxu0 0.0
        %1749 = vmatprep.subr.mxu0 0.0
        %1750 = vmatpush1.xpose.msra.mxu0 0.0
        %1751 = vmatprep.subr.mxu0 0.0
        %1752 = vmatpush1.xpose.msra.mxu0 0.0
        %1753 = vmatprep.mubr.f32.mxu0 0.0
        %1754 = vmatmul.mubr.f32.gmra.mrb[0].mxu0 %v1673
        %v1755 = vpop.f32.mrb[0].mxu0
        %v1756 = vadd.f32 0.0, %v1755
        %v1757 = vpop.f32.mrb[0].mxu0
        %1758 = vmatprep.mubr.f32.mxu0 0.0
        %1759 = vmatmul.mubr.f32.gmra.mrb[0].mxu0 %v1675
        %v1760 = vpop.f32.mrb[0].mxu0
        %v1761 = vadd.f32 0.0, %v1760
        %v1762 = vpop.f32.mrb[0].mxu0
        %1763 = vmatprep.mubr.f32.mxu0 0.0
        %1764 = vmatmul.mubr.f32.gmra.mrb[0].mxu0 %v1677
        %v1765 = vpop.f32.mrb[0].mxu0
        %v1766 = vadd.f32 0.0, %v1765
        %v1767 = vpop.f32.mrb[0].mxu0
        %1768 = vmatprep.mubr.f32.mxu0 0.0
        %1769 = vmatmul.mubr.f32.gmra.mrb[0].mxu0 %v1679
        %v1770 = vpop.f32.mrb[0].mxu0
        %v1771 = vadd.f32 0.0, %v1770
        %v1772 = vpop.f32.mrb[0].mxu0
        %1773 = vdwg.mxu0
        %v1774 = vmul.f32 %v1756, 0.35355338
        %v1775 = vmul.f32 %v1761, 0.35355338
        %v1776 = vmul.f32 %v1766, 0.35355338
        %v1777 = vmul.f32 %v1771, 0.35355338
        %v1778 = vsel %vm1036, %v1774, -inf
        %1779 = vmax.xlane.f32.xlu0 %v1778
        %v1780 = vpop.xlane.xlu0 %1779
        %v1781 = vsel %vm1036, %v1775, -inf
        %1782 = vmax.xlane.f32.xlu0 %v1781
        %v1783 = vpop.xlane.xlu0 %1782
        %v1784 = vsel %vm1036, %v1776, -inf
        %1785 = vmax.xlane.f32.xlu0 %v1784
        %v1786 = vpop.xlane.xlu0 %1785
        %v1787 = vsel %vm1046, %v1777, -inf
        %1788 = vmax.xlane.f32.xlu0 %v1787
        %v1789 = vpop.xlane.xlu0 %1788
        %v1790 = vsub.f32 %v1774, %v1780
        %v1791 = vsub.f32 %v1775, %v1783
        %v1792 = vsub.f32 %v1776, %v1786
        %v1793 = vsub.f32 %v1777, %v1789
        %v1794 = vmul.f32 %v1790, 1.442695
        %v1795 = vpow.pop %v1794
        %v1796 = vmul.f32 %v1791, 1.442695
        %v1797 = vpow.pop %v1796
        %v1798 = vmul.f32 %v1792, 1.442695
        %v1799 = vpow.pop %v1798
        %v1800 = vmul.f32 %v1793, 1.442695
        %v1801 = vpow.pop %v1800
        %v1802 = vsel %vm1036, %v1795, 0.0
        %1803 = vadd.xlane.f32.xlu0 %v1802
        %v1804 = vpop.xlane.xlu0 %1803
        %v1805 = vsel %vm1036, %v1797, 0.0
        %1806 = vadd.xlane.f32.xlu0 %v1805
        %v1807 = vpop.xlane.xlu0 %1806
        %v1808 = vsel %vm1036, %v1799, 0.0
        %1809 = vadd.xlane.f32.xlu0 %v1808
        %v1810 = vpop.xlane.xlu0 %1809
        %v1811 = vsel %vm1046, %v1801, 0.0
        %1812 = vadd.xlane.f32.xlu0 %v1811
        %v1813 = vpop.xlane.xlu0 %1812
        %v1814 = vrcp.pop %v1804
        %v1815 = vrcp.pop %v1807
        %v1816 = vrcp.pop %v1810
        %v1817 = vrcp.pop %v1813
        %v1818 = vmul.f32 %v1795, %v1814
        %v1819 = vmul.f32 %v1797, %v1815
        %v1820 = vmul.f32 %v1799, %v1816
        %v1821 = vmul.f32 %v1801, %v1817
        %1822 = vrot.lane.b32.xlu0 %v899, 112
        %v1823 = vpop.permute.xlu0 %1822
        %1824 = vrot.lane.b32.xlu0 %v905, 112
        %v1825 = vpop.permute.xlu0 %1824
        %1826 = vrot.lane.b32.xlu0 %v911, 112
        %v1827 = vpop.permute.xlu0 %1826
        %1828 = vrot.lane.b32.xlu0 %v917, 112
        %v1829 = vpop.permute.xlu0 %1828
        %v1834 = vsel %vm1036, %v1818, 0
        %v1837 = vsel %vm1036, %v1819, 0
        %v1840 = vsel %vm1036, %v1820, 0
        %v1843 = vsel %vm1036, %v1821, 0
        %v1845 = vsel %vm1094, %v1829, 0
        %1847 = vmatprep.subr.mxu0 0.0
        %1848 = vmatpush1.msra.mxu0 %v1823
        %1849 = vmatprep.subr.mxu0 0.0
        %1850 = vmatpush1.msra.mxu0 %v1825
        %1851 = vmatprep.subr.mxu0 0.0
        %1852 = vmatpush1.msra.mxu0 %v1827
        %1853 = vmatprep.subr.mxu0 0.0
        %1854 = vmatpush1.msra.mxu0 %v1845
        %1855 = vmatprep.subr.mxu0 0.0
        %1856 = vmatpush1.msra.mxu0 0.0
        %1857 = vmatprep.subr.mxu0 0.0
        %1858 = vmatpush1.msra.mxu0 0.0
        %1859 = vmatprep.subr.mxu0 0.0
        %1860 = vmatpush1.msra.mxu0 0.0
        %1861 = vmatprep.subr.mxu0 0.0
        %1862 = vmatpush1.msra.mxu0 0.0
        %1863 = vmatprep.subr.mxu0 0.0
        %1864 = vmatpush1.msra.mxu0 0.0
        %1865 = vmatprep.subr.mxu0 0.0
        %1866 = vmatpush1.msra.mxu0 0.0
        %1867 = vmatprep.subr.mxu0 0.0
        %1868 = vmatpush1.msra.mxu0 0.0
        %1869 = vmatprep.subr.mxu0 0.0
        %1870 = vmatpush1.msra.mxu0 0.0
        %1871 = vmatprep.subr.mxu0 0.0
        %1872 = vmatpush1.msra.mxu0 0.0
        %1873 = vmatprep.subr.mxu0 0.0
        %1874 = vmatpush1.msra.mxu0 0.0
        %1875 = vmatprep.subr.mxu0 0.0
        %1876 = vmatpush1.msra.mxu0 0.0
        %1877 = vmatprep.subr.mxu0 0.0
        %1878 = vmatpush1.msra.mxu0 0.0
        %1879 = vmatprep.subr.mxu0 0.0
        %1880 = vmatpush1.msra.mxu0 0.0
        %1881 = vmatprep.subr.mxu0 0.0
        %1882 = vmatpush1.msra.mxu0 0.0
        %1883 = vmatprep.subr.mxu0 0.0
        %1884 = vmatpush1.msra.mxu0 0.0
        %1885 = vmatprep.subr.mxu0 0.0
        %1886 = vmatpush1.msra.mxu0 0.0
        %1887 = vmatprep.subr.mxu0 0.0
        %1888 = vmatpush1.msra.mxu0 0.0
        %1889 = vmatprep.subr.mxu0 0.0
        %1890 = vmatpush1.msra.mxu0 0.0
        %1891 = vmatprep.subr.mxu0 0.0
        %1892 = vmatpush1.msra.mxu0 0.0
        %1893 = vmatprep.subr.mxu0 0.0
        %1894 = vmatpush1.msra.mxu0 0.0
        %1895 = vmatprep.subr.mxu0 0.0
        %1896 = vmatpush1.msra.mxu0 0.0
        %1897 = vmatprep.subr.mxu0 0.0
        %1898 = vmatpush1.msra.mxu0 0.0
        %1899 = vmatprep.subr.mxu0 0.0
        %1900 = vmatpush1.msra.mxu0 0.0
        %1901 = vmatprep.subr.mxu0 0.0
        %1902 = vmatpush1.msra.mxu0 0.0
        %1903 = vmatprep.subr.mxu0 0.0
        %1904 = vmatpush1.msra.mxu0 0.0
        %1905 = vmatprep.subr.mxu0 0.0
        %1906 = vmatpush1.msra.mxu0 0.0
        %1907 = vmatprep.subr.mxu0 0.0
        %1908 = vmatpush1.msra.mxu0 0.0
        %1909 = vmatprep.subr.mxu0 0.0
        %1910 = vmatpush1.msra.mxu0 0.0
        %1911 = vmatprep.mubr.f32.mxu0 0.0
        %1912 = vmatmul.mubr.f32.gmra.mrb[0].mxu0 %v1834
        %v1913 = vpop.f32.mrb[0].mxu0
        %v1914 = vadd.f32 0.0, %v1913
        %v1915 = vpop.f32.mrb[0].mxu0
        %1916 = vmatprep.mubr.f32.mxu0 0.0
        %1917 = vmatmul.mubr.f32.gmra.mrb[0].mxu0 %v1837
        %v1918 = vpop.f32.mrb[0].mxu0
        %v1919 = vadd.f32 0.0, %v1918
        %v1920 = vpop.f32.mrb[0].mxu0
        %1921 = vmatprep.mubr.f32.mxu0 0.0
        %1922 = vmatmul.mubr.f32.gmra.mrb[0].mxu0 %v1840
        %v1923 = vpop.f32.mrb[0].mxu0
        %v1924 = vadd.f32 0.0, %v1923
        %v1925 = vpop.f32.mrb[0].mxu0
        %1926 = vmatprep.mubr.f32.mxu0 0.0
        %1927 = vmatmul.mubr.f32.gmra.mrb[0].mxu0 %v1843
        %v1928 = vpop.f32.mrb[0].mxu0
        %v1929 = vadd.f32 0.0, %v1928
        %v1930 = vpop.f32.mrb[0].mxu0
        %1931 = vdwg.mxu0
        %v1932 = vld [vmem:[#allocation3 + $0x10] sm:$0xff]
        %v1934 = vsel %vm404, %v1914, 0
        %v1937 = vsel %vm404, %v1919, 0
        %v1940 = vsel %vm404, %v1924, 0
        %v1943 = vsel %vm404, %v1929, 0
        %1945 = vmatprep.subr.mxu0 0.0
        %1946 = vmatpush1.msra.mxu0 %v1932
        %1947 = vmatprep.subr.mxu0 0.0
        %1948 = vmatpush1.msra.mxu0 0.0
        %1949 = vmatprep.subr.mxu0 0.0
        %1950 = vmatpush1.msra.mxu0 0.0
        %1951 = vmatprep.subr.mxu0 0.0
        %1952 = vmatpush1.msra.mxu0 0.0
        %1953 = vmatprep.subr.mxu0 0.0
        %1954 = vmatpush1.msra.mxu0 0.0
        %1955 = vmatprep.subr.mxu0 0.0
        %1956 = vmatpush1.msra.mxu0 0.0
        %1957 = vmatprep.subr.mxu0 0.0
        %1958 = vmatpush1.msra.mxu0 0.0
        %1959 = vmatprep.subr.mxu0 0.0
        %1960 = vmatpush1.msra.mxu0 0.0
        %1961 = vmatprep.subr.mxu0 0.0
        %1962 = vmatpush1.msra.mxu0 0.0
        %1963 = vmatprep.subr.mxu0 0.0
        %1964 = vmatpush1.msra.mxu0 0.0
        %1965 = vmatprep.subr.mxu0 0.0
        %1966 = vmatpush1.msra.mxu0 0.0
        %1967 = vmatprep.subr.mxu0 0.0
        %1968 = vmatpush1.msra.mxu0 0.0
        %1969 = vmatprep.subr.mxu0 0.0
        %1970 = vmatpush1.msra.mxu0 0.0
        %1971 = vmatprep.subr.mxu0 0.0
        %1972 = vmatpush1.msra.mxu0 0.0
        %1973 = vmatprep.subr.mxu0 0.0
        %1974 = vmatpush1.msra.mxu0 0.0
        %1975 = vmatprep.subr.mxu0 0.0
        %1976 = vmatpush1.msra.mxu0 0.0
        %1977 = vmatprep.subr.mxu0 0.0
        %1978 = vmatpush1.msra.mxu0 0.0
        %1979 = vmatprep.subr.mxu0 0.0
        %1980 = vmatpush1.msra.mxu0 0.0
        %1981 = vmatprep.subr.mxu0 0.0
        %1982 = vmatpush1.msra.mxu0 0.0
        %1983 = vmatprep.subr.mxu0 0.0
        %1984 = vmatpush1.msra.mxu0 0.0
        %1985 = vmatprep.subr.mxu0 0.0
        %1986 = vmatpush1.msra.mxu0 0.0
        %1987 = vmatprep.subr.mxu0 0.0
        %1988 = vmatpush1.msra.mxu0 0.0
        %1989 = vmatprep.subr.mxu0 0.0
        %1990 = vmatpush1.msra.mxu0 0.0
        %1991 = vmatprep.subr.mxu0 0.0
        %1992 = vmatpush1.msra.mxu0 0.0
        %1993 = vmatprep.subr.mxu0 0.0
        %1994 = vmatpush1.msra.mxu0 0.0
        %1995 = vmatprep.subr.mxu0 0.0
        %1996 = vmatpush1.msra.mxu0 0.0
        %1997 = vmatprep.subr.mxu0 0.0
        %1998 = vmatpush1.msra.mxu0 0.0
        %1999 = vmatprep.subr.mxu0 0.0
        %2000 = vmatpush1.msra.mxu0 0.0
        %2001 = vmatprep.subr.mxu0 0.0
        %2002 = vmatpush1.msra.mxu0 0.0
        %2003 = vmatprep.subr.mxu0 0.0
        %2004 = vmatpush1.msra.mxu0 0.0
        %2005 = vmatprep.subr.mxu0 0.0
        %2006 = vmatpush1.msra.mxu0 0.0
        %2007 = vmatprep.subr.mxu0 0.0
        %2008 = vmatpush1.msra.mxu0 0.0
        %2009 = vmatprep.mubr.f32.mxu0 0.0
        %2010 = vmatmul.mubr.f32.gmra.mrb[0].mxu0 %v1934
        %v2011 = vpop.f32.mrb[0].mxu0
        %v2012 = vadd.f32 0.0, %v2011
        %v2013 = vpop.f32.mrb[0].mxu0
        %2014 = vmatprep.mubr.f32.mxu0 0.0
        %2015 = vmatmul.mubr.f32.gmra.mrb[0].mxu0 %v1937
        %v2016 = vpop.f32.mrb[0].mxu0
        %v2017 = vadd.f32 0.0, %v2016
        %v2018 = vpop.f32.mrb[0].mxu0
        %2019 = vmatprep.mubr.f32.mxu0 0.0
        %2020 = vmatmul.mubr.f32.gmra.mrb[0].mxu0 %v1940
        %v2021 = vpop.f32.mrb[0].mxu0
        %v2022 = vadd.f32 0.0, %v2021
        %v2023 = vpop.f32.mrb[0].mxu0
        %2024 = vmatprep.mubr.f32.mxu0 0.0
        %2025 = vmatmul.mubr.f32.gmra.mrb[0].mxu0 %v1943
        %v2026 = vpop.f32.mrb[0].mxu0
        %v2027 = vadd.f32 0.0, %v2026
        %v2028 = vpop.f32.mrb[0].mxu0
        %2029 = vdwg.mxu0
        %v2030 = vadd.f32 %v1639, %v2012
        %v2031 = vadd.f32 %v1644, %v2017
        %v2032 = vadd.f32 %v1649, %v2022
        %v2033 = vadd.f32 %v1654, %v2027
        %2034 = vrot.lane.b32.xlu0 %v897, 104
        %v2035 = vpop.permute.xlu0 %2034
        %2036 = vrot.lane.b32.xlu0 %v903, 104
        %v2037 = vpop.permute.xlu0 %2036
        %2038 = vrot.lane.b32.xlu0 %v909, 104
        %v2039 = vpop.permute.xlu0 %2038
        %2040 = vrot.lane.b32.xlu0 %v915, 104
        %v2041 = vpop.permute.xlu0 %2040
        %2042 = vrot.lane.b32.xlu0 %v897, 40
        %v2043 = vpop.permute.xlu0 %2042
        %2044 = vrot.lane.b32.xlu0 %v903, 40
        %v2045 = vpop.permute.xlu0 %2044
        %2046 = vrot.lane.b32.xlu0 %v909, 40
        %v2047 = vpop.permute.xlu0 %2046
        %2048 = vrot.lane.b32.xlu0 %v915, 40
        %v2049 = vpop.permute.xlu0 %2048
        %v2050 = vsel %vm404, %v2035, 0
        %v2052 = vsel %vm404, %v2037, 0
        %v2054 = vsel %vm404, %v2039, 0
        %v2056 = vsel %vm404, %v2041, 0
        %v2058 = vsel %vm404, %v2043, 0
        %v2060 = vsel %vm404, %v2045, 0
        %v2062 = vsel %vm404, %v2047, 0
        %v2064 = vsel %vm404, %v2049, 0
        %2066 = vmatprep.subr.mxu0 0.0
        %2067 = vmatpush1.xpose.msra.mxu0 %v2058
        %2068 = vmatprep.subr.mxu0 0.0
        %2069 = vmatpush1.xpose.msra.mxu0 %v2060
        %2070 = vmatprep.subr.mxu0 0.0
        %2071 = vmatpush1.xpose.msra.mxu0 %v2062
        %2072 = vmatprep.subr.mxu0 0.0
        %2073 = vmatpush1.xpose.msra.mxu0 %v2064
        %2074 = vmatprep.subr.mxu0 0.0
        %2075 = vmatpush1.xpose.msra.mxu0 0.0
        %2076 = vmatprep.subr.mxu0 0.0
        %2077 = vmatpush1.xpose.msra.mxu0 0.0
        %2078 = vmatprep.subr.mxu0 0.0
        %2079 = vmatpush1.xpose.msra.mxu0 0.0
        %2080 = vmatprep.subr.mxu0 0.0
        %2081 = vmatpush1.xpose.msra.mxu0 0.0
        %2082 = vmatprep.subr.mxu0 0.0
        %2083 = vmatpush1.xpose.msra.mxu0 0.0
        %2084 = vmatprep.subr.mxu0 0.0
        %2085 = vmatpush1.xpose.msra.mxu0 0.0
        %2086 = vmatprep.subr.mxu0 0.0
        %2087 = vmatpush1.xpose.msra.mxu0 0.0
        %2088 = vmatprep.subr.mxu0 0.0
        %2089 = vmatpush1.xpose.msra.mxu0 0.0
        %2090 = vmatprep.subr.mxu0 0.0
        %2091 = vmatpush1.xpose.msra.mxu0 0.0
        %2092 = vmatprep.subr.mxu0 0.0
        %2093 = vmatpush1.xpose.msra.mxu0 0.0
        %2094 = vmatprep.subr.mxu0 0.0
        %2095 = vmatpush1.xpose.msra.mxu0 0.0
        %2096 = vmatprep.subr.mxu0 0.0
        %2097 = vmatpush1.xpose.msra.mxu0 0.0
        %2098 = vmatprep.subr.mxu0 0.0
        %2099 = vmatpush1.xpose.msra.mxu0 0.0
        %2100 = vmatprep.subr.mxu0 0.0
        %2101 = vmatpush1.xpose.msra.mxu0 0.0
        %2102 = vmatprep.subr.mxu0 0.0
        %2103 = vmatpush1.xpose.msra.mxu0 0.0
        %2104 = vmatprep.subr.mxu0 0.0
        %2105 = vmatpush1.xpose.msra.mxu0 0.0
        %2106 = vmatprep.subr.mxu0 0.0
        %2107 = vmatpush1.xpose.msra.mxu0 0.0
        %2108 = vmatprep.subr.mxu0 0.0
        %2109 = vmatpush1.xpose.msra.mxu0 0.0
        %2110 = vmatprep.subr.mxu0 0.0
        %2111 = vmatpush1.xpose.msra.mxu0 0.0
        %2112 = vmatprep.subr.mxu0 0.0
        %2113 = vmatpush1.xpose.msra.mxu0 0.0
        %2114 = vmatprep.subr.mxu0 0.0
        %2115 = vmatpush1.xpose.msra.mxu0 0.0
        %2116 = vmatprep.subr.mxu0 0.0
        %2117 = vmatpush1.xpose.msra.mxu0 0.0
        %2118 = vmatprep.subr.mxu0 0.0
        %2119 = vmatpush1.xpose.msra.mxu0 0.0
        %2120 = vmatprep.subr.mxu0 0.0
        %2121 = vmatpush1.xpose.msra.mxu0 0.0
        %2122 = vmatprep.subr.mxu0 0.0
        %2123 = vmatpush1.xpose.msra.mxu0 0.0
        %2124 = vmatprep.subr.mxu0 0.0
        %2125 = vmatpush1.xpose.msra.mxu0 0.0
        %2126 = vmatprep.subr.mxu0 0.0
        %2127 = vmatpush1.xpose.msra.mxu0 0.0
        %2128 = vmatprep.subr.mxu0 0.0
        %2129 = vmatpush1.xpose.msra.mxu0 0.0
        %2130 = vmatprep.mubr.f32.mxu0 0.0
        %2131 = vmatmul.mubr.f32.gmra.mrb[0].mxu0 %v2050
        %v2132 = vpop.f32.mrb[0].mxu0
        %v2133 = vadd.f32 0.0, %v2132
        %v2134 = vpop.f32.mrb[0].mxu0
        %2135 = vmatprep.mubr.f32.mxu0 0.0
        %2136 = vmatmul.mubr.f32.gmra.mrb[0].mxu0 %v2052
        %v2137 = vpop.f32.mrb[0].mxu0
        %v2138 = vadd.f32 0.0, %v2137
        %v2139 = vpop.f32.mrb[0].mxu0
        %2140 = vmatprep.mubr.f32.mxu0 0.0
        %2141 = vmatmul.mubr.f32.gmra.mrb[0].mxu0 %v2054
        %v2142 = vpop.f32.mrb[0].mxu0
        %v2143 = vadd.f32 0.0, %v2142
        %v2144 = vpop.f32.mrb[0].mxu0
        %2145 = vmatprep.mubr.f32.mxu0 0.0
        %2146 = vmatmul.mubr.f32.gmra.mrb[0].mxu0 %v2056
        %v2147 = vpop.f32.mrb[0].mxu0
        %v2148 = vadd.f32 0.0, %v2147
        %v2149 = vpop.f32.mrb[0].mxu0
        %2150 = vdwg.mxu0
        %v2151 = vmul.f32 %v2133, 0.35355338
        %v2152 = vmul.f32 %v2138, 0.35355338
        %v2153 = vmul.f32 %v2143, 0.35355338
        %v2154 = vmul.f32 %v2148, 0.35355338
        %v2155 = vsel %vm1036, %v2151, -inf
        %2156 = vmax.xlane.f32.xlu0 %v2155
        %v2157 = vpop.xlane.xlu0 %2156
        %v2158 = vsel %vm1036, %v2152, -inf
        %2159 = vmax.xlane.f32.xlu0 %v2158
        %v2160 = vpop.xlane.xlu0 %2159
        %v2161 = vsel %vm1036, %v2153, -inf
        %2162 = vmax.xlane.f32.xlu0 %v2161
        %v2163 = vpop.xlane.xlu0 %2162
        %v2164 = vsel %vm1046, %v2154, -inf
        %2165 = vmax.xlane.f32.xlu0 %v2164
        %v2166 = vpop.xlane.xlu0 %2165
        %v2167 = vsub.f32 %v2151, %v2157
        %v2168 = vsub.f32 %v2152, %v2160
        %v2169 = vsub.f32 %v2153, %v2163
        %v2170 = vsub.f32 %v2154, %v2166
        %v2171 = vmul.f32 %v2167, 1.442695
        %v2172 = vpow.pop %v2171
        %v2173 = vmul.f32 %v2168, 1.442695
        %v2174 = vpow.pop %v2173
        %v2175 = vmul.f32 %v2169, 1.442695
        %v2176 = vpow.pop %v2175
        %v2177 = vmul.f32 %v2170, 1.442695
        %v2178 = vpow.pop %v2177
        %v2179 = vsel %vm1036, %v2172, 0.0
        %2180 = vadd.xlane.f32.xlu0 %v2179
        %v2181 = vpop.xlane.xlu0 %2180
        %v2182 = vsel %vm1036, %v2174, 0.0
        %2183 = vadd.xlane.f32.xlu0 %v2182
        %v2184 = vpop.xlane.xlu0 %2183
        %v2185 = vsel %vm1036, %v2176, 0.0
        %2186 = vadd.xlane.f32.xlu0 %v2185
        %v2187 = vpop.xlane.xlu0 %2186
        %v2188 = vsel %vm1046, %v2178, 0.0
        %2189 = vadd.xlane.f32.xlu0 %v2188
        %v2190 = vpop.xlane.xlu0 %2189
        %v2191 = vrcp.pop %v2181
        %v2192 = vrcp.pop %v2184
        %v2193 = vrcp.pop %v2187
        %v2194 = vrcp.pop %v2190
        %v2195 = vmul.f32 %v2172, %v2191
        %v2196 = vmul.f32 %v2174, %v2192
        %v2197 = vmul.f32 %v2176, %v2193
        %v2198 = vmul.f32 %v2178, %v2194
        %2199 = vrot.lane.b32.xlu0 %v899, 104
        %v2200 = vpop.permute.xlu0 %2199
        %2201 = vrot.lane.b32.xlu0 %v905, 104
        %v2202 = vpop.permute.xlu0 %2201
        %2203 = vrot.lane.b32.xlu0 %v911, 104
        %v2204 = vpop.permute.xlu0 %2203
        %2205 = vrot.lane.b32.xlu0 %v917, 104
        %v2206 = vpop.permute.xlu0 %2205
        %v2211 = vsel %vm1036, %v2195, 0
        %v2214 = vsel %vm1036, %v2196, 0
        %v2217 = vsel %vm1036, %v2197, 0
        %v2220 = vsel %vm1036, %v2198, 0
        %v2222 = vsel %vm1094, %v2206, 0
        %2224 = vmatprep.subr.mxu0 0.0
        %2225 = vmatpush1.msra.mxu0 %v2200
        %2226 = vmatprep.subr.mxu0 0.0
        %2227 = vmatpush1.msra.mxu0 %v2202
        %2228 = vmatprep.subr.mxu0 0.0
        %2229 = vmatpush1.msra.mxu0 %v2204
        %2230 = vmatprep.subr.mxu0 0.0
        %2231 = vmatpush1.msra.mxu0 %v2222
        %2232 = vmatprep.subr.mxu0 0.0
        %2233 = vmatpush1.msra.mxu0 0.0
        %2234 = vmatprep.subr.mxu0 0.0
        %2235 = vmatpush1.msra.mxu0 0.0
        %2236 = vmatprep.subr.mxu0 0.0
        %2237 = vmatpush1.msra.mxu0 0.0
        %2238 = vmatprep.subr.mxu0 0.0
        %2239 = vmatpush1.msra.mxu0 0.0
        %2240 = vmatprep.subr.mxu0 0.0
        %2241 = vmatpush1.msra.mxu0 0.0
        %2242 = vmatprep.subr.mxu0 0.0
        %2243 = vmatpush1.msra.mxu0 0.0
        %2244 = vmatprep.subr.mxu0 0.0
        %2245 = vmatpush1.msra.mxu0 0.0
        %2246 = vmatprep.subr.mxu0 0.0
        %2247 = vmatpush1.msra.mxu0 0.0
        %2248 = vmatprep.subr.mxu0 0.0
        %2249 = vmatpush1.msra.mxu0 0.0
        %2250 = vmatprep.subr.mxu0 0.0
        %2251 = vmatpush1.msra.mxu0 0.0
        %2252 = vmatprep.subr.mxu0 0.0
        %2253 = vmatpush1.msra.mxu0 0.0
        %2254 = vmatprep.subr.mxu0 0.0
        %2255 = vmatpush1.msra.mxu0 0.0
        %2256 = vmatprep.subr.mxu0 0.0
        %2257 = vmatpush1.msra.mxu0 0.0
        %2258 = vmatprep.subr.mxu0 0.0
        %2259 = vmatpush1.msra.mxu0 0.0
        %2260 = vmatprep.subr.mxu0 0.0
        %2261 = vmatpush1.msra.mxu0 0.0
        %2262 = vmatprep.subr.mxu0 0.0
        %2263 = vmatpush1.msra.mxu0 0.0
        %2264 = vmatprep.subr.mxu0 0.0
        %2265 = vmatpush1.msra.mxu0 0.0
        %2266 = vmatprep.subr.mxu0 0.0
        %2267 = vmatpush1.msra.mxu0 0.0
        %2268 = vmatprep.subr.mxu0 0.0
        %2269 = vmatpush1.msra.mxu0 0.0
        %2270 = vmatprep.subr.mxu0 0.0
        %2271 = vmatpush1.msra.mxu0 0.0
        %2272 = vmatprep.subr.mxu0 0.0
        %2273 = vmatpush1.msra.mxu0 0.0
        %2274 = vmatprep.subr.mxu0 0.0
        %2275 = vmatpush1.msra.mxu0 0.0
        %2276 = vmatprep.subr.mxu0 0.0
        %2277 = vmatpush1.msra.mxu0 0.0
        %2278 = vmatprep.subr.mxu0 0.0
        %2279 = vmatpush1.msra.mxu0 0.0
        %2280 = vmatprep.subr.mxu0 0.0
        %2281 = vmatpush1.msra.mxu0 0.0
        %2282 = vmatprep.subr.mxu0 0.0
        %2283 = vmatpush1.msra.mxu0 0.0
        %2284 = vmatprep.subr.mxu0 0.0
        %2285 = vmatpush1.msra.mxu0 0.0
        %2286 = vmatprep.subr.mxu0 0.0
        %2287 = vmatpush1.msra.mxu0 0.0
        %2288 = vmatprep.mubr.f32.mxu0 0.0
        %2289 = vmatmul.mubr.f32.gmra.mrb[0].mxu0 %v2211
        %v2290 = vpop.f32.mrb[0].mxu0
        %v2291 = vadd.f32 0.0, %v2290
        %v2292 = vpop.f32.mrb[0].mxu0
        %2293 = vmatprep.mubr.f32.mxu0 0.0
        %2294 = vmatmul.mubr.f32.gmra.mrb[0].mxu0 %v2214
        %v2295 = vpop.f32.mrb[0].mxu0
        %v2296 = vadd.f32 0.0, %v2295
        %v2297 = vpop.f32.mrb[0].mxu0
        %2298 = vmatprep.mubr.f32.mxu0 0.0
        %2299 = vmatmul.mubr.f32.gmra.mrb[0].mxu0 %v2217
        %v2300 = vpop.f32.mrb[0].mxu0
        %v2301 = vadd.f32 0.0, %v2300
        %v2302 = vpop.f32.mrb[0].mxu0
        %2303 = vmatprep.mubr.f32.mxu0 0.0
        %2304 = vmatmul.mubr.f32.gmra.mrb[0].mxu0 %v2220
        %v2305 = vpop.f32.mrb[0].mxu0
        %v2306 = vadd.f32 0.0, %v2305
        %v2307 = vpop.f32.mrb[0].mxu0
        %2308 = vdwg.mxu0
        %v2309 = vld [vmem:[#allocation3 + $0x18] sm:$0xff]
        %v2311 = vsel %vm404, %v2291, 0
        %v2314 = vsel %vm404, %v2296, 0
        %v2317 = vsel %vm404, %v2301, 0
        %v2320 = vsel %vm404, %v2306, 0
        %2322 = vmatprep.subr.mxu0 0.0
        %2323 = vmatpush1.msra.mxu0 %v2309
        %2324 = vmatprep.subr.mxu0 0.0
        %2325 = vmatpush1.msra.mxu0 0.0
        %2326 = vmatprep.subr.mxu0 0.0
        %2327 = vmatpush1.msra.mxu0 0.0
        %2328 = vmatprep.subr.mxu0 0.0
        %2329 = vmatpush1.msra.mxu0 0.0
        %2330 = vmatprep.subr.mxu0 0.0
        %2331 = vmatpush1.msra.mxu0 0.0
        %2332 = vmatprep.subr.mxu0 0.0
        %2333 = vmatpush1.msra.mxu0 0.0
        %2334 = vmatprep.subr.mxu0 0.0
        %2335 = vmatpush1.msra.mxu0 0.0
        %2336 = vmatprep.subr.mxu0 0.0
        %2337 = vmatpush1.msra.mxu0 0.0
        %2338 = vmatprep.subr.mxu0 0.0
        %2339 = vmatpush1.msra.mxu0 0.0
        %2340 = vmatprep.subr.mxu0 0.0
        %2341 = vmatpush1.msra.mxu0 0.0
        %2342 = vmatprep.subr.mxu0 0.0
        %2343 = vmatpush1.msra.mxu0 0.0
        %2344 = vmatprep.subr.mxu0 0.0
        %2345 = vmatpush1.msra.mxu0 0.0
        %2346 = vmatprep.subr.mxu0 0.0
        %2347 = vmatpush1.msra.mxu0 0.0
        %2348 = vmatprep.subr.mxu0 0.0
        %2349 = vmatpush1.msra.mxu0 0.0
        %2350 = vmatprep.subr.mxu0 0.0
        %2351 = vmatpush1.msra.mxu0 0.0
        %2352 = vmatprep.subr.mxu0 0.0
        %2353 = vmatpush1.msra.mxu0 0.0
        %2354 = vmatprep.subr.mxu0 0.0
        %2355 = vmatpush1.msra.mxu0 0.0
        %2356 = vmatprep.subr.mxu0 0.0
        %2357 = vmatpush1.msra.mxu0 0.0
        %2358 = vmatprep.subr.mxu0 0.0
        %2359 = vmatpush1.msra.mxu0 0.0
        %2360 = vmatprep.subr.mxu0 0.0
        %2361 = vmatpush1.msra.mxu0 0.0
        %2362 = vmatprep.subr.mxu0 0.0
        %2363 = vmatpush1.msra.mxu0 0.0
        %2364 = vmatprep.subr.mxu0 0.0
        %2365 = vmatpush1.msra.mxu0 0.0
        %2366 = vmatprep.subr.mxu0 0.0
        %2367 = vmatpush1.msra.mxu0 0.0
        %2368 = vmatprep.subr.mxu0 0.0
        %2369 = vmatpush1.msra.mxu0 0.0
        %2370 = vmatprep.subr.mxu0 0.0
        %2371 = vmatpush1.msra.mxu0 0.0
        %2372 = vmatprep.subr.mxu0 0.0
        %2373 = vmatpush1.msra.mxu0 0.0
        %2374 = vmatprep.subr.mxu0 0.0
        %2375 = vmatpush1.msra.mxu0 0.0
        %2376 = vmatprep.subr.mxu0 0.0
        %2377 = vmatpush1.msra.mxu0 0.0
        %2378 = vmatprep.subr.mxu0 0.0
        %2379 = vmatpush1.msra.mxu0 0.0
        %2380 = vmatprep.subr.mxu0 0.0
        %2381 = vmatpush1.msra.mxu0 0.0
        %2382 = vmatprep.subr.mxu0 0.0
        %2383 = vmatpush1.msra.mxu0 0.0
        %2384 = vmatprep.subr.mxu0 0.0
        %2385 = vmatpush1.msra.mxu0 0.0
        %2386 = vmatprep.mubr.f32.mxu0 0.0
        %2387 = vmatmul.mubr.f32.gmra.mrb[0].mxu0 %v2311
        %v2388 = vpop.f32.mrb[0].mxu0
        %v2389 = vadd.f32 0.0, %v2388
        %v2390 = vpop.f32.mrb[0].mxu0
        %2391 = vmatprep.mubr.f32.mxu0 0.0
        %2392 = vmatmul.mubr.f32.gmra.mrb[0].mxu0 %v2314
        %v2393 = vpop.f32.mrb[0].mxu0
        %v2394 = vadd.f32 0.0, %v2393
        %v2395 = vpop.f32.mrb[0].mxu0
        %2396 = vmatprep.mubr.f32.mxu0 0.0
        %2397 = vmatmul.mubr.f32.gmra.mrb[0].mxu0 %v2317
        %v2398 = vpop.f32.mrb[0].mxu0
        %v2399 = vadd.f32 0.0, %v2398
        %v2400 = vpop.f32.mrb[0].mxu0
        %2401 = vmatprep.mubr.f32.mxu0 0.0
        %2402 = vmatmul.mubr.f32.gmra.mrb[0].mxu0 %v2320
        %v2403 = vpop.f32.mrb[0].mxu0
        %v2404 = vadd.f32 0.0, %v2403
        %v2405 = vpop.f32.mrb[0].mxu0
        %2406 = vdwg.mxu0
        %v2407 = vadd.f32 %v2030, %v2389
        %v2408 = vadd.f32 %v2031, %v2394
        %v2409 = vadd.f32 %v2032, %v2399
        %v2410 = vadd.f32 %v2033, %v2404
        %2411 = vrot.lane.b32.xlu0 %v897, 96
        %v2412 = vpop.permute.xlu0 %2411
        %2413 = vrot.lane.b32.xlu0 %v903, 96
        %v2414 = vpop.permute.xlu0 %2413
        %2415 = vrot.lane.b32.xlu0 %v909, 96
        %v2416 = vpop.permute.xlu0 %2415
        %2417 = vrot.lane.b32.xlu0 %v915, 96
        %v2418 = vpop.permute.xlu0 %2417
        %2419 = vrot.lane.b32.xlu0 %v897, 32
        %v2420 = vpop.permute.xlu0 %2419
        %2421 = vrot.lane.b32.xlu0 %v903, 32
        %v2422 = vpop.permute.xlu0 %2421
        %2423 = vrot.lane.b32.xlu0 %v909, 32
        %v2424 = vpop.permute.xlu0 %2423
        %2425 = vrot.lane.b32.xlu0 %v915, 32
        %v2426 = vpop.permute.xlu0 %2425
        %v2427 = vsel %vm404, %v2412, 0
        %v2429 = vsel %vm404, %v2414, 0
        %v2431 = vsel %vm404, %v2416, 0
        %v2433 = vsel %vm404, %v2418, 0
        %v2435 = vsel %vm404, %v2420, 0
        %v2437 = vsel %vm404, %v2422, 0
        %v2439 = vsel %vm404, %v2424, 0
        %v2441 = vsel %vm404, %v2426, 0
        %2443 = vmatprep.subr.mxu0 0.0
        %2444 = vmatpush1.xpose.msra.mxu0 %v2435
        %2445 = vmatprep.subr.mxu0 0.0
        %2446 = vmatpush1.xpose.msra.mxu0 %v2437
        %2447 = vmatprep.subr.mxu0 0.0
        %2448 = vmatpush1.xpose.msra.mxu0 %v2439
        %2449 = vmatprep.subr.mxu0 0.0
        %2450 = vmatpush1.xpose.msra.mxu0 %v2441
        %2451 = vmatprep.subr.mxu0 0.0
        %2452 = vmatpush1.xpose.msra.mxu0 0.0
        %2453 = vmatprep.subr.mxu0 0.0
        %2454 = vmatpush1.xpose.msra.mxu0 0.0
        %2455 = vmatprep.subr.mxu0 0.0
        %2456 = vmatpush1.xpose.msra.mxu0 0.0
        %2457 = vmatprep.subr.mxu0 0.0
        %2458 = vmatpush1.xpose.msra.mxu0 0.0
        %2459 = vmatprep.subr.mxu0 0.0
        %2460 = vmatpush1.xpose.msra.mxu0 0.0
        %2461 = vmatprep.subr.mxu0 0.0
        %2462 = vmatpush1.xpose.msra.mxu0 0.0
        %2463 = vmatprep.subr.mxu0 0.0
        %2464 = vmatpush1.xpose.msra.mxu0 0.0
        %2465 = vmatprep.subr.mxu0 0.0
        %2466 = vmatpush1.xpose.msra.mxu0 0.0
        %2467 = vmatprep.subr.mxu0 0.0
        %2468 = vmatpush1.xpose.msra.mxu0 0.0
        %2469 = vmatprep.subr.mxu0 0.0
        %2470 = vmatpush1.xpose.msra.mxu0 0.0
        %2471 = vmatprep.subr.mxu0 0.0
        %2472 = vmatpush1.xpose.msra.mxu0 0.0
        %2473 = vmatprep.subr.mxu0 0.0
        %2474 = vmatpush1.xpose.msra.mxu0 0.0
        %2475 = vmatprep.subr.mxu0 0.0
        %2476 = vmatpush1.xpose.msra.mxu0 0.0
        %2477 = vmatprep.subr.mxu0 0.0
        %2478 = vmatpush1.xpose.msra.mxu0 0.0
        %2479 = vmatprep.subr.mxu0 0.0
        %2480 = vmatpush1.xpose.msra.mxu0 0.0
        %2481 = vmatprep.subr.mxu0 0.0
        %2482 = vmatpush1.xpose.msra.mxu0 0.0
        %2483 = vmatprep.subr.mxu0 0.0
        %2484 = vmatpush1.xpose.msra.mxu0 0.0
        %2485 = vmatprep.subr.mxu0 0.0
        %2486 = vmatpush1.xpose.msra.mxu0 0.0
        %2487 = vmatprep.subr.mxu0 0.0
        %2488 = vmatpush1.xpose.msra.mxu0 0.0
        %2489 = vmatprep.subr.mxu0 0.0
        %2490 = vmatpush1.xpose.msra.mxu0 0.0
        %2491 = vmatprep.subr.mxu0 0.0
        %2492 = vmatpush1.xpose.msra.mxu0 0.0
        %2493 = vmatprep.subr.mxu0 0.0
        %2494 = vmatpush1.xpose.msra.mxu0 0.0
        %2495 = vmatprep.subr.mxu0 0.0
        %2496 = vmatpush1.xpose.msra.mxu0 0.0
        %2497 = vmatprep.subr.mxu0 0.0
        %2498 = vmatpush1.xpose.msra.mxu0 0.0
        %2499 = vmatprep.subr.mxu0 0.0
        %2500 = vmatpush1.xpose.msra.mxu0 0.0
        %2501 = vmatprep.subr.mxu0 0.0
        %2502 = vmatpush1.xpose.msra.mxu0 0.0
        %2503 = vmatprep.subr.mxu0 0.0
        %2504 = vmatpush1.xpose.msra.mxu0 0.0
        %2505 = vmatprep.subr.mxu0 0.0
        %2506 = vmatpush1.xpose.msra.mxu0 0.0
        %2507 = vmatprep.mubr.f32.mxu0 0.0
        %2508 = vmatmul.mubr.f32.gmra.mrb[0].mxu0 %v2427
        %v2509 = vpop.f32.mrb[0].mxu0
        %v2510 = vadd.f32 0.0, %v2509
        %v2511 = vpop.f32.mrb[0].mxu0
        %2512 = vmatprep.mubr.f32.mxu0 0.0
        %2513 = vmatmul.mubr.f32.gmra.mrb[0].mxu0 %v2429
        %v2514 = vpop.f32.mrb[0].mxu0
        %v2515 = vadd.f32 0.0, %v2514
        %v2516 = vpop.f32.mrb[0].mxu0
        %2517 = vmatprep.mubr.f32.mxu0 0.0
        %2518 = vmatmul.mubr.f32.gmra.mrb[0].mxu0 %v2431
        %v2519 = vpop.f32.mrb[0].mxu0
        %v2520 = vadd.f32 0.0, %v2519
        %v2521 = vpop.f32.mrb[0].mxu0
        %2522 = vmatprep.mubr.f32.mxu0 0.0
        %2523 = vmatmul.mubr.f32.gmra.mrb[0].mxu0 %v2433
        %v2524 = vpop.f32.mrb[0].mxu0
        %v2525 = vadd.f32 0.0, %v2524
        %v2526 = vpop.f32.mrb[0].mxu0
        %2527 = vdwg.mxu0
        %v2528 = vmul.f32 %v2510, 0.35355338
        %v2529 = vmul.f32 %v2515, 0.35355338
        %v2530 = vmul.f32 %v2520, 0.35355338
        %v2531 = vmul.f32 %v2525, 0.35355338
        %v2532 = vsel %vm1036, %v2528, -inf
        %2533 = vmax.xlane.f32.xlu0 %v2532
        %v2534 = vpop.xlane.xlu0 %2533
        %v2535 = vsel %vm1036, %v2529, -inf
        %2536 = vmax.xlane.f32.xlu0 %v2535
        %v2537 = vpop.xlane.xlu0 %2536
        %v2538 = vsel %vm1036, %v2530, -inf
        %2539 = vmax.xlane.f32.xlu0 %v2538
        %v2540 = vpop.xlane.xlu0 %2539
        %v2541 = vsel %vm1046, %v2531, -inf
        %2542 = vmax.xlane.f32.xlu0 %v2541
        %v2543 = vpop.xlane.xlu0 %2542
        %v2544 = vsub.f32 %v2528, %v2534
        %v2545 = vsub.f32 %v2529, %v2537
        %v2546 = vsub.f32 %v2530, %v2540
        %v2547 = vsub.f32 %v2531, %v2543
        %v2548 = vmul.f32 %v2544, 1.442695
        %v2549 = vpow.pop %v2548
        %v2550 = vmul.f32 %v2545, 1.442695
        %v2551 = vpow.pop %v2550
        %v2552 = vmul.f32 %v2546, 1.442695
        %v2553 = vpow.pop %v2552
        %v2554 = vmul.f32 %v2547, 1.442695
        %v2555 = vpow.pop %v2554
        %v2556 = vsel %vm1036, %v2549, 0.0
        %2557 = vadd.xlane.f32.xlu0 %v2556
        %v2558 = vpop.xlane.xlu0 %2557
        %v2559 = vsel %vm1036, %v2551, 0.0
        %2560 = vadd.xlane.f32.xlu0 %v2559
        %v2561 = vpop.xlane.xlu0 %2560
        %v2562 = vsel %vm1036, %v2553, 0.0
        %2563 = vadd.xlane.f32.xlu0 %v2562
        %v2564 = vpop.xlane.xlu0 %2563
        %v2565 = vsel %vm1046, %v2555, 0.0
        %2566 = vadd.xlane.f32.xlu0 %v2565
        %v2567 = vpop.xlane.xlu0 %2566
        %v2568 = vrcp.pop %v2558
        %v2569 = vrcp.pop %v2561
        %v2570 = vrcp.pop %v2564
        %v2571 = vrcp.pop %v2567
        %v2572 = vmul.f32 %v2549, %v2568
        %v2573 = vmul.f32 %v2551, %v2569
        %v2574 = vmul.f32 %v2553, %v2570
        %v2575 = vmul.f32 %v2555, %v2571
        %2576 = vrot.lane.b32.xlu0 %v899, 96
        %v2577 = vpop.permute.xlu0 %2576
        %2578 = vrot.lane.b32.xlu0 %v905, 96
        %v2579 = vpop.permute.xlu0 %2578
        %2580 = vrot.lane.b32.xlu0 %v911, 96
        %v2581 = vpop.permute.xlu0 %2580
        %2582 = vrot.lane.b32.xlu0 %v917, 96
        %v2583 = vpop.permute.xlu0 %2582
        %v2588 = vsel %vm1036, %v2572, 0
        %v2591 = vsel %vm1036, %v2573, 0
        %v2594 = vsel %vm1036, %v2574, 0
        %v2597 = vsel %vm1036, %v2575, 0
        %v2599 = vsel %vm1094, %v2583, 0
        %2601 = vmatprep.subr.mxu0 0.0
        %2602 = vmatpush1.msra.mxu0 %v2577
        %2603 = vmatprep.subr.mxu0 0.0
        %2604 = vmatpush1.msra.mxu0 %v2579
        %2605 = vmatprep.subr.mxu0 0.0
        %2606 = vmatpush1.msra.mxu0 %v2581
        %2607 = vmatprep.subr.mxu0 0.0
        %2608 = vmatpush1.msra.mxu0 %v2599
        %2609 = vmatprep.subr.mxu0 0.0
        %2610 = vmatpush1.msra.mxu0 0.0
        %2611 = vmatprep.subr.mxu0 0.0
        %2612 = vmatpush1.msra.mxu0 0.0
        %2613 = vmatprep.subr.mxu0 0.0
        %2614 = vmatpush1.msra.mxu0 0.0
        %2615 = vmatprep.subr.mxu0 0.0
        %2616 = vmatpush1.msra.mxu0 0.0
        %2617 = vmatprep.subr.mxu0 0.0
        %2618 = vmatpush1.msra.mxu0 0.0
        %2619 = vmatprep.subr.mxu0 0.0
        %2620 = vmatpush1.msra.mxu0 0.0
        %2621 = vmatprep.subr.mxu0 0.0
        %2622 = vmatpush1.msra.mxu0 0.0
        %2623 = vmatprep.subr.mxu0 0.0
        %2624 = vmatpush1.msra.mxu0 0.0
        %2625 = vmatprep.subr.mxu0 0.0
        %2626 = vmatpush1.msra.mxu0 0.0
        %2627 = vmatprep.subr.mxu0 0.0
        %2628 = vmatpush1.msra.mxu0 0.0
        %2629 = vmatprep.subr.mxu0 0.0
        %2630 = vmatpush1.msra.mxu0 0.0
        %2631 = vmatprep.subr.mxu0 0.0
        %2632 = vmatpush1.msra.mxu0 0.0
        %2633 = vmatprep.subr.mxu0 0.0
        %2634 = vmatpush1.msra.mxu0 0.0
        %2635 = vmatprep.subr.mxu0 0.0
        %2636 = vmatpush1.msra.mxu0 0.0
        %2637 = vmatprep.subr.mxu0 0.0
        %2638 = vmatpush1.msra.mxu0 0.0
        %2639 = vmatprep.subr.mxu0 0.0
        %2640 = vmatpush1.msra.mxu0 0.0
        %2641 = vmatprep.subr.mxu0 0.0
        %2642 = vmatpush1.msra.mxu0 0.0
        %2643 = vmatprep.subr.mxu0 0.0
        %2644 = vmatpush1.msra.mxu0 0.0
        %2645 = vmatprep.subr.mxu0 0.0
        %2646 = vmatpush1.msra.mxu0 0.0
        %2647 = vmatprep.subr.mxu0 0.0
        %2648 = vmatpush1.msra.mxu0 0.0
        %2649 = vmatprep.subr.mxu0 0.0
        %2650 = vmatpush1.msra.mxu0 0.0
        %2651 = vmatprep.subr.mxu0 0.0
        %2652 = vmatpush1.msra.mxu0 0.0
        %2653 = vmatprep.subr.mxu0 0.0
        %2654 = vmatpush1.msra.mxu0 0.0
        %2655 = vmatprep.subr.mxu0 0.0
        %2656 = vmatpush1.msra.mxu0 0.0
        %2657 = vmatprep.subr.mxu0 0.0
        %2658 = vmatpush1.msra.mxu0 0.0
        %2659 = vmatprep.subr.mxu0 0.0
        %2660 = vmatpush1.msra.mxu0 0.0
        %2661 = vmatprep.subr.mxu0 0.0
        %2662 = vmatpush1.msra.mxu0 0.0
        %2663 = vmatprep.subr.mxu0 0.0
        %2664 = vmatpush1.msra.mxu0 0.0
        %2665 = vmatprep.mubr.f32.mxu0 0.0
        %2666 = vmatmul.mubr.f32.gmra.mrb[0].mxu0 %v2588
        %v2667 = vpop.f32.mrb[0].mxu0
        %v2668 = vadd.f32 0.0, %v2667
        %v2669 = vpop.f32.mrb[0].mxu0
        %2670 = vmatprep.mubr.f32.mxu0 0.0
        %2671 = vmatmul.mubr.f32.gmra.mrb[0].mxu0 %v2591
        %v2672 = vpop.f32.mrb[0].mxu0
        %v2673 = vadd.f32 0.0, %v2672
        %v2674 = vpop.f32.mrb[0].mxu0
        %2675 = vmatprep.mubr.f32.mxu0 0.0
        %2676 = vmatmul.mubr.f32.gmra.mrb[0].mxu0 %v2594
        %v2677 = vpop.f32.mrb[0].mxu0
        %v2678 = vadd.f32 0.0, %v2677
        %v2679 = vpop.f32.mrb[0].mxu0
        %2680 = vmatprep.mubr.f32.mxu0 0.0
        %2681 = vmatmul.mubr.f32.gmra.mrb[0].mxu0 %v2597
        %v2682 = vpop.f32.mrb[0].mxu0
        %v2683 = vadd.f32 0.0, %v2682
        %v2684 = vpop.f32.mrb[0].mxu0
        %2685 = vdwg.mxu0
        %v2686 = vld [vmem:[#allocation3 + $0x20] sm:$0xff]
        %v2688 = vsel %vm404, %v2668, 0
        %v2691 = vsel %vm404, %v2673, 0
        %v2694 = vsel %vm404, %v2678, 0
        %v2697 = vsel %vm404, %v2683, 0
        %2699 = vmatprep.subr.mxu0 0.0
        %2700 = vmatpush1.msra.mxu0 %v2686
        %2701 = vmatprep.subr.mxu0 0.0
        %2702 = vmatpush1.msra.mxu0 0.0
        %2703 = vmatprep.subr.mxu0 0.0
        %2704 = vmatpush1.msra.mxu0 0.0
        %2705 = vmatprep.subr.mxu0 0.0
        %2706 = vmatpush1.msra.mxu0 0.0
        %2707 = vmatprep.subr.mxu0 0.0
        %2708 = vmatpush1.msra.mxu0 0.0
        %2709 = vmatprep.subr.mxu0 0.0
        %2710 = vmatpush1.msra.mxu0 0.0
        %2711 = vmatprep.subr.mxu0 0.0
        %2712 = vmatpush1.msra.mxu0 0.0
        %2713 = vmatprep.subr.mxu0 0.0
        %2714 = vmatpush1.msra.mxu0 0.0
        %2715 = vmatprep.subr.mxu0 0.0
        %2716 = vmatpush1.msra.mxu0 0.0
        %2717 = vmatprep.subr.mxu0 0.0
        %2718 = vmatpush1.msra.mxu0 0.0
        %2719 = vmatprep.subr.mxu0 0.0
        %2720 = vmatpush1.msra.mxu0 0.0
        %2721 = vmatprep.subr.mxu0 0.0
        %2722 = vmatpush1.msra.mxu0 0.0
        %2723 = vmatprep.subr.mxu0 0.0
        %2724 = vmatpush1.msra.mxu0 0.0
        %2725 = vmatprep.subr.mxu0 0.0
        %2726 = vmatpush1.msra.mxu0 0.0
        %2727 = vmatprep.subr.mxu0 0.0
        %2728 = vmatpush1.msra.mxu0 0.0
        %2729 = vmatprep.subr.mxu0 0.0
        %2730 = vmatpush1.msra.mxu0 0.0
        %2731 = vmatprep.subr.mxu0 0.0
        %2732 = vmatpush1.msra.mxu0 0.0
        %2733 = vmatprep.subr.mxu0 0.0
        %2734 = vmatpush1.msra.mxu0 0.0
        %2735 = vmatprep.subr.mxu0 0.0
        %2736 = vmatpush1.msra.mxu0 0.0
        %2737 = vmatprep.subr.mxu0 0.0
        %2738 = vmatpush1.msra.mxu0 0.0
        %2739 = vmatprep.subr.mxu0 0.0
        %2740 = vmatpush1.msra.mxu0 0.0
        %2741 = vmatprep.subr.mxu0 0.0
        %2742 = vmatpush1.msra.mxu0 0.0
        %2743 = vmatprep.subr.mxu0 0.0
        %2744 = vmatpush1.msra.mxu0 0.0
        %2745 = vmatprep.subr.mxu0 0.0
        %2746 = vmatpush1.msra.mxu0 0.0
        %2747 = vmatprep.subr.mxu0 0.0
        %2748 = vmatpush1.msra.mxu0 0.0
        %2749 = vmatprep.subr.mxu0 0.0
        %2750 = vmatpush1.msra.mxu0 0.0
        %2751 = vmatprep.subr.mxu0 0.0
        %2752 = vmatpush1.msra.mxu0 0.0
        %2753 = vmatprep.subr.mxu0 0.0
        %2754 = vmatpush1.msra.mxu0 0.0
        %2755 = vmatprep.subr.mxu0 0.0
        %2756 = vmatpush1.msra.mxu0 0.0
        %2757 = vmatprep.subr.mxu0 0.0
        %2758 = vmatpush1.msra.mxu0 0.0
        %2759 = vmatprep.subr.mxu0 0.0
        %2760 = vmatpush1.msra.mxu0 0.0
        %2761 = vmatprep.subr.mxu0 0.0
        %2762 = vmatpush1.msra.mxu0 0.0
        %2763 = vmatprep.mubr.f32.mxu0 0.0
        %2764 = vmatmul.mubr.f32.gmra.mrb[0].mxu0 %v2688
        %v2765 = vpop.f32.mrb[0].mxu0
        %v2766 = vadd.f32 0.0, %v2765
        %v2767 = vpop.f32.mrb[0].mxu0
        %2768 = vmatprep.mubr.f32.mxu0 0.0
        %2769 = vmatmul.mubr.f32.gmra.mrb[0].mxu0 %v2691
        %v2770 = vpop.f32.mrb[0].mxu0
        %v2771 = vadd.f32 0.0, %v2770
        %v2772 = vpop.f32.mrb[0].mxu0
        %2773 = vmatprep.mubr.f32.mxu0 0.0
        %2774 = vmatmul.mubr.f32.gmra.mrb[0].mxu0 %v2694
        %v2775 = vpop.f32.mrb[0].mxu0
        %v2776 = vadd.f32 0.0, %v2775
        %v2777 = vpop.f32.mrb[0].mxu0
        %2778 = vmatprep.mubr.f32.mxu0 0.0
        %2779 = vmatmul.mubr.f32.gmra.mrb[0].mxu0 %v2697
        %v2780 = vpop.f32.mrb[0].mxu0
        %v2781 = vadd.f32 0.0, %v2780
        %v2782 = vpop.f32.mrb[0].mxu0
        %2783 = vdwg.mxu0
        %v2784 = vadd.f32 %v2407, %v2766
        %v2785 = vadd.f32 %v2408, %v2771
        %v2786 = vadd.f32 %v2409, %v2776
        %v2787 = vadd.f32 %v2410, %v2781
        %2788 = vrot.lane.b32.xlu0 %v897, 88
        %v2789 = vpop.permute.xlu0 %2788
        %2790 = vrot.lane.b32.xlu0 %v903, 88
        %v2791 = vpop.permute.xlu0 %2790
        %2792 = vrot.lane.b32.xlu0 %v909, 88
        %v2793 = vpop.permute.xlu0 %2792
        %2794 = vrot.lane.b32.xlu0 %v915, 88
        %v2795 = vpop.permute.xlu0 %2794
        %2796 = vrot.lane.b32.xlu0 %v897, 24
        %v2797 = vpop.permute.xlu0 %2796
        %2798 = vrot.lane.b32.xlu0 %v903, 24
        %v2799 = vpop.permute.xlu0 %2798
        %2800 = vrot.lane.b32.xlu0 %v909, 24
        %v2801 = vpop.permute.xlu0 %2800
        %2802 = vrot.lane.b32.xlu0 %v915, 24
        %v2803 = vpop.permute.xlu0 %2802
        %v2804 = vsel %vm404, %v2789, 0
        %v2806 = vsel %vm404, %v2791, 0
        %v2808 = vsel %vm404, %v2793, 0
        %v2810 = vsel %vm404, %v2795, 0
        %v2812 = vsel %vm404, %v2797, 0
        %v2814 = vsel %vm404, %v2799, 0
        %v2816 = vsel %vm404, %v2801, 0
        %v2818 = vsel %vm404, %v2803, 0
        %2820 = vmatprep.subr.mxu0 0.0
        %2821 = vmatpush1.xpose.msra.mxu0 %v2812
        %2822 = vmatprep.subr.mxu0 0.0
        %2823 = vmatpush1.xpose.msra.mxu0 %v2814
        %2824 = vmatprep.subr.mxu0 0.0
        %2825 = vmatpush1.xpose.msra.mxu0 %v2816
        %2826 = vmatprep.subr.mxu0 0.0
        %2827 = vmatpush1.xpose.msra.mxu0 %v2818
        %2828 = vmatprep.subr.mxu0 0.0
        %2829 = vmatpush1.xpose.msra.mxu0 0.0
        %2830 = vmatprep.subr.mxu0 0.0
        %2831 = vmatpush1.xpose.msra.mxu0 0.0
        %2832 = vmatprep.subr.mxu0 0.0
        %2833 = vmatpush1.xpose.msra.mxu0 0.0
        %2834 = vmatprep.subr.mxu0 0.0
        %2835 = vmatpush1.xpose.msra.mxu0 0.0
        %2836 = vmatprep.subr.mxu0 0.0
        %2837 = vmatpush1.xpose.msra.mxu0 0.0
        %2838 = vmatprep.subr.mxu0 0.0
        %2839 = vmatpush1.xpose.msra.mxu0 0.0
        %2840 = vmatprep.subr.mxu0 0.0
        %2841 = vmatpush1.xpose.msra.mxu0 0.0
        %2842 = vmatprep.subr.mxu0 0.0
        %2843 = vmatpush1.xpose.msra.mxu0 0.0
        %2844 = vmatprep.subr.mxu0 0.0
        %2845 = vmatpush1.xpose.msra.mxu0 0.0
        %2846 = vmatprep.subr.mxu0 0.0
        %2847 = vmatpush1.xpose.msra.mxu0 0.0
        %2848 = vmatprep.subr.mxu0 0.0
        %2849 = vmatpush1.xpose.msra.mxu0 0.0
        %2850 = vmatprep.subr.mxu0 0.0
        %2851 = vmatpush1.xpose.msra.mxu0 0.0
        %2852 = vmatprep.subr.mxu0 0.0
        %2853 = vmatpush1.xpose.msra.mxu0 0.0
        %2854 = vmatprep.subr.mxu0 0.0
        %2855 = vmatpush1.xpose.msra.mxu0 0.0
        %2856 = vmatprep.subr.mxu0 0.0
        %2857 = vmatpush1.xpose.msra.mxu0 0.0
        %2858 = vmatprep.subr.mxu0 0.0
        %2859 = vmatpush1.xpose.msra.mxu0 0.0
        %2860 = vmatprep.subr.mxu0 0.0
        %2861 = vmatpush1.xpose.msra.mxu0 0.0
        %2862 = vmatprep.subr.mxu0 0.0
        %2863 = vmatpush1.xpose.msra.mxu0 0.0
        %2864 = vmatprep.subr.mxu0 0.0
        %2865 = vmatpush1.xpose.msra.mxu0 0.0
        %2866 = vmatprep.subr.mxu0 0.0
        %2867 = vmatpush1.xpose.msra.mxu0 0.0
        %2868 = vmatprep.subr.mxu0 0.0
        %2869 = vmatpush1.xpose.msra.mxu0 0.0
        %2870 = vmatprep.subr.mxu0 0.0
        %2871 = vmatpush1.xpose.msra.mxu0 0.0
        %2872 = vmatprep.subr.mxu0 0.0
        %2873 = vmatpush1.xpose.msra.mxu0 0.0
        %2874 = vmatprep.subr.mxu0 0.0
        %2875 = vmatpush1.xpose.msra.mxu0 0.0
        %2876 = vmatprep.subr.mxu0 0.0
        %2877 = vmatpush1.xpose.msra.mxu0 0.0
        %2878 = vmatprep.subr.mxu0 0.0
        %2879 = vmatpush1.xpose.msra.mxu0 0.0
        %2880 = vmatprep.subr.mxu0 0.0
        %2881 = vmatpush1.xpose.msra.mxu0 0.0
        %2882 = vmatprep.subr.mxu0 0.0
        %2883 = vmatpush1.xpose.msra.mxu0 0.0
        %2884 = vmatprep.mubr.f32.mxu0 0.0
        %2885 = vmatmul.mubr.f32.gmra.mrb[0].mxu0 %v2804
        %v2886 = vpop.f32.mrb[0].mxu0
        %v2887 = vadd.f32 0.0, %v2886
        %v2888 = vpop.f32.mrb[0].mxu0
        %2889 = vmatprep.mubr.f32.mxu0 0.0
        %2890 = vmatmul.mubr.f32.gmra.mrb[0].mxu0 %v2806
        %v2891 = vpop.f32.mrb[0].mxu0
        %v2892 = vadd.f32 0.0, %v2891
        %v2893 = vpop.f32.mrb[0].mxu0
        %2894 = vmatprep.mubr.f32.mxu0 0.0
        %2895 = vmatmul.mubr.f32.gmra.mrb[0].mxu0 %v2808
        %v2896 = vpop.f32.mrb[0].mxu0
        %v2897 = vadd.f32 0.0, %v2896
        %v2898 = vpop.f32.mrb[0].mxu0
        %2899 = vmatprep.mubr.f32.mxu0 0.0
        %2900 = vmatmul.mubr.f32.gmra.mrb[0].mxu0 %v2810
        %v2901 = vpop.f32.mrb[0].mxu0
        %v2902 = vadd.f32 0.0, %v2901
        %v2903 = vpop.f32.mrb[0].mxu0
        %2904 = vdwg.mxu0
        %v2905 = vmul.f32 %v2887, 0.35355338
        %v2906 = vmul.f32 %v2892, 0.35355338
        %v2907 = vmul.f32 %v2897, 0.35355338
        %v2908 = vmul.f32 %v2902, 0.35355338
        %v2909 = vsel %vm1036, %v2905, -inf
        %2910 = vmax.xlane.f32.xlu0 %v2909
        %v2911 = vpop.xlane.xlu0 %2910
        %v2912 = vsel %vm1036, %v2906, -inf
        %2913 = vmax.xlane.f32.xlu0 %v2912
        %v2914 = vpop.xlane.xlu0 %2913
        %v2915 = vsel %vm1036, %v2907, -inf
        %2916 = vmax.xlane.f32.xlu0 %v2915
        %v2917 = vpop.xlane.xlu0 %2916
        %v2918 = vsel %vm1046, %v2908, -inf
        %2919 = vmax.xlane.f32.xlu0 %v2918
        %v2920 = vpop.xlane.xlu0 %2919
        %v2921 = vsub.f32 %v2905, %v2911
        %v2922 = vsub.f32 %v2906, %v2914
        %v2923 = vsub.f32 %v2907, %v2917
        %v2924 = vsub.f32 %v2908, %v2920
        %v2925 = vmul.f32 %v2921, 1.442695
        %v2926 = vpow.pop %v2925
        %v2927 = vmul.f32 %v2922, 1.442695
        %v2928 = vpow.pop %v2927
        %v2929 = vmul.f32 %v2923, 1.442695
        %v2930 = vpow.pop %v2929
        %v2931 = vmul.f32 %v2924, 1.442695
        %v2932 = vpow.pop %v2931
        %v2933 = vsel %vm1036, %v2926, 0.0
        %2934 = vadd.xlane.f32.xlu0 %v2933
        %v2935 = vpop.xlane.xlu0 %2934
        %v2936 = vsel %vm1036, %v2928, 0.0
        %2937 = vadd.xlane.f32.xlu0 %v2936
        %v2938 = vpop.xlane.xlu0 %2937
        %v2939 = vsel %vm1036, %v2930, 0.0
        %2940 = vadd.xlane.f32.xlu0 %v2939
        %v2941 = vpop.xlane.xlu0 %2940
        %v2942 = vsel %vm1046, %v2932, 0.0
        %2943 = vadd.xlane.f32.xlu0 %v2942
        %v2944 = vpop.xlane.xlu0 %2943
        %v2945 = vrcp.pop %v2935
        %v2946 = vrcp.pop %v2938
        %v2947 = vrcp.pop %v2941
        %v2948 = vrcp.pop %v2944
        %v2949 = vmul.f32 %v2926, %v2945
        %v2950 = vmul.f32 %v2928, %v2946
        %v2951 = vmul.f32 %v2930, %v2947
        %v2952 = vmul.f32 %v2932, %v2948
        %2953 = vrot.lane.b32.xlu0 %v899, 88
        %v2954 = vpop.permute.xlu0 %2953
        %2955 = vrot.lane.b32.xlu0 %v905, 88
        %v2956 = vpop.permute.xlu0 %2955
        %2957 = vrot.lane.b32.xlu0 %v911, 88
        %v2958 = vpop.permute.xlu0 %2957
        %2959 = vrot.lane.b32.xlu0 %v917, 88
        %v2960 = vpop.permute.xlu0 %2959
        %v2965 = vsel %vm1036, %v2949, 0
        %v2968 = vsel %vm1036, %v2950, 0
        %v2971 = vsel %vm1036, %v2951, 0
        %v2974 = vsel %vm1036, %v2952, 0
        %v2976 = vsel %vm1094, %v2960, 0
        %2978 = vmatprep.subr.mxu0 0.0
        %2979 = vmatpush1.msra.mxu0 %v2954
        %2980 = vmatprep.subr.mxu0 0.0
        %2981 = vmatpush1.msra.mxu0 %v2956
        %2982 = vmatprep.subr.mxu0 0.0
        %2983 = vmatpush1.msra.mxu0 %v2958
        %2984 = vmatprep.subr.mxu0 0.0
        %2985 = vmatpush1.msra.mxu0 %v2976
        %2986 = vmatprep.subr.mxu0 0.0
        %2987 = vmatpush1.msra.mxu0 0.0
        %2988 = vmatprep.subr.mxu0 0.0
        %2989 = vmatpush1.msra.mxu0 0.0
        %2990 = vmatprep.subr.mxu0 0.0
        %2991 = vmatpush1.msra.mxu0 0.0
        %2992 = vmatprep.subr.mxu0 0.0
        %2993 = vmatpush1.msra.mxu0 0.0
        %2994 = vmatprep.subr.mxu0 0.0
        %2995 = vmatpush1.msra.mxu0 0.0
        %2996 = vmatprep.subr.mxu0 0.0
        %2997 = vmatpush1.msra.mxu0 0.0
        %2998 = vmatprep.subr.mxu0 0.0
        %2999 = vmatpush1.msra.mxu0 0.0
        %3000 = vmatprep.subr.mxu0 0.0
        %3001 = vmatpush1.msra.mxu0 0.0
        %3002 = vmatprep.subr.mxu0 0.0
        %3003 = vmatpush1.msra.mxu0 0.0
        %3004 = vmatprep.subr.mxu0 0.0
        %3005 = vmatpush1.msra.mxu0 0.0
        %3006 = vmatprep.subr.mxu0 0.0
        %3007 = vmatpush1.msra.mxu0 0.0
        %3008 = vmatprep.subr.mxu0 0.0
        %3009 = vmatpush1.msra.mxu0 0.0
        %3010 = vmatprep.subr.mxu0 0.0
        %3011 = vmatpush1.msra.mxu0 0.0
        %3012 = vmatprep.subr.mxu0 0.0
        %3013 = vmatpush1.msra.mxu0 0.0
        %3014 = vmatprep.subr.mxu0 0.0
        %3015 = vmatpush1.msra.mxu0 0.0
        %3016 = vmatprep.subr.mxu0 0.0
        %3017 = vmatpush1.msra.mxu0 0.0
        %3018 = vmatprep.subr.mxu0 0.0
        %3019 = vmatpush1.msra.mxu0 0.0
        %3020 = vmatprep.subr.mxu0 0.0
        %3021 = vmatpush1.msra.mxu0 0.0
        %3022 = vmatprep.subr.mxu0 0.0
        %3023 = vmatpush1.msra.mxu0 0.0
        %3024 = vmatprep.subr.mxu0 0.0
        %3025 = vmatpush1.msra.mxu0 0.0
        %3026 = vmatprep.subr.mxu0 0.0
        %3027 = vmatpush1.msra.mxu0 0.0
        %3028 = vmatprep.subr.mxu0 0.0
        %3029 = vmatpush1.msra.mxu0 0.0
        %3030 = vmatprep.subr.mxu0 0.0
        %3031 = vmatpush1.msra.mxu0 0.0
        %3032 = vmatprep.subr.mxu0 0.0
        %3033 = vmatpush1.msra.mxu0 0.0
        %3034 = vmatprep.subr.mxu0 0.0
        %3035 = vmatpush1.msra.mxu0 0.0
        %3036 = vmatprep.subr.mxu0 0.0
        %3037 = vmatpush1.msra.mxu0 0.0
        %3038 = vmatprep.subr.mxu0 0.0
        %3039 = vmatpush1.msra.mxu0 0.0
        %3040 = vmatprep.subr.mxu0 0.0
        %3041 = vmatpush1.msra.mxu0 0.0
        %3042 = vmatprep.mubr.f32.mxu0 0.0
        %3043 = vmatmul.mubr.f32.gmra.mrb[0].mxu0 %v2965
        %v3044 = vpop.f32.mrb[0].mxu0
        %v3045 = vadd.f32 0.0, %v3044
        %v3046 = vpop.f32.mrb[0].mxu0
        %3047 = vmatprep.mubr.f32.mxu0 0.0
        %3048 = vmatmul.mubr.f32.gmra.mrb[0].mxu0 %v2968
        %v3049 = vpop.f32.mrb[0].mxu0
        %v3050 = vadd.f32 0.0, %v3049
        %v3051 = vpop.f32.mrb[0].mxu0
        %3052 = vmatprep.mubr.f32.mxu0 0.0
        %3053 = vmatmul.mubr.f32.gmra.mrb[0].mxu0 %v2971
        %v3054 = vpop.f32.mrb[0].mxu0
        %v3055 = vadd.f32 0.0, %v3054
        %v3056 = vpop.f32.mrb[0].mxu0
        %3057 = vmatprep.mubr.f32.mxu0 0.0
        %3058 = vmatmul.mubr.f32.gmra.mrb[0].mxu0 %v2974
        %v3059 = vpop.f32.mrb[0].mxu0
        %v3060 = vadd.f32 0.0, %v3059
        %v3061 = vpop.f32.mrb[0].mxu0
        %3062 = vdwg.mxu0
        %v3063 = vld [vmem:[#allocation3 + $0x28] sm:$0xff]
        %v3065 = vsel %vm404, %v3045, 0
        %v3068 = vsel %vm404, %v3050, 0
        %v3071 = vsel %vm404, %v3055, 0
        %v3074 = vsel %vm404, %v3060, 0
        %3076 = vmatprep.subr.mxu0 0.0
        %3077 = vmatpush1.msra.mxu0 %v3063
        %3078 = vmatprep.subr.mxu0 0.0
        %3079 = vmatpush1.msra.mxu0 0.0
        %3080 = vmatprep.subr.mxu0 0.0
        %3081 = vmatpush1.msra.mxu0 0.0
        %3082 = vmatprep.subr.mxu0 0.0
        %3083 = vmatpush1.msra.mxu0 0.0
        %3084 = vmatprep.subr.mxu0 0.0
        %3085 = vmatpush1.msra.mxu0 0.0
        %3086 = vmatprep.subr.mxu0 0.0
        %3087 = vmatpush1.msra.mxu0 0.0
        %3088 = vmatprep.subr.mxu0 0.0
        %3089 = vmatpush1.msra.mxu0 0.0
        %3090 = vmatprep.subr.mxu0 0.0
        %3091 = vmatpush1.msra.mxu0 0.0
        %3092 = vmatprep.subr.mxu0 0.0
        %3093 = vmatpush1.msra.mxu0 0.0
        %3094 = vmatprep.subr.mxu0 0.0
        %3095 = vmatpush1.msra.mxu0 0.0
        %3096 = vmatprep.subr.mxu0 0.0
        %3097 = vmatpush1.msra.mxu0 0.0
        %3098 = vmatprep.subr.mxu0 0.0
        %3099 = vmatpush1.msra.mxu0 0.0
        %3100 = vmatprep.subr.mxu0 0.0
        %3101 = vmatpush1.msra.mxu0 0.0
        %3102 = vmatprep.subr.mxu0 0.0
        %3103 = vmatpush1.msra.mxu0 0.0
        %3104 = vmatprep.subr.mxu0 0.0
        %3105 = vmatpush1.msra.mxu0 0.0
        %3106 = vmatprep.subr.mxu0 0.0
        %3107 = vmatpush1.msra.mxu0 0.0
        %3108 = vmatprep.subr.mxu0 0.0
        %3109 = vmatpush1.msra.mxu0 0.0
        %3110 = vmatprep.subr.mxu0 0.0
        %3111 = vmatpush1.msra.mxu0 0.0
        %3112 = vmatprep.subr.mxu0 0.0
        %3113 = vmatpush1.msra.mxu0 0.0
        %3114 = vmatprep.subr.mxu0 0.0
        %3115 = vmatpush1.msra.mxu0 0.0
        %3116 = vmatprep.subr.mxu0 0.0
        %3117 = vmatpush1.msra.mxu0 0.0
        %3118 = vmatprep.subr.mxu0 0.0
        %3119 = vmatpush1.msra.mxu0 0.0
        %3120 = vmatprep.subr.mxu0 0.0
        %3121 = vmatpush1.msra.mxu0 0.0
        %3122 = vmatprep.subr.mxu0 0.0
        %3123 = vmatpush1.msra.mxu0 0.0
        %3124 = vmatprep.subr.mxu0 0.0
        %3125 = vmatpush1.msra.mxu0 0.0
        %3126 = vmatprep.subr.mxu0 0.0
        %3127 = vmatpush1.msra.mxu0 0.0
        %3128 = vmatprep.subr.mxu0 0.0
        %3129 = vmatpush1.msra.mxu0 0.0
        %3130 = vmatprep.subr.mxu0 0.0
        %3131 = vmatpush1.msra.mxu0 0.0
        %3132 = vmatprep.subr.mxu0 0.0
        %3133 = vmatpush1.msra.mxu0 0.0
        %3134 = vmatprep.subr.mxu0 0.0
        %3135 = vmatpush1.msra.mxu0 0.0
        %3136 = vmatprep.subr.mxu0 0.0
        %3137 = vmatpush1.msra.mxu0 0.0
        %3138 = vmatprep.subr.mxu0 0.0
        %3139 = vmatpush1.msra.mxu0 0.0
        %3140 = vmatprep.mubr.f32.mxu0 0.0
        %3141 = vmatmul.mubr.f32.gmra.mrb[0].mxu0 %v3065
        %v3142 = vpop.f32.mrb[0].mxu0
        %v3143 = vadd.f32 0.0, %v3142
        %v3144 = vpop.f32.mrb[0].mxu0
        %3145 = vmatprep.mubr.f32.mxu0 0.0
        %3146 = vmatmul.mubr.f32.gmra.mrb[0].mxu0 %v3068
        %v3147 = vpop.f32.mrb[0].mxu0
        %v3148 = vadd.f32 0.0, %v3147
        %v3149 = vpop.f32.mrb[0].mxu0
        %3150 = vmatprep.mubr.f32.mxu0 0.0
        %3151 = vmatmul.mubr.f32.gmra.mrb[0].mxu0 %v3071
        %v3152 = vpop.f32.mrb[0].mxu0
        %v3153 = vadd.f32 0.0, %v3152
        %v3154 = vpop.f32.mrb[0].mxu0
        %3155 = vmatprep.mubr.f32.mxu0 0.0
        %3156 = vmatmul.mubr.f32.gmra.mrb[0].mxu0 %v3074
        %v3157 = vpop.f32.mrb[0].mxu0
        %v3158 = vadd.f32 0.0, %v3157
        %v3159 = vpop.f32.mrb[0].mxu0
        %3160 = vdwg.mxu0
        %v3161 = vadd.f32 %v2784, %v3143
        %v3162 = vadd.f32 %v2785, %v3148
        %v3163 = vadd.f32 %v2786, %v3153
        %v3164 = vadd.f32 %v2787, %v3158
        %3165 = vrot.lane.b32.xlu0 %v897, 80
        %v3166 = vpop.permute.xlu0 %3165
        %3167 = vrot.lane.b32.xlu0 %v903, 80
        %v3168 = vpop.permute.xlu0 %3167
        %3169 = vrot.lane.b32.xlu0 %v909, 80
        %v3170 = vpop.permute.xlu0 %3169
        %3171 = vrot.lane.b32.xlu0 %v915, 80
        %v3172 = vpop.permute.xlu0 %3171
        %3173 = vrot.lane.b32.xlu0 %v897, 16
        %v3174 = vpop.permute.xlu0 %3173
        %3175 = vrot.lane.b32.xlu0 %v903, 16
        %v3176 = vpop.permute.xlu0 %3175
        %3177 = vrot.lane.b32.xlu0 %v909, 16
        %v3178 = vpop.permute.xlu0 %3177
        %3179 = vrot.lane.b32.xlu0 %v915, 16
        %v3180 = vpop.permute.xlu0 %3179
        %v3181 = vsel %vm404, %v3166, 0
        %v3183 = vsel %vm404, %v3168, 0
        %v3185 = vsel %vm404, %v3170, 0
        %v3187 = vsel %vm404, %v3172, 0
        %v3189 = vsel %vm404, %v3174, 0
        %v3191 = vsel %vm404, %v3176, 0
        %v3193 = vsel %vm404, %v3178, 0
        %v3195 = vsel %vm404, %v3180, 0
        %3197 = vmatprep.subr.mxu0 0.0
        %3198 = vmatpush1.xpose.msra.mxu0 %v3189
        %3199 = vmatprep.subr.mxu0 0.0
        %3200 = vmatpush1.xpose.msra.mxu0 %v3191
        %3201 = vmatprep.subr.mxu0 0.0
        %3202 = vmatpush1.xpose.msra.mxu0 %v3193
        %3203 = vmatprep.subr.mxu0 0.0
        %3204 = vmatpush1.xpose.msra.mxu0 %v3195
        %3205 = vmatprep.subr.mxu0 0.0
        %3206 = vmatpush1.xpose.msra.mxu0 0.0
        %3207 = vmatprep.subr.mxu0 0.0
        %3208 = vmatpush1.xpose.msra.mxu0 0.0
        %3209 = vmatprep.subr.mxu0 0.0
        %3210 = vmatpush1.xpose.msra.mxu0 0.0
        %3211 = vmatprep.subr.mxu0 0.0
        %3212 = vmatpush1.xpose.msra.mxu0 0.0
        %3213 = vmatprep.subr.mxu0 0.0
        %3214 = vmatpush1.xpose.msra.mxu0 0.0
        %3215 = vmatprep.subr.mxu0 0.0
        %3216 = vmatpush1.xpose.msra.mxu0 0.0
        %3217 = vmatprep.subr.mxu0 0.0
        %3218 = vmatpush1.xpose.msra.mxu0 0.0
        %3219 = vmatprep.subr.mxu0 0.0
        %3220 = vmatpush1.xpose.msra.mxu0 0.0
        %3221 = vmatprep.subr.mxu0 0.0
        %3222 = vmatpush1.xpose.msra.mxu0 0.0
        %3223 = vmatprep.subr.mxu0 0.0
        %3224 = vmatpush1.xpose.msra.mxu0 0.0
        %3225 = vmatprep.subr.mxu0 0.0
        %3226 = vmatpush1.xpose.msra.mxu0 0.0
        %3227 = vmatprep.subr.mxu0 0.0
        %3228 = vmatpush1.xpose.msra.mxu0 0.0
        %3229 = vmatprep.subr.mxu0 0.0
        %3230 = vmatpush1.xpose.msra.mxu0 0.0
        %3231 = vmatprep.subr.mxu0 0.0
        %3232 = vmatpush1.xpose.msra.mxu0 0.0
        %3233 = vmatprep.subr.mxu0 0.0
        %3234 = vmatpush1.xpose.msra.mxu0 0.0
        %3235 = vmatprep.subr.mxu0 0.0
        %3236 = vmatpush1.xpose.msra.mxu0 0.0
        %3237 = vmatprep.subr.mxu0 0.0
        %3238 = vmatpush1.xpose.msra.mxu0 0.0
        %3239 = vmatprep.subr.mxu0 0.0
        %3240 = vmatpush1.xpose.msra.mxu0 0.0
        %3241 = vmatprep.subr.mxu0 0.0
        %3242 = vmatpush1.xpose.msra.mxu0 0.0
        %3243 = vmatprep.subr.mxu0 0.0
        %3244 = vmatpush1.xpose.msra.mxu0 0.0
        %3245 = vmatprep.subr.mxu0 0.0
        %3246 = vmatpush1.xpose.msra.mxu0 0.0
        %3247 = vmatprep.subr.mxu0 0.0
        %3248 = vmatpush1.xpose.msra.mxu0 0.0
        %3249 = vmatprep.subr.mxu0 0.0
        %3250 = vmatpush1.xpose.msra.mxu0 0.0
        %3251 = vmatprep.subr.mxu0 0.0
        %3252 = vmatpush1.xpose.msra.mxu0 0.0
        %3253 = vmatprep.subr.mxu0 0.0
        %3254 = vmatpush1.xpose.msra.mxu0 0.0
        %3255 = vmatprep.subr.mxu0 0.0
        %3256 = vmatpush1.xpose.msra.mxu0 0.0
        %3257 = vmatprep.subr.mxu0 0.0
        %3258 = vmatpush1.xpose.msra.mxu0 0.0
        %3259 = vmatprep.subr.mxu0 0.0
        %3260 = vmatpush1.xpose.msra.mxu0 0.0
        %3261 = vmatprep.mubr.f32.mxu0 0.0
        %3262 = vmatmul.mubr.f32.gmra.mrb[0].mxu0 %v3181
        %v3263 = vpop.f32.mrb[0].mxu0
        %v3264 = vadd.f32 0.0, %v3263
        %v3265 = vpop.f32.mrb[0].mxu0
        %3266 = vmatprep.mubr.f32.mxu0 0.0
        %3267 = vmatmul.mubr.f32.gmra.mrb[0].mxu0 %v3183
        %v3268 = vpop.f32.mrb[0].mxu0
        %v3269 = vadd.f32 0.0, %v3268
        %v3270 = vpop.f32.mrb[0].mxu0
        %3271 = vmatprep.mubr.f32.mxu0 0.0
        %3272 = vmatmul.mubr.f32.gmra.mrb[0].mxu0 %v3185
        %v3273 = vpop.f32.mrb[0].mxu0
        %v3274 = vadd.f32 0.0, %v3273
        %v3275 = vpop.f32.mrb[0].mxu0
        %3276 = vmatprep.mubr.f32.mxu0 0.0
        %3277 = vmatmul.mubr.f32.gmra.mrb[0].mxu0 %v3187
        %v3278 = vpop.f32.mrb[0].mxu0
        %v3279 = vadd.f32 0.0, %v3278
        %v3280 = vpop.f32.mrb[0].mxu0
        %3281 = vdwg.mxu0
        %v3282 = vmul.f32 %v3264, 0.35355338
        %v3283 = vmul.f32 %v3269, 0.35355338
        %v3284 = vmul.f32 %v3274, 0.35355338
        %v3285 = vmul.f32 %v3279, 0.35355338
        %v3286 = vsel %vm1036, %v3282, -inf
        %3287 = vmax.xlane.f32.xlu0 %v3286
        %v3288 = vpop.xlane.xlu0 %3287
        %v3289 = vsel %vm1036, %v3283, -inf
        %3290 = vmax.xlane.f32.xlu0 %v3289
        %v3291 = vpop.xlane.xlu0 %3290
        %v3292 = vsel %vm1036, %v3284, -inf
        %3293 = vmax.xlane.f32.xlu0 %v3292
        %v3294 = vpop.xlane.xlu0 %3293
        %v3295 = vsel %vm1046, %v3285, -inf
        %3296 = vmax.xlane.f32.xlu0 %v3295
        %v3297 = vpop.xlane.xlu0 %3296
        %v3298 = vsub.f32 %v3282, %v3288
        %v3299 = vsub.f32 %v3283, %v3291
        %v3300 = vsub.f32 %v3284, %v3294
        %v3301 = vsub.f32 %v3285, %v3297
        %v3302 = vmul.f32 %v3298, 1.442695
        %v3303 = vpow.pop %v3302
        %v3304 = vmul.f32 %v3299, 1.442695
        %v3305 = vpow.pop %v3304
        %v3306 = vmul.f32 %v3300, 1.442695
        %v3307 = vpow.pop %v3306
        %v3308 = vmul.f32 %v3301, 1.442695
        %v3309 = vpow.pop %v3308
        %v3310 = vsel %vm1036, %v3303, 0.0
        %3311 = vadd.xlane.f32.xlu0 %v3310
        %v3312 = vpop.xlane.xlu0 %3311
        %v3313 = vsel %vm1036, %v3305, 0.0
        %3314 = vadd.xlane.f32.xlu0 %v3313
        %v3315 = vpop.xlane.xlu0 %3314
        %v3316 = vsel %vm1036, %v3307, 0.0
        %3317 = vadd.xlane.f32.xlu0 %v3316
        %v3318 = vpop.xlane.xlu0 %3317
        %v3319 = vsel %vm1046, %v3309, 0.0
        %3320 = vadd.xlane.f32.xlu0 %v3319
        %v3321 = vpop.xlane.xlu0 %3320
        %v3322 = vrcp.pop %v3312
        %v3323 = vrcp.pop %v3315
        %v3324 = vrcp.pop %v3318
        %v3325 = vrcp.pop %v3321
        %v3326 = vmul.f32 %v3303, %v3322
        %v3327 = vmul.f32 %v3305, %v3323
        %v3328 = vmul.f32 %v3307, %v3324
        %v3329 = vmul.f32 %v3309, %v3325
        %3330 = vrot.lane.b32.xlu0 %v899, 80
        %v3331 = vpop.permute.xlu0 %3330
        %3332 = vrot.lane.b32.xlu0 %v905, 80
        %v3333 = vpop.permute.xlu0 %3332
        %3334 = vrot.lane.b32.xlu0 %v911, 80
        %v3335 = vpop.permute.xlu0 %3334
        %3336 = vrot.lane.b32.xlu0 %v917, 80
        %v3337 = vpop.permute.xlu0 %3336
        %v3342 = vsel %vm1036, %v3326, 0
        %v3345 = vsel %vm1036, %v3327, 0
        %v3348 = vsel %vm1036, %v3328, 0
        %v3351 = vsel %vm1036, %v3329, 0
        %v3353 = vsel %vm1094, %v3337, 0
        %3355 = vmatprep.subr.mxu0 0.0
        %3356 = vmatpush1.msra.mxu0 %v3331
        %3357 = vmatprep.subr.mxu0 0.0
        %3358 = vmatpush1.msra.mxu0 %v3333
        %3359 = vmatprep.subr.mxu0 0.0
        %3360 = vmatpush1.msra.mxu0 %v3335
        %3361 = vmatprep.subr.mxu0 0.0
        %3362 = vmatpush1.msra.mxu0 %v3353
        %3363 = vmatprep.subr.mxu0 0.0
        %3364 = vmatpush1.msra.mxu0 0.0
        %3365 = vmatprep.subr.mxu0 0.0
        %3366 = vmatpush1.msra.mxu0 0.0
        %3367 = vmatprep.subr.mxu0 0.0
        %3368 = vmatpush1.msra.mxu0 0.0
        %3369 = vmatprep.subr.mxu0 0.0
        %3370 = vmatpush1.msra.mxu0 0.0
        %3371 = vmatprep.subr.mxu0 0.0
        %3372 = vmatpush1.msra.mxu0 0.0
        %3373 = vmatprep.subr.mxu0 0.0
        %3374 = vmatpush1.msra.mxu0 0.0
        %3375 = vmatprep.subr.mxu0 0.0
        %3376 = vmatpush1.msra.mxu0 0.0
        %3377 = vmatprep.subr.mxu0 0.0
        %3378 = vmatpush1.msra.mxu0 0.0
        %3379 = vmatprep.subr.mxu0 0.0
        %3380 = vmatpush1.msra.mxu0 0.0
        %3381 = vmatprep.subr.mxu0 0.0
        %3382 = vmatpush1.msra.mxu0 0.0
        %3383 = vmatprep.subr.mxu0 0.0
        %3384 = vmatpush1.msra.mxu0 0.0
        %3385 = vmatprep.subr.mxu0 0.0
        %3386 = vmatpush1.msra.mxu0 0.0
        %3387 = vmatprep.subr.mxu0 0.0
        %3388 = vmatpush1.msra.mxu0 0.0
        %3389 = vmatprep.subr.mxu0 0.0
        %3390 = vmatpush1.msra.mxu0 0.0
        %3391 = vmatprep.subr.mxu0 0.0
        %3392 = vmatpush1.msra.mxu0 0.0
        %3393 = vmatprep.subr.mxu0 0.0
        %3394 = vmatpush1.msra.mxu0 0.0
        %3395 = vmatprep.subr.mxu0 0.0
        %3396 = vmatpush1.msra.mxu0 0.0
        %3397 = vmatprep.subr.mxu0 0.0
        %3398 = vmatpush1.msra.mxu0 0.0
        %3399 = vmatprep.subr.mxu0 0.0
        %3400 = vmatpush1.msra.mxu0 0.0
        %3401 = vmatprep.subr.mxu0 0.0
        %3402 = vmatpush1.msra.mxu0 0.0
        %3403 = vmatprep.subr.mxu0 0.0
        %3404 = vmatpush1.msra.mxu0 0.0
        %3405 = vmatprep.subr.mxu0 0.0
        %3406 = vmatpush1.msra.mxu0 0.0
        %3407 = vmatprep.subr.mxu0 0.0
        %3408 = vmatpush1.msra.mxu0 0.0
        %3409 = vmatprep.subr.mxu0 0.0
        %3410 = vmatpush1.msra.mxu0 0.0
        %3411 = vmatprep.subr.mxu0 0.0
        %3412 = vmatpush1.msra.mxu0 0.0
        %3413 = vmatprep.subr.mxu0 0.0
        %3414 = vmatpush1.msra.mxu0 0.0
        %3415 = vmatprep.subr.mxu0 0.0
        %3416 = vmatpush1.msra.mxu0 0.0
        %3417 = vmatprep.subr.mxu0 0.0
        %3418 = vmatpush1.msra.mxu0 0.0
        %3419 = vmatprep.mubr.f32.mxu0 0.0
        %3420 = vmatmul.mubr.f32.gmra.mrb[0].mxu0 %v3342
        %v3421 = vpop.f32.mrb[0].mxu0
        %v3422 = vadd.f32 0.0, %v3421
        %v3423 = vpop.f32.mrb[0].mxu0
        %3424 = vmatprep.mubr.f32.mxu0 0.0
        %3425 = vmatmul.mubr.f32.gmra.mrb[0].mxu0 %v3345
        %v3426 = vpop.f32.mrb[0].mxu0
        %v3427 = vadd.f32 0.0, %v3426
        %v3428 = vpop.f32.mrb[0].mxu0
        %3429 = vmatprep.mubr.f32.mxu0 0.0
        %3430 = vmatmul.mubr.f32.gmra.mrb[0].mxu0 %v3348
        %v3431 = vpop.f32.mrb[0].mxu0
        %v3432 = vadd.f32 0.0, %v3431
        %v3433 = vpop.f32.mrb[0].mxu0
        %3434 = vmatprep.mubr.f32.mxu0 0.0
        %3435 = vmatmul.mubr.f32.gmra.mrb[0].mxu0 %v3351
        %v3436 = vpop.f32.mrb[0].mxu0
        %v3437 = vadd.f32 0.0, %v3436
        %v3438 = vpop.f32.mrb[0].mxu0
        %3439 = vdwg.mxu0
        %v3440 = vld [vmem:[#allocation3 + $0x30] sm:$0xff]
        %v3442 = vsel %vm404, %v3422, 0
        %v3445 = vsel %vm404, %v3427, 0
        %v3448 = vsel %vm404, %v3432, 0
        %v3451 = vsel %vm404, %v3437, 0
        %3453 = vmatprep.subr.mxu0 0.0
        %3454 = vmatpush1.msra.mxu0 %v3440
        %3455 = vmatprep.subr.mxu0 0.0
        %3456 = vmatpush1.msra.mxu0 0.0
        %3457 = vmatprep.subr.mxu0 0.0
        %3458 = vmatpush1.msra.mxu0 0.0
        %3459 = vmatprep.subr.mxu0 0.0
        %3460 = vmatpush1.msra.mxu0 0.0
        %3461 = vmatprep.subr.mxu0 0.0
        %3462 = vmatpush1.msra.mxu0 0.0
        %3463 = vmatprep.subr.mxu0 0.0
        %3464 = vmatpush1.msra.mxu0 0.0
        %3465 = vmatprep.subr.mxu0 0.0
        %3466 = vmatpush1.msra.mxu0 0.0
        %3467 = vmatprep.subr.mxu0 0.0
        %3468 = vmatpush1.msra.mxu0 0.0
        %3469 = vmatprep.subr.mxu0 0.0
        %3470 = vmatpush1.msra.mxu0 0.0
        %3471 = vmatprep.subr.mxu0 0.0
        %3472 = vmatpush1.msra.mxu0 0.0
        %3473 = vmatprep.subr.mxu0 0.0
        %3474 = vmatpush1.msra.mxu0 0.0
        %3475 = vmatprep.subr.mxu0 0.0
        %3476 = vmatpush1.msra.mxu0 0.0
        %3477 = vmatprep.subr.mxu0 0.0
        %3478 = vmatpush1.msra.mxu0 0.0
        %3479 = vmatprep.subr.mxu0 0.0
        %3480 = vmatpush1.msra.mxu0 0.0
        %3481 = vmatprep.subr.mxu0 0.0
        %3482 = vmatpush1.msra.mxu0 0.0
        %3483 = vmatprep.subr.mxu0 0.0
        %3484 = vmatpush1.msra.mxu0 0.0
        %3485 = vmatprep.subr.mxu0 0.0
        %3486 = vmatpush1.msra.mxu0 0.0
        %3487 = vmatprep.subr.mxu0 0.0
        %3488 = vmatpush1.msra.mxu0 0.0
        %3489 = vmatprep.subr.mxu0 0.0
        %3490 = vmatpush1.msra.mxu0 0.0
        %3491 = vmatprep.subr.mxu0 0.0
        %3492 = vmatpush1.msra.mxu0 0.0
        %3493 = vmatprep.subr.mxu0 0.0
        %3494 = vmatpush1.msra.mxu0 0.0
        %3495 = vmatprep.subr.mxu0 0.0
        %3496 = vmatpush1.msra.mxu0 0.0
        %3497 = vmatprep.subr.mxu0 0.0
        %3498 = vmatpush1.msra.mxu0 0.0
        %3499 = vmatprep.subr.mxu0 0.0
        %3500 = vmatpush1.msra.mxu0 0.0
        %3501 = vmatprep.subr.mxu0 0.0
        %3502 = vmatpush1.msra.mxu0 0.0
        %3503 = vmatprep.subr.mxu0 0.0
        %3504 = vmatpush1.msra.mxu0 0.0
        %3505 = vmatprep.subr.mxu0 0.0
        %3506 = vmatpush1.msra.mxu0 0.0
        %3507 = vmatprep.subr.mxu0 0.0
        %3508 = vmatpush1.msra.mxu0 0.0
        %3509 = vmatprep.subr.mxu0 0.0
        %3510 = vmatpush1.msra.mxu0 0.0
        %3511 = vmatprep.subr.mxu0 0.0
        %3512 = vmatpush1.msra.mxu0 0.0
        %3513 = vmatprep.subr.mxu0 0.0
        %3514 = vmatpush1.msra.mxu0 0.0
        %3515 = vmatprep.subr.mxu0 0.0
        %3516 = vmatpush1.msra.mxu0 0.0
        %3517 = vmatprep.mubr.f32.mxu0 0.0
        %3518 = vmatmul.mubr.f32.gmra.mrb[0].mxu0 %v3442
        %v3519 = vpop.f32.mrb[0].mxu0
        %v3520 = vadd.f32 0.0, %v3519
        %v3521 = vpop.f32.mrb[0].mxu0
        %3522 = vmatprep.mubr.f32.mxu0 0.0
        %3523 = vmatmul.mubr.f32.gmra.mrb[0].mxu0 %v3445
        %v3524 = vpop.f32.mrb[0].mxu0
        %v3525 = vadd.f32 0.0, %v3524
        %v3526 = vpop.f32.mrb[0].mxu0
        %3527 = vmatprep.mubr.f32.mxu0 0.0
        %3528 = vmatmul.mubr.f32.gmra.mrb[0].mxu0 %v3448
        %v3529 = vpop.f32.mrb[0].mxu0
        %v3530 = vadd.f32 0.0, %v3529
        %v3531 = vpop.f32.mrb[0].mxu0
        %3532 = vmatprep.mubr.f32.mxu0 0.0
        %3533 = vmatmul.mubr.f32.gmra.mrb[0].mxu0 %v3451
        %v3534 = vpop.f32.mrb[0].mxu0
        %v3535 = vadd.f32 0.0, %v3534
        %v3536 = vpop.f32.mrb[0].mxu0
        %3537 = vdwg.mxu0
        %v3538 = vadd.f32 %v3161, %v3520
        %v3539 = vadd.f32 %v3162, %v3525
        %v3540 = vadd.f32 %v3163, %v3530
        %v3541 = vadd.f32 %v3164, %v3535
        %3542 = vrot.lane.b32.xlu0 %v897, 72
        %v3543 = vpop.permute.xlu0 %3542
        %3544 = vrot.lane.b32.xlu0 %v903, 72
        %v3545 = vpop.permute.xlu0 %3544
        %3546 = vrot.lane.b32.xlu0 %v909, 72
        %v3547 = vpop.permute.xlu0 %3546
        %3548 = vrot.lane.b32.xlu0 %v915, 72
        %v3549 = vpop.permute.xlu0 %3548
        %3550 = vrot.lane.b32.xlu0 %v897, 8
        %v3551 = vpop.permute.xlu0 %3550
        %3552 = vrot.lane.b32.xlu0 %v903, 8
        %v3553 = vpop.permute.xlu0 %3552
        %3554 = vrot.lane.b32.xlu0 %v909, 8
        %v3555 = vpop.permute.xlu0 %3554
        %3556 = vrot.lane.b32.xlu0 %v915, 8
        %v3557 = vpop.permute.xlu0 %3556
        %v3558 = vsel %vm404, %v3543, 0
        %v3560 = vsel %vm404, %v3545, 0
        %v3562 = vsel %vm404, %v3547, 0
        %v3564 = vsel %vm404, %v3549, 0
        %v3566 = vsel %vm404, %v3551, 0
        %v3568 = vsel %vm404, %v3553, 0
        %v3570 = vsel %vm404, %v3555, 0
        %v3572 = vsel %vm404, %v3557, 0
        %3574 = vmatprep.subr.mxu0 0.0
        %3575 = vmatpush1.xpose.msra.mxu0 %v3566
        %3576 = vmatprep.subr.mxu0 0.0
        %3577 = vmatpush1.xpose.msra.mxu0 %v3568
        %3578 = vmatprep.subr.mxu0 0.0
        %3579 = vmatpush1.xpose.msra.mxu0 %v3570
        %3580 = vmatprep.subr.mxu0 0.0
        %3581 = vmatpush1.xpose.msra.mxu0 %v3572
        %3582 = vmatprep.subr.mxu0 0.0
        %3583 = vmatpush1.xpose.msra.mxu0 0.0
        %3584 = vmatprep.subr.mxu0 0.0
        %3585 = vmatpush1.xpose.msra.mxu0 0.0
        %3586 = vmatprep.subr.mxu0 0.0
        %3587 = vmatpush1.xpose.msra.mxu0 0.0
        %3588 = vmatprep.subr.mxu0 0.0
        %3589 = vmatpush1.xpose.msra.mxu0 0.0
        %3590 = vmatprep.subr.mxu0 0.0
        %3591 = vmatpush1.xpose.msra.mxu0 0.0
        %3592 = vmatprep.subr.mxu0 0.0
        %3593 = vmatpush1.xpose.msra.mxu0 0.0
        %3594 = vmatprep.subr.mxu0 0.0
        %3595 = vmatpush1.xpose.msra.mxu0 0.0
        %3596 = vmatprep.subr.mxu0 0.0
        %3597 = vmatpush1.xpose.msra.mxu0 0.0
        %3598 = vmatprep.subr.mxu0 0.0
        %3599 = vmatpush1.xpose.msra.mxu0 0.0
        %3600 = vmatprep.subr.mxu0 0.0
        %3601 = vmatpush1.xpose.msra.mxu0 0.0
        %3602 = vmatprep.subr.mxu0 0.0
        %3603 = vmatpush1.xpose.msra.mxu0 0.0
        %3604 = vmatprep.subr.mxu0 0.0
        %3605 = vmatpush1.xpose.msra.mxu0 0.0
        %3606 = vmatprep.subr.mxu0 0.0
        %3607 = vmatpush1.xpose.msra.mxu0 0.0
        %3608 = vmatprep.subr.mxu0 0.0
        %3609 = vmatpush1.xpose.msra.mxu0 0.0
        %3610 = vmatprep.subr.mxu0 0.0
        %3611 = vmatpush1.xpose.msra.mxu0 0.0
        %3612 = vmatprep.subr.mxu0 0.0
        %3613 = vmatpush1.xpose.msra.mxu0 0.0
        %3614 = vmatprep.subr.mxu0 0.0
        %3615 = vmatpush1.xpose.msra.mxu0 0.0
        %3616 = vmatprep.subr.mxu0 0.0
        %3617 = vmatpush1.xpose.msra.mxu0 0.0
        %3618 = vmatprep.subr.mxu0 0.0
        %3619 = vmatpush1.xpose.msra.mxu0 0.0
        %3620 = vmatprep.subr.mxu0 0.0
        %3621 = vmatpush1.xpose.msra.mxu0 0.0
        %3622 = vmatprep.subr.mxu0 0.0
        %3623 = vmatpush1.xpose.msra.mxu0 0.0
        %3624 = vmatprep.subr.mxu0 0.0
        %3625 = vmatpush1.xpose.msra.mxu0 0.0
        %3626 = vmatprep.subr.mxu0 0.0
        %3627 = vmatpush1.xpose.msra.mxu0 0.0
        %3628 = vmatprep.subr.mxu0 0.0
        %3629 = vmatpush1.xpose.msra.mxu0 0.0
        %3630 = vmatprep.subr.mxu0 0.0
        %3631 = vmatpush1.xpose.msra.mxu0 0.0
        %3632 = vmatprep.subr.mxu0 0.0
        %3633 = vmatpush1.xpose.msra.mxu0 0.0
        %3634 = vmatprep.subr.mxu0 0.0
        %3635 = vmatpush1.xpose.msra.mxu0 0.0
        %3636 = vmatprep.subr.mxu0 0.0
        %3637 = vmatpush1.xpose.msra.mxu0 0.0
        %3638 = vmatprep.mubr.f32.mxu0 0.0
        %3639 = vmatmul.mubr.f32.gmra.mrb[0].mxu0 %v3558
        %v3640 = vpop.f32.mrb[0].mxu0
        %v3641 = vadd.f32 0.0, %v3640
        %v3642 = vpop.f32.mrb[0].mxu0
        %3643 = vmatprep.mubr.f32.mxu0 0.0
        %3644 = vmatmul.mubr.f32.gmra.mrb[0].mxu0 %v3560
        %v3645 = vpop.f32.mrb[0].mxu0
        %v3646 = vadd.f32 0.0, %v3645
        %v3647 = vpop.f32.mrb[0].mxu0
        %3648 = vmatprep.mubr.f32.mxu0 0.0
        %3649 = vmatmul.mubr.f32.gmra.mrb[0].mxu0 %v3562
        %v3650 = vpop.f32.mrb[0].mxu0
        %v3651 = vadd.f32 0.0, %v3650
        %v3652 = vpop.f32.mrb[0].mxu0
        %3653 = vmatprep.mubr.f32.mxu0 0.0
        %3654 = vmatmul.mubr.f32.gmra.mrb[0].mxu0 %v3564
        %v3655 = vpop.f32.mrb[0].mxu0
        %v3656 = vadd.f32 0.0, %v3655
        %v3657 = vpop.f32.mrb[0].mxu0
        %3658 = vdwg.mxu0
        %v3659 = vmul.f32 %v3641, 0.35355338
        %v3660 = vmul.f32 %v3646, 0.35355338
        %v3661 = vmul.f32 %v3651, 0.35355338
        %v3662 = vmul.f32 %v3656, 0.35355338
        %v3663 = vsel %vm1036, %v3659, -inf
        %3664 = vmax.xlane.f32.xlu0 %v3663
        %v3665 = vpop.xlane.xlu0 %3664
        %v3666 = vsel %vm1036, %v3660, -inf
        %3667 = vmax.xlane.f32.xlu0 %v3666
        %v3668 = vpop.xlane.xlu0 %3667
        %v3669 = vsel %vm1036, %v3661, -inf
        %3670 = vmax.xlane.f32.xlu0 %v3669
        %v3671 = vpop.xlane.xlu0 %3670
        %v3672 = vsel %vm1046, %v3662, -inf
        %3673 = vmax.xlane.f32.xlu0 %v3672
        %v3674 = vpop.xlane.xlu0 %3673
        %v3675 = vsub.f32 %v3659, %v3665
        %v3676 = vsub.f32 %v3660, %v3668
        %v3677 = vsub.f32 %v3661, %v3671
        %v3678 = vsub.f32 %v3662, %v3674
        %v3679 = vmul.f32 %v3675, 1.442695
        %v3680 = vpow.pop %v3679
        %v3681 = vmul.f32 %v3676, 1.442695
        %v3682 = vpow.pop %v3681
        %v3683 = vmul.f32 %v3677, 1.442695
        %v3684 = vpow.pop %v3683
        %v3685 = vmul.f32 %v3678, 1.442695
        %v3686 = vpow.pop %v3685
        %v3687 = vsel %vm1036, %v3680, 0.0
        %3688 = vadd.xlane.f32.xlu0 %v3687
        %v3689 = vpop.xlane.xlu0 %3688
        %v3690 = vsel %vm1036, %v3682, 0.0
        %3691 = vadd.xlane.f32.xlu0 %v3690
        %v3692 = vpop.xlane.xlu0 %3691
        %v3693 = vsel %vm1036, %v3684, 0.0
        %3694 = vadd.xlane.f32.xlu0 %v3693
        %v3695 = vpop.xlane.xlu0 %3694
        %v3696 = vsel %vm1046, %v3686, 0.0
        %3697 = vadd.xlane.f32.xlu0 %v3696
        %v3698 = vpop.xlane.xlu0 %3697
        %v3699 = vrcp.pop %v3689
        %v3700 = vrcp.pop %v3692
        %v3701 = vrcp.pop %v3695
        %v3702 = vrcp.pop %v3698
        %v3703 = vmul.f32 %v3680, %v3699
        %v3704 = vmul.f32 %v3682, %v3700
        %v3705 = vmul.f32 %v3684, %v3701
        %v3706 = vmul.f32 %v3686, %v3702
        %3707 = vrot.lane.b32.xlu0 %v899, 72
        %v3708 = vpop.permute.xlu0 %3707
        %3709 = vrot.lane.b32.xlu0 %v905, 72
        %v3710 = vpop.permute.xlu0 %3709
        %3711 = vrot.lane.b32.xlu0 %v911, 72
        %v3712 = vpop.permute.xlu0 %3711
        %3713 = vrot.lane.b32.xlu0 %v917, 72
        %v3714 = vpop.permute.xlu0 %3713
        %v3719 = vsel %vm1036, %v3703, 0
        %v3722 = vsel %vm1036, %v3704, 0
        %v3725 = vsel %vm1036, %v3705, 0
        %v3728 = vsel %vm1036, %v3706, 0
        %v3730 = vsel %vm1094, %v3714, 0
        %3732 = vmatprep.subr.mxu0 0.0
        %3733 = vmatpush1.msra.mxu0 %v3708
        %3734 = vmatprep.subr.mxu0 0.0
        %3735 = vmatpush1.msra.mxu0 %v3710
        %3736 = vmatprep.subr.mxu0 0.0
        %3737 = vmatpush1.msra.mxu0 %v3712
        %3738 = vmatprep.subr.mxu0 0.0
        %3739 = vmatpush1.msra.mxu0 %v3730
        %3740 = vmatprep.subr.mxu0 0.0
        %3741 = vmatpush1.msra.mxu0 0.0
        %3742 = vmatprep.subr.mxu0 0.0
        %3743 = vmatpush1.msra.mxu0 0.0
        %3744 = vmatprep.subr.mxu0 0.0
        %3745 = vmatpush1.msra.mxu0 0.0
        %3746 = vmatprep.subr.mxu0 0.0
        %3747 = vmatpush1.msra.mxu0 0.0
        %3748 = vmatprep.subr.mxu0 0.0
        %3749 = vmatpush1.msra.mxu0 0.0
        %3750 = vmatprep.subr.mxu0 0.0
        %3751 = vmatpush1.msra.mxu0 0.0
        %3752 = vmatprep.subr.mxu0 0.0
        %3753 = vmatpush1.msra.mxu0 0.0
        %3754 = vmatprep.subr.mxu0 0.0
        %3755 = vmatpush1.msra.mxu0 0.0
        %3756 = vmatprep.subr.mxu0 0.0
        %3757 = vmatpush1.msra.mxu0 0.0
        %3758 = vmatprep.subr.mxu0 0.0
        %3759 = vmatpush1.msra.mxu0 0.0
        %3760 = vmatprep.subr.mxu0 0.0
        %3761 = vmatpush1.msra.mxu0 0.0
        %3762 = vmatprep.subr.mxu0 0.0
        %3763 = vmatpush1.msra.mxu0 0.0
        %3764 = vmatprep.subr.mxu0 0.0
        %3765 = vmatpush1.msra.mxu0 0.0
        %3766 = vmatprep.subr.mxu0 0.0
        %3767 = vmatpush1.msra.mxu0 0.0
        %3768 = vmatprep.subr.mxu0 0.0
        %3769 = vmatpush1.msra.mxu0 0.0
        %3770 = vmatprep.subr.mxu0 0.0
        %3771 = vmatpush1.msra.mxu0 0.0
        %3772 = vmatprep.subr.mxu0 0.0
        %3773 = vmatpush1.msra.mxu0 0.0
        %3774 = vmatprep.subr.mxu0 0.0
        %3775 = vmatpush1.msra.mxu0 0.0
        %3776 = vmatprep.subr.mxu0 0.0
        %3777 = vmatpush1.msra.mxu0 0.0
        %3778 = vmatprep.subr.mxu0 0.0
        %3779 = vmatpush1.msra.mxu0 0.0
        %3780 = vmatprep.subr.mxu0 0.0
        %3781 = vmatpush1.msra.mxu0 0.0
        %3782 = vmatprep.subr.mxu0 0.0
        %3783 = vmatpush1.msra.mxu0 0.0
        %3784 = vmatprep.subr.mxu0 0.0
        %3785 = vmatpush1.msra.mxu0 0.0
        %3786 = vmatprep.subr.mxu0 0.0
        %3787 = vmatpush1.msra.mxu0 0.0
        %3788 = vmatprep.subr.mxu0 0.0
        %3789 = vmatpush1.msra.mxu0 0.0
        %3790 = vmatprep.subr.mxu0 0.0
        %3791 = vmatpush1.msra.mxu0 0.0
        %3792 = vmatprep.subr.mxu0 0.0
        %3793 = vmatpush1.msra.mxu0 0.0
        %3794 = vmatprep.subr.mxu0 0.0
        %3795 = vmatpush1.msra.mxu0 0.0
        %3796 = vmatprep.mubr.f32.mxu0 0.0
        %3797 = vmatmul.mubr.f32.gmra.mrb[0].mxu0 %v3719
        %v3798 = vpop.f32.mrb[0].mxu0
        %v3799 = vadd.f32 0.0, %v3798
        %v3800 = vpop.f32.mrb[0].mxu0
        %3801 = vmatprep.mubr.f32.mxu0 0.0
        %3802 = vmatmul.mubr.f32.gmra.mrb[0].mxu0 %v3722
        %v3803 = vpop.f32.mrb[0].mxu0
        %v3804 = vadd.f32 0.0, %v3803
        %v3805 = vpop.f32.mrb[0].mxu0
        %3806 = vmatprep.mubr.f32.mxu0 0.0
        %3807 = vmatmul.mubr.f32.gmra.mrb[0].mxu0 %v3725
        %v3808 = vpop.f32.mrb[0].mxu0
        %v3809 = vadd.f32 0.0, %v3808
        %v3810 = vpop.f32.mrb[0].mxu0
        %3811 = vmatprep.mubr.f32.mxu0 0.0
        %3812 = vmatmul.mubr.f32.gmra.mrb[0].mxu0 %v3728
        %v3813 = vpop.f32.mrb[0].mxu0
        %v3814 = vadd.f32 0.0, %v3813
        %v3815 = vpop.f32.mrb[0].mxu0
        %3816 = vdwg.mxu0
        %v3817 = vld [vmem:[#allocation3 + $0x38] sm:$0xff]
        %v3819 = vsel %vm404, %v3799, 0
        %v3822 = vsel %vm404, %v3804, 0
        %v3825 = vsel %vm404, %v3809, 0
        %v3828 = vsel %vm404, %v3814, 0
        %3830 = vmatprep.subr.mxu0 0.0
        %3831 = vmatpush1.msra.mxu0 %v3817
        %3832 = vmatprep.subr.mxu0 0.0
        %3833 = vmatpush1.msra.mxu0 0.0
        %3834 = vmatprep.subr.mxu0 0.0
        %3835 = vmatpush1.msra.mxu0 0.0
        %3836 = vmatprep.subr.mxu0 0.0
        %3837 = vmatpush1.msra.mxu0 0.0
        %3838 = vmatprep.subr.mxu0 0.0
        %3839 = vmatpush1.msra.mxu0 0.0
        %3840 = vmatprep.subr.mxu0 0.0
        %3841 = vmatpush1.msra.mxu0 0.0
        %3842 = vmatprep.subr.mxu0 0.0
        %3843 = vmatpush1.msra.mxu0 0.0
        %3844 = vmatprep.subr.mxu0 0.0
        %3845 = vmatpush1.msra.mxu0 0.0
        %3846 = vmatprep.subr.mxu0 0.0
        %3847 = vmatpush1.msra.mxu0 0.0
        %3848 = vmatprep.subr.mxu0 0.0
        %3849 = vmatpush1.msra.mxu0 0.0
        %3850 = vmatprep.subr.mxu0 0.0
        %3851 = vmatpush1.msra.mxu0 0.0
        %3852 = vmatprep.subr.mxu0 0.0
        %3853 = vmatpush1.msra.mxu0 0.0
        %3854 = vmatprep.subr.mxu0 0.0
        %3855 = vmatpush1.msra.mxu0 0.0
        %3856 = vmatprep.subr.mxu0 0.0
        %3857 = vmatpush1.msra.mxu0 0.0
        %3858 = vmatprep.subr.mxu0 0.0
        %3859 = vmatpush1.msra.mxu0 0.0
        %3860 = vmatprep.subr.mxu0 0.0
        %3861 = vmatpush1.msra.mxu0 0.0
        %3862 = vmatprep.subr.mxu0 0.0
        %3863 = vmatpush1.msra.mxu0 0.0
        %3864 = vmatprep.subr.mxu0 0.0
        %3865 = vmatpush1.msra.mxu0 0.0
        %3866 = vmatprep.subr.mxu0 0.0
        %3867 = vmatpush1.msra.mxu0 0.0
        %3868 = vmatprep.subr.mxu0 0.0
        %3869 = vmatpush1.msra.mxu0 0.0
        %3870 = vmatprep.subr.mxu0 0.0
        %3871 = vmatpush1.msra.mxu0 0.0
        %3872 = vmatprep.subr.mxu0 0.0
        %3873 = vmatpush1.msra.mxu0 0.0
        %3874 = vmatprep.subr.mxu0 0.0
        %3875 = vmatpush1.msra.mxu0 0.0
        %3876 = vmatprep.subr.mxu0 0.0
        %3877 = vmatpush1.msra.mxu0 0.0
        %3878 = vmatprep.subr.mxu0 0.0
        %3879 = vmatpush1.msra.mxu0 0.0
        %3880 = vmatprep.subr.mxu0 0.0
        %3881 = vmatpush1.msra.mxu0 0.0
        %3882 = vmatprep.subr.mxu0 0.0
        %3883 = vmatpush1.msra.mxu0 0.0
        %3884 = vmatprep.subr.mxu0 0.0
        %3885 = vmatpush1.msra.mxu0 0.0
        %3886 = vmatprep.subr.mxu0 0.0
        %3887 = vmatpush1.msra.mxu0 0.0
        %3888 = vmatprep.subr.mxu0 0.0
        %3889 = vmatpush1.msra.mxu0 0.0
        %3890 = vmatprep.subr.mxu0 0.0
        %3891 = vmatpush1.msra.mxu0 0.0
        %3892 = vmatprep.subr.mxu0 0.0
        %3893 = vmatpush1.msra.mxu0 0.0
        %3894 = vmatprep.mubr.f32.mxu0 0.0
        %3895 = vmatmul.mubr.f32.gmra.mrb[0].mxu0 %v3819
        %v3896 = vpop.f32.mrb[0].mxu0
        %v3897 = vadd.f32 0.0, %v3896
        %v3898 = vpop.f32.mrb[0].mxu0
        %3899 = vmatprep.mubr.f32.mxu0 0.0
        %3900 = vmatmul.mubr.f32.gmra.mrb[0].mxu0 %v3822
        %v3901 = vpop.f32.mrb[0].mxu0
        %v3902 = vadd.f32 0.0, %v3901
        %v3903 = vpop.f32.mrb[0].mxu0
        %3904 = vmatprep.mubr.f32.mxu0 0.0
        %3905 = vmatmul.mubr.f32.gmra.mrb[0].mxu0 %v3825
        %v3906 = vpop.f32.mrb[0].mxu0
        %v3907 = vadd.f32 0.0, %v3906
        %v3908 = vpop.f32.mrb[0].mxu0
        %3909 = vmatprep.mubr.f32.mxu0 0.0
        %3910 = vmatmul.mubr.f32.gmra.mrb[0].mxu0 %v3828
        %v3911 = vpop.f32.mrb[0].mxu0
        %v3912 = vadd.f32 0.0, %v3911
        %v3913 = vpop.f32.mrb[0].mxu0
        %3914 = vdwg.mxu0
        %v3915 = vadd.f32 %v3538, %v3897
        %v3916 = vadd.f32 %v3539, %v3902
        %v3917 = vadd.f32 %v3540, %v3907
        %v3918 = vadd.f32 %v3541, %v3912
        %v3919 = vld [vmem:[%s9] sm:$0x1]
        %v3921 = vlaneseq
        %v3922 = vshrl.u32 %v3921, 7
        %v3923 = vsub.s32 0, %v3922
        %v3924 = vrot.slane %v3919, %v3923
        %v3926 = vadd.f32 %v3915, %v3924
        %v3927 = vadd.f32 %v3916, %v3924
        %v3928 = vadd.f32 %v3917, %v3924
        %v3929 = vadd.f32 %v3918, %v3924
        %v3930 = vsel %vm792, %v3926, 0.0
        %v3931 = vrot.slane %v3930, 4
        %v3932 = vadd.f32 %v3930, %v3931
        %v3933 = vrot.slane %v3932, 2
        %v3934 = vadd.f32 %v3932, %v3933
        %v3935 = vrot.slane %v3934, 1
        %v3936 = vadd.f32 %v3934, %v3935
        %v3937 = vmul.f32 %v3936, %v483
        %v3938 = vlaneseq
        %v3939 = vshrl.u32 %v3938, 7
        %v3940 = vadd.s32 %v3939, 8
        %v3941 = vadd.s32 %v3939, 16
        %vm3942 = vcmp.eq.s32.totalorder %v3939, 0
        %vm3943 = vcmp.eq.s32.totalorder %v3940, 0
        %vm3944 = vcmp.eq.s32.totalorder %v3941, 0
        %v3945 = vsel %vm3942, %v3937, 0.0
        %v3946 = vsel %vm3943, %v3937, 0.0
        %v3947 = vsel %vm3944, %v3937, 0.0
        %v3948 = vadd.f32 %v3927, %v3945
        %v3949 = vadd.f32 %v3928, %v3946
        %v3950 = vadd.f32 %v3929, %v3947
        %3951 = vst.msk [vmem:[%s391] sm:$0xff] %vm792, %v3948
        %3952 = vst.msk [vmem:[%s391 + $0x8] sm:$0xff] %vm792, %v3949
        %3953 = vst.msk [vmem:[%s391 + $0x10] sm:$0x1] %vm796, %v3950
        %p3954 = scmp.lt.s32.totalorder %s22, 1
        %s3955 = scalar_select %p3954, %s22, 1
        %s3956 = smul.addr %s3955, 3
        %s3957 = smul.addr %s3956, 8
        %s3958 = scalar_lea.vmem %s10, %s3957
        // Predicated region
        $region65: #{hi_attention_forward.1} parent=59 // pred_check
          %p3959 = pneg %p260
        $region66: #{hi_attention_forward.1} parent=59 // pred_check_branch
          %3961 = sbr.rel (%p3959) target = $region68
        $region67: #{hi_attention_forward.1} parent=59 // pred_region
          _
        $region68: #{hi_attention_forward.1} parent=59 // pred_fallthru
          _
      $region60: #{hi_attention_forward.1} parent=5 // pred_fallthru
        _
      %p3962 = scmp.le.s32.totalorder 2, %s17
      // Predicated region
      $region69: #{hi_attention_forward.1} parent=5 // pred_check
        %p3963 = pneg %p3962
      $region70: #{hi_attention_forward.1} parent=5 // pred_check_branch
        %3965 = sbr.rel (%p3963) target = $region72
      $region71: #{hi_attention_forward.1} parent=5 // pred_region
        %s3966 = ssub.s32 %s17, 2
        // Predicated region
        $region73: #{hi_attention_forward.1} parent=71 // pred_check
          %p3967 = pneg %p266
        $region74: #{hi_attention_forward.1} parent=71 // pred_check_branch
          %3969 = sbr.rel (%p3967) target = $region76
        $region75: #{hi_attention_forward.1} parent=71 // pred_region
          %p3970 = scmp.lt.s32.totalorder %s23, 1
          %s3971 = scalar_select %p3970, %s23, 1
          %s3972 = smul.addr %s3971, 3
          %s3973 = smul.addr %s3972, 8
          %s3974 = scalar_lea.vmem %s10, %s3973
        $region76: #{hi_attention_forward.1} parent=71 // pred_fallthru
          _
      $region72: #{hi_attention_forward.1} parent=5 // pred_fallthru
        _
    $region6: #{hi_attention_forward.1} parent=1 // loop_footer
      %s21 = sadd.s32 1, %s17
    $region7: #{hi_attention_forward.1} parent=1 // loop_footer_branch
      %16 = sbr.rel target = $region3
    $region8: #{hi_attention_forward.1} parent=1 // loop_exit
      _
    %3975 = vsyncpa [#allocation4], 1
    %s3976 = scalar_lea.sflag [#allocation4], 1
    %3977 = vsyncpa %s3976, 1

</llo_original>
